<compile_context>
chip_gen: v7x
topology: tpu7x:2x2x1
jax: 0.10.0
libtpu: 0.0.40
codegen_flags: <defaults>
</compile_context>

<pallas_src>
import math
import functools

import jax
import jax.numpy as jnp
from jax.experimental import pallas as pl
from jax.experimental.pallas import tpu as pltpu

# ----------------------- small ViT configuration -----------------------------
B = 2            # batch
C = 3            # input channels (RGB sat image)
IMG = 32         # spatial size (real model: 224)
PATCH = 8        # patch size (real model: 16)
GRID = IMG // PATCH
N_PATCH = GRID * GRID          # 16 patches (real model: 196)
SEQ = N_PATCH + 1              # +1 cls token
DIM = 128                      # embed dim (real model: 1024)
HEADS = 4
HEAD_DIM = DIM // HEADS
MLP_DIM = 4 * DIM
DEPTH = 2
LN_EPS = 1e-6
ATTN_SCALE = 1.0 / math.sqrt(HEAD_DIM)
NEG_INF = -1e30


def _round_up(x, m):
    return ((x + m - 1) // m) * m


# =============================== Pallas kernel ================================

def _layernorm(x, g, b, eps=LN_EPS):
    # Single-pass statistics: sum(x) and sum(x*x) computed together,
    # var = E[x^2] - E[x]^2 (clamped >= 0 against cancellation).
    mu = jnp.mean(x, axis=-1, keepdims=True)
    ms = jnp.mean(x * x, axis=-1, keepdims=True)
    var = jnp.maximum(ms - mu * mu, 0.0)
    return (x - mu) * jax.lax.rsqrt(var + eps) * g + b


def _encoder_kernel(
    patches_ref, patch_w_ref, patch_b_ref, pos_ref, cls_tok_ref,
    ln1_g_ref, ln1_b_ref, qkv_w_ref, qkv_b_ref, proj_w_ref, proj_b_ref,
    ln2_g_ref, ln2_b_ref, fc1_w_ref, fc1_b_ref, fc2_w_ref, fc2_b_ref,
    lnf_g_ref, lnf_b_ref,
    out_ref,
    *, seq, s_pad, depth, gb,
):
    """Whole ViT encoder for `gb` batch elements folded into M; VMEM-resident."""
    # ---- patch embed (+ bias + GSD pos-embed + cls prepend), fused ----------
    pad = jnp.zeros((s_pad - seq, DIM), jnp.float32)
    rows = []
    for g in range(gb):
        tok = jnp.dot(patches_ref[g], patch_w_ref[...],
                      preferred_element_type=jnp.float32)          # (N, DIM) f32
        tok = tok + patch_b_ref[...] + pos_ref[...]
        rows.append(jnp.concatenate([cls_tok_ref[...], tok, pad], axis=0))
    x = rows[0] if gb == 1 else jnp.concatenate(rows, axis=0)       # (gb*S_PAD, DIM)

    # additive key-padding bias, hoisted out of the depth loop
    col = jax.lax.broadcasted_iota(jnp.int32, (1, s_pad), 1)
    key_bias = jnp.where(col < seq, 0.0, NEG_INF).astype(jnp.float32)

    for d in range(depth):
        # ------------------------- attention sub-block -----------------------
        h1 = _layernorm(x, ln1_g_ref[d], ln1_b_ref[d])
        qkv = jnp.dot(h1.astype(jnp.bfloat16), qkv_w_ref[d],
                      preferred_element_type=jnp.float32) + qkv_b_ref[d]
        qkv_b16 = qkv.astype(jnp.bfloat16)                          # (gb*S_PAD, 3*DIM)
        proj_w = proj_w_ref[d]                                      # (DIM, DIM) bf16

        attn_rows = []
        for g in range(gb):
            qg = qkv_b16[g * s_pad:(g + 1) * s_pad]                 # (S_PAD, 3*DIM)
            acc = jnp.zeros((s_pad, DIM), jnp.float32)
            for hh in range(HEADS):
                q = qg[:, hh * HEAD_DIM:(hh + 1) * HEAD_DIM]
                k = qg[:, DIM + hh * HEAD_DIM: DIM + (hh + 1) * HEAD_DIM]
                v = qg[:, 2 * DIM + hh * HEAD_DIM: 2 * DIM + (hh + 1) * HEAD_DIM]
                # q @ k^T without an explicit transpose: contract last dims.
                s = jax.lax.dot_general(
                    q, k, (((1,), (1,)), ((), ())),
                    preferred_element_type=jnp.float32)             # (S_PAD, S_PAD)
                s = s * ATTN_SCALE + key_bias
                m = jnp.max(s, axis=-1, keepdims=True)
                p = jnp.exp(s - m)
                denom = jnp.sum(p, axis=-1, keepdims=True)
                o = jnp.dot(p.astype(jnp.bfloat16), v,
                            preferred_element_type=jnp.float32)     # (S_PAD, Dh)
                o = o * pl.reciprocal(denom, approx=True)
                # Fuse the head-concat into the output projection: accumulate
                # o_h @ proj_w[h*Dh:(h+1)*Dh, :] instead of lane-concatenating.
                acc = acc + jnp.dot(
                    o.astype(jnp.bfloat16),
                    proj_w[hh * HEAD_DIM:(hh + 1) * HEAD_DIM, :],
                    preferred_element_type=jnp.float32)
            attn_rows.append(acc)
        attn = attn_rows[0] if gb == 1 else jnp.concatenate(attn_rows, axis=0)
        x = x + attn + proj_b_ref[d]

        # ---------------------------- MLP sub-block --------------------------
        h2 = _layernorm(x, ln2_g_ref[d], ln2_b_ref[d])
        hm = jnp.dot(h2.astype(jnp.bfloat16), fc1_w_ref[d],
                     preferred_element_type=jnp.float32) + fc1_b_ref[d]
        hm = jax.nn.gelu(hm, approximate=True)
        ho = jnp.dot(hm.astype(jnp.bfloat16), fc2_w_ref[d],
                     preferred_element_type=jnp.float32) + fc2_b_ref[d]
        x = x + ho

    # ---- final LN + one merged lane-dense (gb, S_PAD, 128) output slab ------
    xf = _layernorm(x, lnf_g_ref[...], lnf_b_ref[...])
    out_ref[...] = xf.reshape(gb, s_pad, DIM)


# ====================== ScaleMAE GSD-aware positional embed ===================

def _sincos_1d(embed_dim, pos):
    omega = jnp.arange(embed_dim // 2, dtype=jnp.float32) / (embed_dim / 2.0)
    omega = 1.0 / (10000.0 ** omega)
    out = pos.reshape(-1)[:, None] * omega[None, :]
    return jnp.concatenate([jnp.sin(out), jnp.cos(out)], axis=1)


def gsd_pos_embed(embed_dim, grid_size, input_res, ref_res=10.0):
    """2D sin-cos positional embedding with coordinates scaled by GSD (ScaleMAE)."""
    scale = jnp.float32(input_res) / jnp.float32(ref_res)
    coords = jnp.arange(grid_size, dtype=jnp.float32) * scale
    gh, gw = jnp.meshgrid(coords, coords, indexing="ij")       # (G, G) each
    emb_h = _sincos_1d(embed_dim // 2, gh)                     # (N, D/2)
    emb_w = _sincos_1d(embed_dim // 2, gw)                     # (N, D/2)
    return jnp.concatenate([emb_h, emb_w], axis=1)             # (N, D)


# ============================ parameter initialization ========================

def init_params(key):
    keys = iter(jax.random.split(key, 64))

    def normal(shape, std=0.02):
        return (std * jax.random.normal(next(keys), shape)).astype(jnp.float32)

    params = {
        "patch_w": normal((C * PATCH * PATCH, DIM)),   # Conv2d(C,D,P,P) reshaped
        "patch_b": jnp.zeros((DIM,), jnp.float32),
        "cls_token": normal((1, 1, DIM)),
        "ln_f_g": jnp.ones((DIM,), jnp.float32),
        "ln_f_b": jnp.zeros((DIM,), jnp.float32),
        "blocks": [],
    }
    for _ in range(DEPTH):
        params["blocks"].append({
            "ln1_g": jnp.ones((DIM,), jnp.float32),
            "ln1_b": jnp.zeros((DIM,), jnp.float32),
            "qkv_w": normal((DIM, 3 * DIM)),
            "qkv_b": jnp.zeros((3 * DIM,), jnp.float32),
            "proj_w": normal((DIM, DIM)),
            "proj_b": jnp.zeros((DIM,), jnp.float32),
            "ln2_g": jnp.ones((DIM,), jnp.float32),
            "ln2_b": jnp.zeros((DIM,), jnp.float32),
            "fc1_w": normal((DIM, MLP_DIM)),
            "fc1_b": jnp.zeros((MLP_DIM,), jnp.float32),
            "fc2_w": normal((MLP_DIM, DIM)),
            "fc2_b": jnp.zeros((DIM,), jnp.float32),
        })
    return params


# ================================ forward pass ================================

def sat_img_encoder_forward(params, images, input_res=10.0, num_parallel_groups=2):
    """images: (B, C, H, W) float32 NCHW -> (cls (B, DIM), features (B, N, DIM)).

    num_parallel_groups: number of parallel grid points (default 2 to keep both
    v7x TensorCores busy).  On single-TC v5e/v6e pass 1 to fold the whole batch
    into the matmul M dimension (no per-step pipeline overhead).
    """
    b, c, h, w = images.shape
    gh, gw = h // PATCH, w // PATCH
    n = gh * gw
    seq = n + 1
    s_pad = _round_up(seq, 16)            # bf16 packs 16 sublanes per vreg
    cpp = c * PATCH * PATCH

    groups = max(1, min(num_parallel_groups, b))
    while b % groups != 0:                # keep per-group batch exact
        groups -= 1
    gb = b // groups                      # batch elements folded into M per step

    # --- patchify glue: Conv2d(k=P, s=P) == patchify + matmul (matmul in-kernel) ---
    patches = (images
               .reshape(b, c, gh, PATCH, gw, PATCH)
               .transpose(0, 2, 4, 1, 3, 5)              # (B, gh, gw, C, P, P)
               .reshape(b, n, cpp)
               .astype(jnp.bfloat16))

    # --- GSD (meters/pixel) scaled sin-cos positional embedding (ScaleMAE) ---
    pos = gsd_pos_embed(DIM, gh, input_res)              # (N, DIM) f32

    # --- stack per-block weights (matmul operands bf16, LN params / biases f32) ---
    def stack(name, dtype):
        return jnp.stack([blk[name] for blk in params["blocks"]]).astype(dtype)

    ln1_g = stack("ln1_g", jnp.float32)[:, None, :]
    ln1_b = stack("ln1_b", jnp.float32)[:, None, :]
    qkv_w = stack("qkv_w", jnp.bfloat16)
    qkv_b = stack("qkv_b", jnp.float32)[:, None, :]
    proj_w = stack("proj_w", jnp.bfloat16)
    proj_b = stack("proj_b", jnp.float32)[:, None, :]
    ln2_g = stack("ln2_g", jnp.float32)[:, None, :]
    ln2_b = stack("ln2_b", jnp.float32)[:, None, :]
    fc1_w = stack("fc1_w", jnp.bfloat16)
    fc1_b = stack("fc1_b", jnp.float32)[:, None, :]
    fc2_w = stack("fc2_w", jnp.bfloat16)
    fc2_b = stack("fc2_b", jnp.float32)[:, None, :]

    patch_w = params["patch_w"].astype(jnp.bfloat16)
    patch_b = params["patch_b"].reshape(1, DIM)
    cls_tok = params["cls_token"].reshape(1, DIM)
    lnf_g = params["ln_f_g"].reshape(1, DIM)
    lnf_b = params["ln_f_b"].reshape(1, DIM)

    inputs = (patches, patch_w, patch_b, pos, cls_tok,
              ln1_g, ln1_b, qkv_w, qkv_b, proj_w, proj_b,
              ln2_g, ln2_b, fc1_w, fc1_b, fc2_w, fc2_b,
              lnf_g, lnf_b)

    def full_spec(arr):
        nd = arr.ndim
        return pl.BlockSpec(arr.shape, lambda i, _nd=nd: (0,) * _nd)

    in_specs = [pl.BlockSpec((gb, n, cpp), lambda i: (i, 0, 0))]
    in_specs += [full_spec(a) for a in inputs[1:]]

    # single merged lane-dense output (padded rows sliced off in the wrapper)
    out_specs = pl.BlockSpec((gb, s_pad, DIM), lambda i: (i, 0, 0))
    out_shape = jax.ShapeDtypeStruct((b, s_pad, DIM), jnp.float32)

    kern = functools.partial(_encoder_kernel, seq=seq, s_pad=s_pad,
                             depth=len(params["blocks"]), gb=gb)

    out = pl.pallas_call(
        kern,
        grid=(groups,),
        in_specs=in_specs,
        out_specs=out_specs,
        out_shape=out_shape,
        compiler_params=pltpu.CompilerParams(
            dimension_semantics=("parallel",)),
    )(*inputs)

    cls_out = out[:, 0, :]                 # (B, DIM)
    features = out[:, 1:1 + n, :]          # (B, N, DIM); padded rows dropped
    return cls_out, features


if __name__ == "__main__":
    key = jax.random.PRNGKey(0)
    pkey, xkey = jax.random.split(key)
    params = init_params(pkey)
    images = jax.random.normal(xkey, (B, C, IMG, IMG), dtype=jnp.float32)

    fwd = jax.jit(functools.partial(sat_img_encoder_forward, input_res=10.0))
    cls_out, features = fwd(params, images)
    jax.block_until_ready((cls_out, features))

    assert cls_out.shape == (B, DIM), cls_out.shape
    assert features.shape == (B, N_PATCH, DIM), features.shape
    assert bool(jnp.all(jnp.isfinite(cls_out))) and bool(jnp.all(jnp.isfinite(features)))
    print("KERNEL_OK")
</pallas_src>

<mosaic_0001>
module attributes {stable_mosaic.version = 11 : i64} {
  func.func @_encoder_kernel(%arg0: i32, %arg1: memref<1x16x192xbf16, #tpu.memory_space<vmem>>, %arg2: memref<192x128xbf16, #tpu.memory_space<vmem>>, %arg3: memref<1x128xf32, #tpu.memory_space<vmem>>, %arg4: memref<16x128xf32, #tpu.memory_space<vmem>>, %arg5: memref<1x128xf32, #tpu.memory_space<vmem>>, %arg6: memref<2x1x128xf32, #tpu.memory_space<vmem>>, %arg7: memref<2x1x128xf32, #tpu.memory_space<vmem>>, %arg8: memref<2x128x384xbf16, #tpu.memory_space<vmem>>, %arg9: memref<2x1x384xf32, #tpu.memory_space<vmem>>, %arg10: memref<2x128x128xbf16, #tpu.memory_space<vmem>>, %arg11: memref<2x1x128xf32, #tpu.memory_space<vmem>>, %arg12: memref<2x1x128xf32, #tpu.memory_space<vmem>>, %arg13: memref<2x1x128xf32, #tpu.memory_space<vmem>>, %arg14: memref<2x128x512xbf16, #tpu.memory_space<vmem>>, %arg15: memref<2x1x512xf32, #tpu.memory_space<vmem>>, %arg16: memref<2x512x128xbf16, #tpu.memory_space<vmem>>, %arg17: memref<2x1x128xf32, #tpu.memory_space<vmem>>, %arg18: memref<1x128xf32, #tpu.memory_space<vmem>>, %arg19: memref<1x128xf32, #tpu.memory_space<vmem>>, %arg20: memref<1x32x128xf32, #tpu.memory_space<vmem>>) attributes {dimension_semantics = [#tpu.dimension_semantics<parallel>], iteration_bounds = array<i64: 2>, scalar_prefetch = 0 : i64, scratch_operands = 0 : i64, tpu.core_type = #tpu.core_type<tc>, window_params = [{transform_indices = @transform_0, window_bounds = array<i64: 1, 16, 192>}, {pipeline_mode = #tpu.pipeline_mode<synchronous>, transform_indices = @transform_1, window_bounds = array<i64: 192, 128>}, {pipeline_mode = #tpu.pipeline_mode<synchronous>, transform_indices = @transform_2, window_bounds = array<i64: 1, 128>}, {pipeline_mode = #tpu.pipeline_mode<synchronous>, transform_indices = @transform_3, window_bounds = array<i64: 16, 128>}, {pipeline_mode = #tpu.pipeline_mode<synchronous>, transform_indices = @transform_4, window_bounds = array<i64: 1, 128>}, {pipeline_mode = #tpu.pipeline_mode<synchronous>, transform_indices = @transform_5, window_bounds = array<i64: 2, 1, 128>}, {pipeline_mode = #tpu.pipeline_mode<synchronous>, transform_indices = @transform_6, window_bounds = array<i64: 2, 1, 128>}, {pipeline_mode = #tpu.pipeline_mode<synchronous>, transform_indices = @transform_7, window_bounds = array<i64: 2, 128, 384>}, {pipeline_mode = #tpu.pipeline_mode<synchronous>, transform_indices = @transform_8, window_bounds = array<i64: 2, 1, 384>}, {pipeline_mode = #tpu.pipeline_mode<synchronous>, transform_indices = @transform_9, window_bounds = array<i64: 2, 128, 128>}, {pipeline_mode = #tpu.pipeline_mode<synchronous>, transform_indices = @transform_10, window_bounds = array<i64: 2, 1, 128>}, {pipeline_mode = #tpu.pipeline_mode<synchronous>, transform_indices = @transform_11, window_bounds = array<i64: 2, 1, 128>}, {pipeline_mode = #tpu.pipeline_mode<synchronous>, transform_indices = @transform_12, window_bounds = array<i64: 2, 1, 128>}, {pipeline_mode = #tpu.pipeline_mode<synchronous>, transform_indices = @transform_13, window_bounds = array<i64: 2, 128, 512>}, {pipeline_mode = #tpu.pipeline_mode<synchronous>, transform_indices = @transform_14, window_bounds = array<i64: 2, 1, 512>}, {pipeline_mode = #tpu.pipeline_mode<synchronous>, transform_indices = @transform_15, window_bounds = array<i64: 2, 512, 128>}, {pipeline_mode = #tpu.pipeline_mode<synchronous>, transform_indices = @transform_16, window_bounds = array<i64: 2, 1, 128>}, {pipeline_mode = #tpu.pipeline_mode<synchronous>, transform_indices = @transform_17, window_bounds = array<i64: 1, 128>}, {pipeline_mode = #tpu.pipeline_mode<synchronous>, transform_indices = @transform_18, window_bounds = array<i64: 1, 128>}, {transform_indices = @transform_19, window_bounds = array<i64: 1, 32, 128>}]} {
    %cst = arith.constant 0.000000e+00 : f32
    %0 = vector.broadcast %cst : f32 to vector<15x128xf32>
    %c0 = arith.constant 0 : index
    %c0_0 = arith.constant 0 : index
    %c0_1 = arith.constant 0 : index
    %1 = vector.load %arg1[%c0, %c0_0, %c0_1] : memref<1x16x192xbf16, #tpu.memory_space<vmem>>, vector<1x16x192xbf16>
    %2 = vector.shape_cast %1 : vector<1x16x192xbf16> to vector<16x192xbf16>
    %c0_2 = arith.constant 0 : index
    %c0_3 = arith.constant 0 : index
    %3 = vector.load %arg2[%c0_2, %c0_3] : memref<192x128xbf16, #tpu.memory_space<vmem>>, vector<192x128xbf16>
    %cst_4 = arith.constant dense<0.000000e+00> : vector<16x128xf32>
    %4 = tpu.matmul %2, %3, %cst_4 {dimension_numbers = #tpu.dot_dimension_numbers<[1], [0], [0], [1], [0, 0, 1, 1], [], []>} : vector<16x192xbf16>, vector<192x128xbf16>, vector<16x128xf32> -> vector<16x128xf32>
    %c0_5 = arith.constant 0 : index
    %c0_6 = arith.constant 0 : index
    %5 = vector.load %arg3[%c0_5, %c0_6] : memref<1x128xf32, #tpu.memory_space<vmem>>, vector<1x128xf32>
    %6 = vector.broadcast %5 : vector<1x128xf32> to vector<16x128xf32>
    %7 = arith.addf %4, %6 : vector<16x128xf32>
    %c0_7 = arith.constant 0 : index
    %c0_8 = arith.constant 0 : index
    %8 = vector.load %arg4[%c0_7, %c0_8] : memref<16x128xf32, #tpu.memory_space<vmem>>, vector<16x128xf32>
    %9 = arith.addf %7, %8 : vector<16x128xf32>
    %c0_9 = arith.constant 0 : index
    %c0_10 = arith.constant 0 : index
    %10 = vector.load %arg5[%c0_9, %c0_10] : memref<1x128xf32, #tpu.memory_space<vmem>>, vector<1x128xf32>
    %11 = tpu.concatenate %10, %9, %0 in 0 : vector<1x128xf32>, vector<16x128xf32>, vector<15x128xf32> -> vector<32x128xf32>
    %12 = tpu.iota {dimensions = array<i32: 1>} : vector<1x32xi32>
    %c17_i32 = arith.constant 17 : i32
    %13 = vector.broadcast %c17_i32 : i32 to vector<1x32xi32>
    %14 = arith.cmpi slt, %12, %13 : vector<1x32xi32>
    %cst_11 = arith.constant 0.000000e+00 : f32
    %cst_12 = arith.constant -1.000000e+30 : f32
    %15 = vector.broadcast %cst_11 : f32 to vector<1x32xf32>
    %16 = vector.broadcast %cst_12 : f32 to vector<1x32xf32>
    %17 = arith.select %14, %15, %16 : vector<1x32xi1>, vector<1x32xf32>
    %c0_13 = arith.constant 0 : index
    %c0_14 = arith.constant 0 : index
    %c0_15 = arith.constant 0 : index
    %18 = vector.load %arg6[%c0_13, %c0_14, %c0_15] : memref<2x1x128xf32, #tpu.memory_space<vmem>>, vector<1x1x128xf32>
    %19 = vector.shape_cast %18 : vector<1x1x128xf32> to vector<1x128xf32>
    %c0_16 = arith.constant 0 : index
    %c0_17 = arith.constant 0 : index
    %c0_18 = arith.constant 0 : index
    %20 = vector.load %arg7[%c0_16, %c0_17, %c0_18] : memref<2x1x128xf32, #tpu.memory_space<vmem>>, vector<1x1x128xf32>
    %21 = vector.shape_cast %20 : vector<1x1x128xf32> to vector<1x128xf32>
    %cst_19 = arith.constant dense<0.000000e+00> : vector<32xf32>
    %22 = vector.multi_reduction <add>, %11, %cst_19 [1] : vector<32x128xf32> to vector<32xf32>
    %23 = vector.shape_cast %22 : vector<32xf32> to vector<32x1xf32>
    %cst_20 = arith.constant 1.280000e+02 : f32
    %24 = vector.broadcast %cst_20 : f32 to vector<32x1xf32>
    %25 = arith.divf %23, %24 : vector<32x1xf32>
    %26 = arith.mulf %11, %11 : vector<32x128xf32>
    %cst_21 = arith.constant dense<0.000000e+00> : vector<32xf32>
    %27 = vector.multi_reduction <add>, %26, %cst_21 [1] : vector<32x128xf32> to vector<32xf32>
    %28 = vector.shape_cast %27 : vector<32xf32> to vector<32x1xf32>
    %cst_22 = arith.constant 1.280000e+02 : f32
    %29 = vector.broadcast %cst_22 : f32 to vector<32x1xf32>
    %30 = arith.divf %28, %29 : vector<32x1xf32>
    %31 = arith.mulf %25, %25 : vector<32x1xf32>
    %32 = arith.subf %30, %31 : vector<32x1xf32>
    %cst_23 = arith.constant 0.000000e+00 : f32
    %33 = vector.broadcast %cst_23 : f32 to vector<32x1xf32>
    %34 = arith.maximumf %32, %33 : vector<32x1xf32>
    %35 = vector.broadcast %25 : vector<32x1xf32> to vector<32x128xf32>
    %36 = arith.subf %11, %35 : vector<32x128xf32>
    %cst_24 = arith.constant 9.99999997E-7 : f32
    %37 = vector.broadcast %cst_24 : f32 to vector<32x1xf32>
    %38 = arith.addf %34, %37 : vector<32x1xf32>
    %39 = math.rsqrt %38 : vector<32x1xf32>
    %40 = vector.broadcast %39 : vector<32x1xf32> to vector<32x128xf32>
    %41 = arith.mulf %36, %40 : vector<32x128xf32>
    %42 = vector.broadcast %19 : vector<1x128xf32> to vector<32x128xf32>
    %43 = arith.mulf %41, %42 : vector<32x128xf32>
    %44 = vector.broadcast %21 : vector<1x128xf32> to vector<32x128xf32>
    %45 = arith.addf %43, %44 : vector<32x128xf32>
    %46 = arith.truncf %45 : vector<32x128xf32> to vector<32x128xbf16>
    %c0_25 = arith.constant 0 : index
    %c0_26 = arith.constant 0 : index
    %c0_27 = arith.constant 0 : index
    %47 = vector.load %arg8[%c0_25, %c0_26, %c0_27] : memref<2x128x384xbf16, #tpu.memory_space<vmem>>, vector<1x128x384xbf16>
    %48 = vector.shape_cast %47 : vector<1x128x384xbf16> to vector<128x384xbf16>
    %cst_28 = arith.constant dense<0.000000e+00> : vector<32x384xf32>
    %49 = tpu.matmul %46, %48, %cst_28 {dimension_numbers = #tpu.dot_dimension_numbers<[1], [0], [0], [1], [0, 0, 1, 1], [], []>} : vector<32x128xbf16>, vector<128x384xbf16>, vector<32x384xf32> -> vector<32x384xf32>
    %c0_29 = arith.constant 0 : index
    %c0_30 = arith.constant 0 : index
    %c0_31 = arith.constant 0 : index
    %50 = vector.load %arg9[%c0_29, %c0_30, %c0_31] : memref<2x1x384xf32, #tpu.memory_space<vmem>>, vector<1x1x384xf32>
    %51 = vector.shape_cast %50 : vector<1x1x384xf32> to vector<1x384xf32>
    %52 = vector.broadcast %51 : vector<1x384xf32> to vector<32x384xf32>
    %53 = arith.addf %49, %52 : vector<32x384xf32>
    %54 = arith.truncf %53 : vector<32x384xf32> to vector<32x384xbf16>
    %c0_32 = arith.constant 0 : index
    %c0_33 = arith.constant 0 : index
    %c0_34 = arith.constant 0 : index
    %55 = vector.load %arg10[%c0_32, %c0_33, %c0_34] : memref<2x128x128xbf16, #tpu.memory_space<vmem>>, vector<1x128x128xbf16>
    %56 = vector.shape_cast %55 : vector<1x128x128xbf16> to vector<128x128xbf16>
    %cst_35 = arith.constant 0.000000e+00 : f32
    %57 = vector.broadcast %cst_35 : f32 to vector<32x128xf32>
    %58 = vector.extract_strided_slice %54 {offsets = [0, 0], sizes = [32, 32], strides = [1, 1]} : vector<32x384xbf16> to vector<32x32xbf16>
    %59 = vector.extract_strided_slice %54 {offsets = [0, 128], sizes = [32, 32], strides = [1, 1]} : vector<32x384xbf16> to vector<32x32xbf16>
    %60 = vector.extract_strided_slice %54 {offsets = [0, 256], sizes = [32, 32], strides = [1, 1]} : vector<32x384xbf16> to vector<32x32xbf16>
    %cst_36 = arith.constant dense<0.000000e+00> : vector<32x32xf32>
    %61 = tpu.matmul %58, %59, %cst_36 {dimension_numbers = #tpu.dot_dimension_numbers<[1], [1], [0], [0], [0, 0, 1, 0], [], []>} : vector<32x32xbf16>, vector<32x32xbf16>, vector<32x32xf32> -> vector<32x32xf32>
    %cst_37 = arith.constant 0.176776692 : f32
    %62 = vector.broadcast %cst_37 : f32 to vector<32x32xf32>
    %63 = arith.mulf %61, %62 : vector<32x32xf32>
    %64 = vector.broadcast %17 : vector<1x32xf32> to vector<32x32xf32>
    %65 = arith.addf %63, %64 : vector<32x32xf32>
    %cst_38 = arith.constant dense<0xFF800000> : vector<32xf32>
    %66 = vector.multi_reduction <maximumf>, %65, %cst_38 [1] : vector<32x32xf32> to vector<32xf32>
    %67 = vector.shape_cast %66 : vector<32xf32> to vector<32x1xf32>
    %68 = vector.broadcast %67 : vector<32x1xf32> to vector<32x32xf32>
    %69 = arith.subf %65, %68 : vector<32x32xf32>
    %70 = math.exp %69 : vector<32x32xf32>
    %cst_39 = arith.constant dense<0.000000e+00> : vector<32xf32>
    %71 = vector.multi_reduction <add>, %70, %cst_39 [1] : vector<32x32xf32> to vector<32xf32>
    %72 = vector.shape_cast %71 : vector<32xf32> to vector<32x1xf32>
    %73 = arith.truncf %70 : vector<32x32xf32> to vector<32x32xbf16>
    %cst_40 = arith.constant dense<0.000000e+00> : vector<32x32xf32>
    %74 = tpu.matmul %73, %60, %cst_40 {dimension_numbers = #tpu.dot_dimension_numbers<[1], [0], [0], [1], [0, 0, 1, 1], [], []>} : vector<32x32xbf16>, vector<32x32xbf16>, vector<32x32xf32> -> vector<32x32xf32>
    %75 = tpu.reciprocal %72 {approx = true} : vector<32x1xf32> -> vector<32x1xf32>
    %76 = vector.broadcast %75 : vector<32x1xf32> to vector<32x32xf32>
    %77 = arith.mulf %74, %76 : vector<32x32xf32>
    %78 = arith.truncf %77 : vector<32x32xf32> to vector<32x32xbf16>
    %79 = vector.extract_strided_slice %56 {offsets = [0, 0], sizes = [32, 128], strides = [1, 1]} : vector<128x128xbf16> to vector<32x128xbf16>
    %cst_41 = arith.constant dense<0.000000e+00> : vector<32x128xf32>
    %80 = tpu.matmul %78, %79, %cst_41 {dimension_numbers = #tpu.dot_dimension_numbers<[1], [0], [0], [1], [0, 0, 1, 1], [], []>} : vector<32x32xbf16>, vector<32x128xbf16>, vector<32x128xf32> -> vector<32x128xf32>
    %81 = arith.addf %57, %80 : vector<32x128xf32>
    %82 = vector.extract_strided_slice %54 {offsets = [0, 32], sizes = [32, 32], strides = [1, 1]} : vector<32x384xbf16> to vector<32x32xbf16>
    %83 = vector.extract_strided_slice %54 {offsets = [0, 160], sizes = [32, 32], strides = [1, 1]} : vector<32x384xbf16> to vector<32x32xbf16>
    %84 = vector.extract_strided_slice %54 {offsets = [0, 288], sizes = [32, 32], strides = [1, 1]} : vector<32x384xbf16> to vector<32x32xbf16>
    %cst_42 = arith.constant dense<0.000000e+00> : vector<32x32xf32>
    %85 = tpu.matmul %82, %83, %cst_42 {dimension_numbers = #tpu.dot_dimension_numbers<[1], [1], [0], [0], [0, 0, 1, 0], [], []>} : vector<32x32xbf16>, vector<32x32xbf16>, vector<32x32xf32> -> vector<32x32xf32>
    %cst_43 = arith.constant 0.176776692 : f32
    %86 = vector.broadcast %cst_43 : f32 to vector<32x32xf32>
    %87 = arith.mulf %85, %86 : vector<32x32xf32>
    %88 = vector.broadcast %17 : vector<1x32xf32> to vector<32x32xf32>
    %89 = arith.addf %87, %88 : vector<32x32xf32>
    %cst_44 = arith.constant dense<0xFF800000> : vector<32xf32>
    %90 = vector.multi_reduction <maximumf>, %89, %cst_44 [1] : vector<32x32xf32> to vector<32xf32>
    %91 = vector.shape_cast %90 : vector<32xf32> to vector<32x1xf32>
    %92 = vector.broadcast %91 : vector<32x1xf32> to vector<32x32xf32>
    %93 = arith.subf %89, %92 : vector<32x32xf32>
    %94 = math.exp %93 : vector<32x32xf32>
    %cst_45 = arith.constant dense<0.000000e+00> : vector<32xf32>
    %95 = vector.multi_reduction <add>, %94, %cst_45 [1] : vector<32x32xf32> to vector<32xf32>
    %96 = vector.shape_cast %95 : vector<32xf32> to vector<32x1xf32>
    %97 = arith.truncf %94 : vector<32x32xf32> to vector<32x32xbf16>
    %cst_46 = arith.constant dense<0.000000e+00> : vector<32x32xf32>
    %98 = tpu.matmul %97, %84, %cst_46 {dimension_numbers = #tpu.dot_dimension_numbers<[1], [0], [0], [1], [0, 0, 1, 1], [], []>} : vector<32x32xbf16>, vector<32x32xbf16>, vector<32x32xf32> -> vector<32x32xf32>
    %99 = tpu.reciprocal %96 {approx = true} : vector<32x1xf32> -> vector<32x1xf32>
    %100 = vector.broadcast %99 : vector<32x1xf32> to vector<32x32xf32>
    %101 = arith.mulf %98, %100 : vector<32x32xf32>
    %102 = arith.truncf %101 : vector<32x32xf32> to vector<32x32xbf16>
    %103 = vector.extract_strided_slice %56 {offsets = [32, 0], sizes = [32, 128], strides = [1, 1]} : vector<128x128xbf16> to vector<32x128xbf16>
    %cst_47 = arith.constant dense<0.000000e+00> : vector<32x128xf32>
    %104 = tpu.matmul %102, %103, %cst_47 {dimension_numbers = #tpu.dot_dimension_numbers<[1], [0], [0], [1], [0, 0, 1, 1], [], []>} : vector<32x32xbf16>, vector<32x128xbf16>, vector<32x128xf32> -> vector<32x128xf32>
    %105 = arith.addf %81, %104 : vector<32x128xf32>
    %106 = vector.extract_strided_slice %54 {offsets = [0, 64], sizes = [32, 32], strides = [1, 1]} : vector<32x384xbf16> to vector<32x32xbf16>
    %107 = vector.extract_strided_slice %54 {offsets = [0, 192], sizes = [32, 32], strides = [1, 1]} : vector<32x384xbf16> to vector<32x32xbf16>
    %108 = vector.extract_strided_slice %54 {offsets = [0, 320], sizes = [32, 32], strides = [1, 1]} : vector<32x384xbf16> to vector<32x32xbf16>
    %cst_48 = arith.constant dense<0.000000e+00> : vector<32x32xf32>
    %109 = tpu.matmul %106, %107, %cst_48 {dimension_numbers = #tpu.dot_dimension_numbers<[1], [1], [0], [0], [0, 0, 1, 0], [], []>} : vector<32x32xbf16>, vector<32x32xbf16>, vector<32x32xf32> -> vector<32x32xf32>
    %cst_49 = arith.constant 0.176776692 : f32
    %110 = vector.broadcast %cst_49 : f32 to vector<32x32xf32>
    %111 = arith.mulf %109, %110 : vector<32x32xf32>
    %112 = vector.broadcast %17 : vector<1x32xf32> to vector<32x32xf32>
    %113 = arith.addf %111, %112 : vector<32x32xf32>
    %cst_50 = arith.constant dense<0xFF800000> : vector<32xf32>
    %114 = vector.multi_reduction <maximumf>, %113, %cst_50 [1] : vector<32x32xf32> to vector<32xf32>
    %115 = vector.shape_cast %114 : vector<32xf32> to vector<32x1xf32>
    %116 = vector.broadcast %115 : vector<32x1xf32> to vector<32x32xf32>
    %117 = arith.subf %113, %116 : vector<32x32xf32>
    %118 = math.exp %117 : vector<32x32xf32>
    %cst_51 = arith.constant dense<0.000000e+00> : vector<32xf32>
    %119 = vector.multi_reduction <add>, %118, %cst_51 [1] : vector<32x32xf32> to vector<32xf32>
    %120 = vector.shape_cast %119 : vector<32xf32> to vector<32x1xf32>
    %121 = arith.truncf %118 : vector<32x32xf32> to vector<32x32xbf16>
    %cst_52 = arith.constant dense<0.000000e+00> : vector<32x32xf32>
    %122 = tpu.matmul %121, %108, %cst_52 {dimension_numbers = #tpu.dot_dimension_numbers<[1], [0], [0], [1], [0, 0, 1, 1], [], []>} : vector<32x32xbf16>, vector<32x32xbf16>, vector<32x32xf32> -> vector<32x32xf32>
    %123 = tpu.reciprocal %120 {approx = true} : vector<32x1xf32> -> vector<32x1xf32>
    %124 = vector.broadcast %123 : vector<32x1xf32> to vector<32x32xf32>
    %125 = arith.mulf %122, %124 : vector<32x32xf32>
    %126 = arith.truncf %125 : vector<32x32xf32> to vector<32x32xbf16>
    %127 = vector.extract_strided_slice %56 {offsets = [64, 0], sizes = [32, 128], strides = [1, 1]} : vector<128x128xbf16> to vector<32x128xbf16>
    %cst_53 = arith.constant dense<0.000000e+00> : vector<32x128xf32>
    %128 = tpu.matmul %126, %127, %cst_53 {dimension_numbers = #tpu.dot_dimension_numbers<[1], [0], [0], [1], [0, 0, 1, 1], [], []>} : vector<32x32xbf16>, vector<32x128xbf16>, vector<32x128xf32> -> vector<32x128xf32>
    %129 = arith.addf %105, %128 : vector<32x128xf32>
    %130 = vector.extract_strided_slice %54 {offsets = [0, 96], sizes = [32, 32], strides = [1, 1]} : vector<32x384xbf16> to vector<32x32xbf16>
    %131 = vector.extract_strided_slice %54 {offsets = [0, 224], sizes = [32, 32], strides = [1, 1]} : vector<32x384xbf16> to vector<32x32xbf16>
    %132 = vector.extract_strided_slice %54 {offsets = [0, 352], sizes = [32, 32], strides = [1, 1]} : vector<32x384xbf16> to vector<32x32xbf16>
    %cst_54 = arith.constant dense<0.000000e+00> : vector<32x32xf32>
    %133 = tpu.matmul %130, %131, %cst_54 {dimension_numbers = #tpu.dot_dimension_numbers<[1], [1], [0], [0], [0, 0, 1, 0], [], []>} : vector<32x32xbf16>, vector<32x32xbf16>, vector<32x32xf32> -> vector<32x32xf32>
    %cst_55 = arith.constant 0.176776692 : f32
    %134 = vector.broadcast %cst_55 : f32 to vector<32x32xf32>
    %135 = arith.mulf %133, %134 : vector<32x32xf32>
    %136 = vector.broadcast %17 : vector<1x32xf32> to vector<32x32xf32>
    %137 = arith.addf %135, %136 : vector<32x32xf32>
    %cst_56 = arith.constant dense<0xFF800000> : vector<32xf32>
    %138 = vector.multi_reduction <maximumf>, %137, %cst_56 [1] : vector<32x32xf32> to vector<32xf32>
    %139 = vector.shape_cast %138 : vector<32xf32> to vector<32x1xf32>
    %140 = vector.broadcast %139 : vector<32x1xf32> to vector<32x32xf32>
    %141 = arith.subf %137, %140 : vector<32x32xf32>
    %142 = math.exp %141 : vector<32x32xf32>
    %cst_57 = arith.constant dense<0.000000e+00> : vector<32xf32>
    %143 = vector.multi_reduction <add>, %142, %cst_57 [1] : vector<32x32xf32> to vector<32xf32>
    %144 = vector.shape_cast %143 : vector<32xf32> to vector<32x1xf32>
    %145 = arith.truncf %142 : vector<32x32xf32> to vector<32x32xbf16>
    %cst_58 = arith.constant dense<0.000000e+00> : vector<32x32xf32>
    %146 = tpu.matmul %145, %132, %cst_58 {dimension_numbers = #tpu.dot_dimension_numbers<[1], [0], [0], [1], [0, 0, 1, 1], [], []>} : vector<32x32xbf16>, vector<32x32xbf16>, vector<32x32xf32> -> vector<32x32xf32>
    %147 = tpu.reciprocal %144 {approx = true} : vector<32x1xf32> -> vector<32x1xf32>
    %148 = vector.broadcast %147 : vector<32x1xf32> to vector<32x32xf32>
    %149 = arith.mulf %146, %148 : vector<32x32xf32>
    %150 = arith.truncf %149 : vector<32x32xf32> to vector<32x32xbf16>
    %151 = vector.extract_strided_slice %56 {offsets = [96, 0], sizes = [32, 128], strides = [1, 1]} : vector<128x128xbf16> to vector<32x128xbf16>
    %cst_59 = arith.constant dense<0.000000e+00> : vector<32x128xf32>
    %152 = tpu.matmul %150, %151, %cst_59 {dimension_numbers = #tpu.dot_dimension_numbers<[1], [0], [0], [1], [0, 0, 1, 1], [], []>} : vector<32x32xbf16>, vector<32x128xbf16>, vector<32x128xf32> -> vector<32x128xf32>
    %153 = arith.addf %129, %152 : vector<32x128xf32>
    %154 = arith.addf %11, %153 : vector<32x128xf32>
    %c0_60 = arith.constant 0 : index
    %c0_61 = arith.constant 0 : index
    %c0_62 = arith.constant 0 : index
    %155 = vector.load %arg11[%c0_60, %c0_61, %c0_62] : memref<2x1x128xf32, #tpu.memory_space<vmem>>, vector<1x1x128xf32>
    %156 = vector.shape_cast %155 : vector<1x1x128xf32> to vector<1x128xf32>
    %157 = vector.broadcast %156 : vector<1x128xf32> to vector<32x128xf32>
    %158 = arith.addf %154, %157 : vector<32x128xf32>
    %c0_63 = arith.constant 0 : index
    %c0_64 = arith.constant 0 : index
    %c0_65 = arith.constant 0 : index
    %159 = vector.load %arg12[%c0_63, %c0_64, %c0_65] : memref<2x1x128xf32, #tpu.memory_space<vmem>>, vector<1x1x128xf32>
    %160 = vector.shape_cast %159 : vector<1x1x128xf32> to vector<1x128xf32>
    %c0_66 = arith.constant 0 : index
    %c0_67 = arith.constant 0 : index
    %c0_68 = arith.constant 0 : index
    %161 = vector.load %arg13[%c0_66, %c0_67, %c0_68] : memref<2x1x128xf32, #tpu.memory_space<vmem>>, vector<1x1x128xf32>
    %162 = vector.shape_cast %161 : vector<1x1x128xf32> to vector<1x128xf32>
    %cst_69 = arith.constant dense<0.000000e+00> : vector<32xf32>
    %163 = vector.multi_reduction <add>, %158, %cst_69 [1] : vector<32x128xf32> to vector<32xf32>
    %164 = vector.shape_cast %163 : vector<32xf32> to vector<32x1xf32>
    %cst_70 = arith.constant 1.280000e+02 : f32
    %165 = vector.broadcast %cst_70 : f32 to vector<32x1xf32>
    %166 = arith.divf %164, %165 : vector<32x1xf32>
    %167 = arith.mulf %158, %158 : vector<32x128xf32>
    %cst_71 = arith.constant dense<0.000000e+00> : vector<32xf32>
    %168 = vector.multi_reduction <add>, %167, %cst_71 [1] : vector<32x128xf32> to vector<32xf32>
    %169 = vector.shape_cast %168 : vector<32xf32> to vector<32x1xf32>
    %cst_72 = arith.constant 1.280000e+02 : f32
    %170 = vector.broadcast %cst_72 : f32 to vector<32x1xf32>
    %171 = arith.divf %169, %170 : vector<32x1xf32>
    %172 = arith.mulf %166, %166 : vector<32x1xf32>
    %173 = arith.subf %171, %172 : vector<32x1xf32>
    %cst_73 = arith.constant 0.000000e+00 : f32
    %174 = vector.broadcast %cst_73 : f32 to vector<32x1xf32>
    %175 = arith.maximumf %173, %174 : vector<32x1xf32>
    %176 = vector.broadcast %166 : vector<32x1xf32> to vector<32x128xf32>
    %177 = arith.subf %158, %176 : vector<32x128xf32>
    %cst_74 = arith.constant 9.99999997E-7 : f32
    %178 = vector.broadcast %cst_74 : f32 to vector<32x1xf32>
    %179 = arith.addf %175, %178 : vector<32x1xf32>
    %180 = math.rsqrt %179 : vector<32x1xf32>
    %181 = vector.broadcast %180 : vector<32x1xf32> to vector<32x128xf32>
    %182 = arith.mulf %177, %181 : vector<32x128xf32>
    %183 = vector.broadcast %160 : vector<1x128xf32> to vector<32x128xf32>
    %184 = arith.mulf %182, %183 : vector<32x128xf32>
    %185 = vector.broadcast %162 : vector<1x128xf32> to vector<32x128xf32>
    %186 = arith.addf %184, %185 : vector<32x128xf32>
    %187 = arith.truncf %186 : vector<32x128xf32> to vector<32x128xbf16>
    %c0_75 = arith.constant 0 : index
    %c0_76 = arith.constant 0 : index
    %c0_77 = arith.constant 0 : index
    %188 = vector.load %arg14[%c0_75, %c0_76, %c0_77] : memref<2x128x512xbf16, #tpu.memory_space<vmem>>, vector<1x128x512xbf16>
    %189 = vector.shape_cast %188 : vector<1x128x512xbf16> to vector<128x512xbf16>
    %cst_78 = arith.constant dense<0.000000e+00> : vector<32x512xf32>
    %190 = tpu.matmul %187, %189, %cst_78 {dimension_numbers = #tpu.dot_dimension_numbers<[1], [0], [0], [1], [0, 0, 1, 1], [], []>} : vector<32x128xbf16>, vector<128x512xbf16>, vector<32x512xf32> -> vector<32x512xf32>
    %c0_79 = arith.constant 0 : index
    %c0_80 = arith.constant 0 : index
    %c0_81 = arith.constant 0 : index
    %191 = vector.load %arg15[%c0_79, %c0_80, %c0_81] : memref<2x1x512xf32, #tpu.memory_space<vmem>>, vector<1x1x512xf32>
    %192 = vector.shape_cast %191 : vector<1x1x512xf32> to vector<1x512xf32>
    %193 = vector.broadcast %192 : vector<1x512xf32> to vector<32x512xf32>
    %194 = arith.addf %190, %193 : vector<32x512xf32>
    %195 = arith.mulf %194, %194 : vector<32x512xf32>
    %196 = arith.mulf %194, %195 : vector<32x512xf32>
    %cst_82 = arith.constant 4.471500e-02 : f32
    %197 = vector.broadcast %cst_82 : f32 to vector<32x512xf32>
    %198 = arith.mulf %197, %196 : vector<32x512xf32>
    %199 = arith.addf %194, %198 : vector<32x512xf32>
    %cst_83 = arith.constant 0.797884583 : f32
    %200 = vector.broadcast %cst_83 : f32 to vector<32x512xf32>
    %201 = arith.mulf %200, %199 : vector<32x512xf32>
    %202 = math.tanh %201 : vector<32x512xf32>
    %cst_84 = arith.constant 1.000000e+00 : f32
    %203 = vector.broadcast %cst_84 : f32 to vector<32x512xf32>
    %204 = arith.addf %203, %202 : vector<32x512xf32>
    %cst_85 = arith.constant 5.000000e-01 : f32
    %205 = vector.broadcast %cst_85 : f32 to vector<32x512xf32>
    %206 = arith.mulf %205, %204 : vector<32x512xf32>
    %207 = arith.mulf %194, %206 : vector<32x512xf32>
    %208 = arith.truncf %207 : vector<32x512xf32> to vector<32x512xbf16>
    %c0_86 = arith.constant 0 : index
    %c0_87 = arith.constant 0 : index
    %c0_88 = arith.constant 0 : index
    %209 = vector.load %arg16[%c0_86, %c0_87, %c0_88] : memref<2x512x128xbf16, #tpu.memory_space<vmem>>, vector<1x512x128xbf16>
    %210 = vector.shape_cast %209 : vector<1x512x128xbf16> to vector<512x128xbf16>
    %cst_89 = arith.constant dense<0.000000e+00> : vector<32x128xf32>
    %211 = tpu.matmul %208, %210, %cst_89 {dimension_numbers = #tpu.dot_dimension_numbers<[1], [0], [0], [1], [0, 0, 1, 1], [], []>} : vector<32x512xbf16>, vector<512x128xbf16>, vector<32x128xf32> -> vector<32x128xf32>
    %c0_90 = arith.constant 0 : index
    %c0_91 = arith.constant 0 : index
    %c0_92 = arith.constant 0 : index
    %212 = vector.load %arg17[%c0_90, %c0_91, %c0_92] : memref<2x1x128xf32, #tpu.memory_space<vmem>>, vector<1x1x128xf32>
    %213 = vector.shape_cast %212 : vector<1x1x128xf32> to vector<1x128xf32>
    %214 = vector.broadcast %213 : vector<1x128xf32> to vector<32x128xf32>
    %215 = arith.addf %211, %214 : vector<32x128xf32>
    %216 = arith.addf %158, %215 : vector<32x128xf32>
    %c1 = arith.constant 1 : index
    %c0_93 = arith.constant 0 : index
    %c0_94 = arith.constant 0 : index
    %217 = vector.load %arg6[%c1, %c0_93, %c0_94] : memref<2x1x128xf32, #tpu.memory_space<vmem>>, vector<1x1x128xf32>
    %218 = vector.shape_cast %217 : vector<1x1x128xf32> to vector<1x128xf32>
    %c1_95 = arith.constant 1 : index
    %c0_96 = arith.constant 0 : index
    %c0_97 = arith.constant 0 : index
    %219 = vector.load %arg7[%c1_95, %c0_96, %c0_97] : memref<2x1x128xf32, #tpu.memory_space<vmem>>, vector<1x1x128xf32>
    %220 = vector.shape_cast %219 : vector<1x1x128xf32> to vector<1x128xf32>
    %cst_98 = arith.constant dense<0.000000e+00> : vector<32xf32>
    %221 = vector.multi_reduction <add>, %216, %cst_98 [1] : vector<32x128xf32> to vector<32xf32>
    %222 = vector.shape_cast %221 : vector<32xf32> to vector<32x1xf32>
    %cst_99 = arith.constant 1.280000e+02 : f32
    %223 = vector.broadcast %cst_99 : f32 to vector<32x1xf32>
    %224 = arith.divf %222, %223 : vector<32x1xf32>
    %225 = arith.mulf %216, %216 : vector<32x128xf32>
    %cst_100 = arith.constant dense<0.000000e+00> : vector<32xf32>
    %226 = vector.multi_reduction <add>, %225, %cst_100 [1] : vector<32x128xf32> to vector<32xf32>
    %227 = vector.shape_cast %226 : vector<32xf32> to vector<32x1xf32>
    %cst_101 = arith.constant 1.280000e+02 : f32
    %228 = vector.broadcast %cst_101 : f32 to vector<32x1xf32>
    %229 = arith.divf %227, %228 : vector<32x1xf32>
    %230 = arith.mulf %224, %224 : vector<32x1xf32>
    %231 = arith.subf %229, %230 : vector<32x1xf32>
    %cst_102 = arith.constant 0.000000e+00 : f32
    %232 = vector.broadcast %cst_102 : f32 to vector<32x1xf32>
    %233 = arith.maximumf %231, %232 : vector<32x1xf32>
    %234 = vector.broadcast %224 : vector<32x1xf32> to vector<32x128xf32>
    %235 = arith.subf %216, %234 : vector<32x128xf32>
    %cst_103 = arith.constant 9.99999997E-7 : f32
    %236 = vector.broadcast %cst_103 : f32 to vector<32x1xf32>
    %237 = arith.addf %233, %236 : vector<32x1xf32>
    %238 = math.rsqrt %237 : vector<32x1xf32>
    %239 = vector.broadcast %238 : vector<32x1xf32> to vector<32x128xf32>
    %240 = arith.mulf %235, %239 : vector<32x128xf32>
    %241 = vector.broadcast %218 : vector<1x128xf32> to vector<32x128xf32>
    %242 = arith.mulf %240, %241 : vector<32x128xf32>
    %243 = vector.broadcast %220 : vector<1x128xf32> to vector<32x128xf32>
    %244 = arith.addf %242, %243 : vector<32x128xf32>
    %245 = arith.truncf %244 : vector<32x128xf32> to vector<32x128xbf16>
    %c1_104 = arith.constant 1 : index
    %c0_105 = arith.constant 0 : index
    %c0_106 = arith.constant 0 : index
    %246 = vector.load %arg8[%c1_104, %c0_105, %c0_106] : memref<2x128x384xbf16, #tpu.memory_space<vmem>>, vector<1x128x384xbf16>
    %247 = vector.shape_cast %246 : vector<1x128x384xbf16> to vector<128x384xbf16>
    %cst_107 = arith.constant dense<0.000000e+00> : vector<32x384xf32>
    %248 = tpu.matmul %245, %247, %cst_107 {dimension_numbers = #tpu.dot_dimension_numbers<[1], [0], [0], [1], [0, 0, 1, 1], [], []>} : vector<32x128xbf16>, vector<128x384xbf16>, vector<32x384xf32> -> vector<32x384xf32>
    %c1_108 = arith.constant 1 : index
    %c0_109 = arith.constant 0 : index
    %c0_110 = arith.constant 0 : index
    %249 = vector.load %arg9[%c1_108, %c0_109, %c0_110] : memref<2x1x384xf32, #tpu.memory_space<vmem>>, vector<1x1x384xf32>
    %250 = vector.shape_cast %249 : vector<1x1x384xf32> to vector<1x384xf32>
    %251 = vector.broadcast %250 : vector<1x384xf32> to vector<32x384xf32>
    %252 = arith.addf %248, %251 : vector<32x384xf32>
    %253 = arith.truncf %252 : vector<32x384xf32> to vector<32x384xbf16>
    %c1_111 = arith.constant 1 : index
    %c0_112 = arith.constant 0 : index
    %c0_113 = arith.constant 0 : index
    %254 = vector.load %arg10[%c1_111, %c0_112, %c0_113] : memref<2x128x128xbf16, #tpu.memory_space<vmem>>, vector<1x128x128xbf16>
    %255 = vector.shape_cast %254 : vector<1x128x128xbf16> to vector<128x128xbf16>
    %cst_114 = arith.constant 0.000000e+00 : f32
    %256 = vector.broadcast %cst_114 : f32 to vector<32x128xf32>
    %257 = vector.extract_strided_slice %253 {offsets = [0, 0], sizes = [32, 32], strides = [1, 1]} : vector<32x384xbf16> to vector<32x32xbf16>
    %258 = vector.extract_strided_slice %253 {offsets = [0, 128], sizes = [32, 32], strides = [1, 1]} : vector<32x384xbf16> to vector<32x32xbf16>
    %259 = vector.extract_strided_slice %253 {offsets = [0, 256], sizes = [32, 32], strides = [1, 1]} : vector<32x384xbf16> to vector<32x32xbf16>
    %cst_115 = arith.constant dense<0.000000e+00> : vector<32x32xf32>
    %260 = tpu.matmul %257, %258, %cst_115 {dimension_numbers = #tpu.dot_dimension_numbers<[1], [1], [0], [0], [0, 0, 1, 0], [], []>} : vector<32x32xbf16>, vector<32x32xbf16>, vector<32x32xf32> -> vector<32x32xf32>
    %cst_116 = arith.constant 0.176776692 : f32
    %261 = vector.broadcast %cst_116 : f32 to vector<32x32xf32>
    %262 = arith.mulf %260, %261 : vector<32x32xf32>
    %263 = vector.broadcast %17 : vector<1x32xf32> to vector<32x32xf32>
    %264 = arith.addf %262, %263 : vector<32x32xf32>
    %cst_117 = arith.constant dense<0xFF800000> : vector<32xf32>
    %265 = vector.multi_reduction <maximumf>, %264, %cst_117 [1] : vector<32x32xf32> to vector<32xf32>
    %266 = vector.shape_cast %265 : vector<32xf32> to vector<32x1xf32>
    %267 = vector.broadcast %266 : vector<32x1xf32> to vector<32x32xf32>
    %268 = arith.subf %264, %267 : vector<32x32xf32>
    %269 = math.exp %268 : vector<32x32xf32>
    %cst_118 = arith.constant dense<0.000000e+00> : vector<32xf32>
    %270 = vector.multi_reduction <add>, %269, %cst_118 [1] : vector<32x32xf32> to vector<32xf32>
    %271 = vector.shape_cast %270 : vector<32xf32> to vector<32x1xf32>
    %272 = arith.truncf %269 : vector<32x32xf32> to vector<32x32xbf16>
    %cst_119 = arith.constant dense<0.000000e+00> : vector<32x32xf32>
    %273 = tpu.matmul %272, %259, %cst_119 {dimension_numbers = #tpu.dot_dimension_numbers<[1], [0], [0], [1], [0, 0, 1, 1], [], []>} : vector<32x32xbf16>, vector<32x32xbf16>, vector<32x32xf32> -> vector<32x32xf32>
    %274 = tpu.reciprocal %271 {approx = true} : vector<32x1xf32> -> vector<32x1xf32>
    %275 = vector.broadcast %274 : vector<32x1xf32> to vector<32x32xf32>
    %276 = arith.mulf %273, %275 : vector<32x32xf32>
    %277 = arith.truncf %276 : vector<32x32xf32> to vector<32x32xbf16>
    %278 = vector.extract_strided_slice %255 {offsets = [0, 0], sizes = [32, 128], strides = [1, 1]} : vector<128x128xbf16> to vector<32x128xbf16>
    %cst_120 = arith.constant dense<0.000000e+00> : vector<32x128xf32>
    %279 = tpu.matmul %277, %278, %cst_120 {dimension_numbers = #tpu.dot_dimension_numbers<[1], [0], [0], [1], [0, 0, 1, 1], [], []>} : vector<32x32xbf16>, vector<32x128xbf16>, vector<32x128xf32> -> vector<32x128xf32>
    %280 = arith.addf %256, %279 : vector<32x128xf32>
    %281 = vector.extract_strided_slice %253 {offsets = [0, 32], sizes = [32, 32], strides = [1, 1]} : vector<32x384xbf16> to vector<32x32xbf16>
    %282 = vector.extract_strided_slice %253 {offsets = [0, 160], sizes = [32, 32], strides = [1, 1]} : vector<32x384xbf16> to vector<32x32xbf16>
    %283 = vector.extract_strided_slice %253 {offsets = [0, 288], sizes = [32, 32], strides = [1, 1]} : vector<32x384xbf16> to vector<32x32xbf16>
    %cst_121 = arith.constant dense<0.000000e+00> : vector<32x32xf32>
    %284 = tpu.matmul %281, %282, %cst_121 {dimension_numbers = #tpu.dot_dimension_numbers<[1], [1], [0], [0], [0, 0, 1, 0], [], []>} : vector<32x32xbf16>, vector<32x32xbf16>, vector<32x32xf32> -> vector<32x32xf32>
    %cst_122 = arith.constant 0.176776692 : f32
    %285 = vector.broadcast %cst_122 : f32 to vector<32x32xf32>
    %286 = arith.mulf %284, %285 : vector<32x32xf32>
    %287 = vector.broadcast %17 : vector<1x32xf32> to vector<32x32xf32>
    %288 = arith.addf %286, %287 : vector<32x32xf32>
    %cst_123 = arith.constant dense<0xFF800000> : vector<32xf32>
    %289 = vector.multi_reduction <maximumf>, %288, %cst_123 [1] : vector<32x32xf32> to vector<32xf32>
    %290 = vector.shape_cast %289 : vector<32xf32> to vector<32x1xf32>
    %291 = vector.broadcast %290 : vector<32x1xf32> to vector<32x32xf32>
    %292 = arith.subf %288, %291 : vector<32x32xf32>
    %293 = math.exp %292 : vector<32x32xf32>
    %cst_124 = arith.constant dense<0.000000e+00> : vector<32xf32>
    %294 = vector.multi_reduction <add>, %293, %cst_124 [1] : vector<32x32xf32> to vector<32xf32>
    %295 = vector.shape_cast %294 : vector<32xf32> to vector<32x1xf32>
    %296 = arith.truncf %293 : vector<32x32xf32> to vector<32x32xbf16>
    %cst_125 = arith.constant dense<0.000000e+00> : vector<32x32xf32>
    %297 = tpu.matmul %296, %283, %cst_125 {dimension_numbers = #tpu.dot_dimension_numbers<[1], [0], [0], [1], [0, 0, 1, 1], [], []>} : vector<32x32xbf16>, vector<32x32xbf16>, vector<32x32xf32> -> vector<32x32xf32>
    %298 = tpu.reciprocal %295 {approx = true} : vector<32x1xf32> -> vector<32x1xf32>
    %299 = vector.broadcast %298 : vector<32x1xf32> to vector<32x32xf32>
    %300 = arith.mulf %297, %299 : vector<32x32xf32>
    %301 = arith.truncf %300 : vector<32x32xf32> to vector<32x32xbf16>
    %302 = vector.extract_strided_slice %255 {offsets = [32, 0], sizes = [32, 128], strides = [1, 1]} : vector<128x128xbf16> to vector<32x128xbf16>
    %cst_126 = arith.constant dense<0.000000e+00> : vector<32x128xf32>
    %303 = tpu.matmul %301, %302, %cst_126 {dimension_numbers = #tpu.dot_dimension_numbers<[1], [0], [0], [1], [0, 0, 1, 1], [], []>} : vector<32x32xbf16>, vector<32x128xbf16>, vector<32x128xf32> -> vector<32x128xf32>
    %304 = arith.addf %280, %303 : vector<32x128xf32>
    %305 = vector.extract_strided_slice %253 {offsets = [0, 64], sizes = [32, 32], strides = [1, 1]} : vector<32x384xbf16> to vector<32x32xbf16>
    %306 = vector.extract_strided_slice %253 {offsets = [0, 192], sizes = [32, 32], strides = [1, 1]} : vector<32x384xbf16> to vector<32x32xbf16>
    %307 = vector.extract_strided_slice %253 {offsets = [0, 320], sizes = [32, 32], strides = [1, 1]} : vector<32x384xbf16> to vector<32x32xbf16>
    %cst_127 = arith.constant dense<0.000000e+00> : vector<32x32xf32>
    %308 = tpu.matmul %305, %306, %cst_127 {dimension_numbers = #tpu.dot_dimension_numbers<[1], [1], [0], [0], [0, 0, 1, 0], [], []>} : vector<32x32xbf16>, vector<32x32xbf16>, vector<32x32xf32> -> vector<32x32xf32>
    %cst_128 = arith.constant 0.176776692 : f32
    %309 = vector.broadcast %cst_128 : f32 to vector<32x32xf32>
    %310 = arith.mulf %308, %309 : vector<32x32xf32>
    %311 = vector.broadcast %17 : vector<1x32xf32> to vector<32x32xf32>
    %312 = arith.addf %310, %311 : vector<32x32xf32>
    %cst_129 = arith.constant dense<0xFF800000> : vector<32xf32>
    %313 = vector.multi_reduction <maximumf>, %312, %cst_129 [1] : vector<32x32xf32> to vector<32xf32>
    %314 = vector.shape_cast %313 : vector<32xf32> to vector<32x1xf32>
    %315 = vector.broadcast %314 : vector<32x1xf32> to vector<32x32xf32>
    %316 = arith.subf %312, %315 : vector<32x32xf32>
    %317 = math.exp %316 : vector<32x32xf32>
    %cst_130 = arith.constant dense<0.000000e+00> : vector<32xf32>
    %318 = vector.multi_reduction <add>, %317, %cst_130 [1] : vector<32x32xf32> to vector<32xf32>
    %319 = vector.shape_cast %318 : vector<32xf32> to vector<32x1xf32>
    %320 = arith.truncf %317 : vector<32x32xf32> to vector<32x32xbf16>
    %cst_131 = arith.constant dense<0.000000e+00> : vector<32x32xf32>
    %321 = tpu.matmul %320, %307, %cst_131 {dimension_numbers = #tpu.dot_dimension_numbers<[1], [0], [0], [1], [0, 0, 1, 1], [], []>} : vector<32x32xbf16>, vector<32x32xbf16>, vector<32x32xf32> -> vector<32x32xf32>
    %322 = tpu.reciprocal %319 {approx = true} : vector<32x1xf32> -> vector<32x1xf32>
    %323 = vector.broadcast %322 : vector<32x1xf32> to vector<32x32xf32>
    %324 = arith.mulf %321, %323 : vector<32x32xf32>
    %325 = arith.truncf %324 : vector<32x32xf32> to vector<32x32xbf16>
    %326 = vector.extract_strided_slice %255 {offsets = [64, 0], sizes = [32, 128], strides = [1, 1]} : vector<128x128xbf16> to vector<32x128xbf16>
    %cst_132 = arith.constant dense<0.000000e+00> : vector<32x128xf32>
    %327 = tpu.matmul %325, %326, %cst_132 {dimension_numbers = #tpu.dot_dimension_numbers<[1], [0], [0], [1], [0, 0, 1, 1], [], []>} : vector<32x32xbf16>, vector<32x128xbf16>, vector<32x128xf32> -> vector<32x128xf32>
    %328 = arith.addf %304, %327 : vector<32x128xf32>
    %329 = vector.extract_strided_slice %253 {offsets = [0, 96], sizes = [32, 32], strides = [1, 1]} : vector<32x384xbf16> to vector<32x32xbf16>
    %330 = vector.extract_strided_slice %253 {offsets = [0, 224], sizes = [32, 32], strides = [1, 1]} : vector<32x384xbf16> to vector<32x32xbf16>
    %331 = vector.extract_strided_slice %253 {offsets = [0, 352], sizes = [32, 32], strides = [1, 1]} : vector<32x384xbf16> to vector<32x32xbf16>
    %cst_133 = arith.constant dense<0.000000e+00> : vector<32x32xf32>
    %332 = tpu.matmul %329, %330, %cst_133 {dimension_numbers = #tpu.dot_dimension_numbers<[1], [1], [0], [0], [0, 0, 1, 0], [], []>} : vector<32x32xbf16>, vector<32x32xbf16>, vector<32x32xf32> -> vector<32x32xf32>
    %cst_134 = arith.constant 0.176776692 : f32
    %333 = vector.broadcast %cst_134 : f32 to vector<32x32xf32>
    %334 = arith.mulf %332, %333 : vector<32x32xf32>
    %335 = vector.broadcast %17 : vector<1x32xf32> to vector<32x32xf32>
    %336 = arith.addf %334, %335 : vector<32x32xf32>
    %cst_135 = arith.constant dense<0xFF800000> : vector<32xf32>
    %337 = vector.multi_reduction <maximumf>, %336, %cst_135 [1] : vector<32x32xf32> to vector<32xf32>
    %338 = vector.shape_cast %337 : vector<32xf32> to vector<32x1xf32>
    %339 = vector.broadcast %338 : vector<32x1xf32> to vector<32x32xf32>
    %340 = arith.subf %336, %339 : vector<32x32xf32>
    %341 = math.exp %340 : vector<32x32xf32>
    %cst_136 = arith.constant dense<0.000000e+00> : vector<32xf32>
    %342 = vector.multi_reduction <add>, %341, %cst_136 [1] : vector<32x32xf32> to vector<32xf32>
    %343 = vector.shape_cast %342 : vector<32xf32> to vector<32x1xf32>
    %344 = arith.truncf %341 : vector<32x32xf32> to vector<32x32xbf16>
    %cst_137 = arith.constant dense<0.000000e+00> : vector<32x32xf32>
    %345 = tpu.matmul %344, %331, %cst_137 {dimension_numbers = #tpu.dot_dimension_numbers<[1], [0], [0], [1], [0, 0, 1, 1], [], []>} : vector<32x32xbf16>, vector<32x32xbf16>, vector<32x32xf32> -> vector<32x32xf32>
    %346 = tpu.reciprocal %343 {approx = true} : vector<32x1xf32> -> vector<32x1xf32>
    %347 = vector.broadcast %346 : vector<32x1xf32> to vector<32x32xf32>
    %348 = arith.mulf %345, %347 : vector<32x32xf32>
    %349 = arith.truncf %348 : vector<32x32xf32> to vector<32x32xbf16>
    %350 = vector.extract_strided_slice %255 {offsets = [96, 0], sizes = [32, 128], strides = [1, 1]} : vector<128x128xbf16> to vector<32x128xbf16>
    %cst_138 = arith.constant dense<0.000000e+00> : vector<32x128xf32>
    %351 = tpu.matmul %349, %350, %cst_138 {dimension_numbers = #tpu.dot_dimension_numbers<[1], [0], [0], [1], [0, 0, 1, 1], [], []>} : vector<32x32xbf16>, vector<32x128xbf16>, vector<32x128xf32> -> vector<32x128xf32>
    %352 = arith.addf %328, %351 : vector<32x128xf32>
    %353 = arith.addf %216, %352 : vector<32x128xf32>
    %c1_139 = arith.constant 1 : index
    %c0_140 = arith.constant 0 : index
    %c0_141 = arith.constant 0 : index
    %354 = vector.load %arg11[%c1_139, %c0_140, %c0_141] : memref<2x1x128xf32, #tpu.memory_space<vmem>>, vector<1x1x128xf32>
    %355 = vector.shape_cast %354 : vector<1x1x128xf32> to vector<1x128xf32>
    %356 = vector.broadcast %355 : vector<1x128xf32> to vector<32x128xf32>
    %357 = arith.addf %353, %356 : vector<32x128xf32>
    %c1_142 = arith.constant 1 : index
    %c0_143 = arith.constant 0 : index
    %c0_144 = arith.constant 0 : index
    %358 = vector.load %arg12[%c1_142, %c0_143, %c0_144] : memref<2x1x128xf32, #tpu.memory_space<vmem>>, vector<1x1x128xf32>
    %359 = vector.shape_cast %358 : vector<1x1x128xf32> to vector<1x128xf32>
    %c1_145 = arith.constant 1 : index
    %c0_146 = arith.constant 0 : index
    %c0_147 = arith.constant 0 : index
    %360 = vector.load %arg13[%c1_145, %c0_146, %c0_147] : memref<2x1x128xf32, #tpu.memory_space<vmem>>, vector<1x1x128xf32>
    %361 = vector.shape_cast %360 : vector<1x1x128xf32> to vector<1x128xf32>
    %cst_148 = arith.constant dense<0.000000e+00> : vector<32xf32>
    %362 = vector.multi_reduction <add>, %357, %cst_148 [1] : vector<32x128xf32> to vector<32xf32>
    %363 = vector.shape_cast %362 : vector<32xf32> to vector<32x1xf32>
    %cst_149 = arith.constant 1.280000e+02 : f32
    %364 = vector.broadcast %cst_149 : f32 to vector<32x1xf32>
    %365 = arith.divf %363, %364 : vector<32x1xf32>
    %366 = arith.mulf %357, %357 : vector<32x128xf32>
    %cst_150 = arith.constant dense<0.000000e+00> : vector<32xf32>
    %367 = vector.multi_reduction <add>, %366, %cst_150 [1] : vector<32x128xf32> to vector<32xf32>
    %368 = vector.shape_cast %367 : vector<32xf32> to vector<32x1xf32>
    %cst_151 = arith.constant 1.280000e+02 : f32
    %369 = vector.broadcast %cst_151 : f32 to vector<32x1xf32>
    %370 = arith.divf %368, %369 : vector<32x1xf32>
    %371 = arith.mulf %365, %365 : vector<32x1xf32>
    %372 = arith.subf %370, %371 : vector<32x1xf32>
    %cst_152 = arith.constant 0.000000e+00 : f32
    %373 = vector.broadcast %cst_152 : f32 to vector<32x1xf32>
    %374 = arith.maximumf %372, %373 : vector<32x1xf32>
    %375 = vector.broadcast %365 : vector<32x1xf32> to vector<32x128xf32>
    %376 = arith.subf %357, %375 : vector<32x128xf32>
    %cst_153 = arith.constant 9.99999997E-7 : f32
    %377 = vector.broadcast %cst_153 : f32 to vector<32x1xf32>
    %378 = arith.addf %374, %377 : vector<32x1xf32>
    %379 = math.rsqrt %378 : vector<32x1xf32>
    %380 = vector.broadcast %379 : vector<32x1xf32> to vector<32x128xf32>
    %381 = arith.mulf %376, %380 : vector<32x128xf32>
    %382 = vector.broadcast %359 : vector<1x128xf32> to vector<32x128xf32>
    %383 = arith.mulf %381, %382 : vector<32x128xf32>
    %384 = vector.broadcast %361 : vector<1x128xf32> to vector<32x128xf32>
    %385 = arith.addf %383, %384 : vector<32x128xf32>
    %386 = arith.truncf %385 : vector<32x128xf32> to vector<32x128xbf16>
    %c1_154 = arith.constant 1 : index
    %c0_155 = arith.constant 0 : index
    %c0_156 = arith.constant 0 : index
    %387 = vector.load %arg14[%c1_154, %c0_155, %c0_156] : memref<2x128x512xbf16, #tpu.memory_space<vmem>>, vector<1x128x512xbf16>
    %388 = vector.shape_cast %387 : vector<1x128x512xbf16> to vector<128x512xbf16>
    %cst_157 = arith.constant dense<0.000000e+00> : vector<32x512xf32>
    %389 = tpu.matmul %386, %388, %cst_157 {dimension_numbers = #tpu.dot_dimension_numbers<[1], [0], [0], [1], [0, 0, 1, 1], [], []>} : vector<32x128xbf16>, vector<128x512xbf16>, vector<32x512xf32> -> vector<32x512xf32>
    %c1_158 = arith.constant 1 : index
    %c0_159 = arith.constant 0 : index
    %c0_160 = arith.constant 0 : index
    %390 = vector.load %arg15[%c1_158, %c0_159, %c0_160] : memref<2x1x512xf32, #tpu.memory_space<vmem>>, vector<1x1x512xf32>
    %391 = vector.shape_cast %390 : vector<1x1x512xf32> to vector<1x512xf32>
    %392 = vector.broadcast %391 : vector<1x512xf32> to vector<32x512xf32>
    %393 = arith.addf %389, %392 : vector<32x512xf32>
    %394 = arith.mulf %393, %393 : vector<32x512xf32>
    %395 = arith.mulf %393, %394 : vector<32x512xf32>
    %cst_161 = arith.constant 4.471500e-02 : f32
    %396 = vector.broadcast %cst_161 : f32 to vector<32x512xf32>
    %397 = arith.mulf %396, %395 : vector<32x512xf32>
    %398 = arith.addf %393, %397 : vector<32x512xf32>
    %cst_162 = arith.constant 0.797884583 : f32
    %399 = vector.broadcast %cst_162 : f32 to vector<32x512xf32>
    %400 = arith.mulf %399, %398 : vector<32x512xf32>
    %401 = math.tanh %400 : vector<32x512xf32>
    %cst_163 = arith.constant 1.000000e+00 : f32
    %402 = vector.broadcast %cst_163 : f32 to vector<32x512xf32>
    %403 = arith.addf %402, %401 : vector<32x512xf32>
    %cst_164 = arith.constant 5.000000e-01 : f32
    %404 = vector.broadcast %cst_164 : f32 to vector<32x512xf32>
    %405 = arith.mulf %404, %403 : vector<32x512xf32>
    %406 = arith.mulf %393, %405 : vector<32x512xf32>
    %407 = arith.truncf %406 : vector<32x512xf32> to vector<32x512xbf16>
    %c1_165 = arith.constant 1 : index
    %c0_166 = arith.constant 0 : index
    %c0_167 = arith.constant 0 : index
    %408 = vector.load %arg16[%c1_165, %c0_166, %c0_167] : memref<2x512x128xbf16, #tpu.memory_space<vmem>>, vector<1x512x128xbf16>
    %409 = vector.shape_cast %408 : vector<1x512x128xbf16> to vector<512x128xbf16>
    %cst_168 = arith.constant dense<0.000000e+00> : vector<32x128xf32>
    %410 = tpu.matmul %407, %409, %cst_168 {dimension_numbers = #tpu.dot_dimension_numbers<[1], [0], [0], [1], [0, 0, 1, 1], [], []>} : vector<32x512xbf16>, vector<512x128xbf16>, vector<32x128xf32> -> vector<32x128xf32>
    %c1_169 = arith.constant 1 : index
    %c0_170 = arith.constant 0 : index
    %c0_171 = arith.constant 0 : index
    %411 = vector.load %arg17[%c1_169, %c0_170, %c0_171] : memref<2x1x128xf32, #tpu.memory_space<vmem>>, vector<1x1x128xf32>
    %412 = vector.shape_cast %411 : vector<1x1x128xf32> to vector<1x128xf32>
    %413 = vector.broadcast %412 : vector<1x128xf32> to vector<32x128xf32>
    %414 = arith.addf %410, %413 : vector<32x128xf32>
    %415 = arith.addf %357, %414 : vector<32x128xf32>
    %c0_172 = arith.constant 0 : index
    %c0_173 = arith.constant 0 : index
    %416 = vector.load %arg18[%c0_172, %c0_173] : memref<1x128xf32, #tpu.memory_space<vmem>>, vector<1x128xf32>
    %c0_174 = arith.constant 0 : index
    %c0_175 = arith.constant 0 : index
    %417 = vector.load %arg19[%c0_174, %c0_175] : memref<1x128xf32, #tpu.memory_space<vmem>>, vector<1x128xf32>
    %cst_176 = arith.constant dense<0.000000e+00> : vector<32xf32>
    %418 = vector.multi_reduction <add>, %415, %cst_176 [1] : vector<32x128xf32> to vector<32xf32>
    %419 = vector.shape_cast %418 : vector<32xf32> to vector<32x1xf32>
    %cst_177 = arith.constant 1.280000e+02 : f32
    %420 = vector.broadcast %cst_177 : f32 to vector<32x1xf32>
    %421 = arith.divf %419, %420 : vector<32x1xf32>
    %422 = arith.mulf %415, %415 : vector<32x128xf32>
    %cst_178 = arith.constant dense<0.000000e+00> : vector<32xf32>
    %423 = vector.multi_reduction <add>, %422, %cst_178 [1] : vector<32x128xf32> to vector<32xf32>
    %424 = vector.shape_cast %423 : vector<32xf32> to vector<32x1xf32>
    %cst_179 = arith.constant 1.280000e+02 : f32
    %425 = vector.broadcast %cst_179 : f32 to vector<32x1xf32>
    %426 = arith.divf %424, %425 : vector<32x1xf32>
    %427 = arith.mulf %421, %421 : vector<32x1xf32>
    %428 = arith.subf %426, %427 : vector<32x1xf32>
    %cst_180 = arith.constant 0.000000e+00 : f32
    %429 = vector.broadcast %cst_180 : f32 to vector<32x1xf32>
    %430 = arith.maximumf %428, %429 : vector<32x1xf32>
    %431 = vector.broadcast %421 : vector<32x1xf32> to vector<32x128xf32>
    %432 = arith.subf %415, %431 : vector<32x128xf32>
    %cst_181 = arith.constant 9.99999997E-7 : f32
    %433 = vector.broadcast %cst_181 : f32 to vector<32x1xf32>
    %434 = arith.addf %430, %433 : vector<32x1xf32>
    %435 = math.rsqrt %434 : vector<32x1xf32>
    %436 = vector.broadcast %435 : vector<32x1xf32> to vector<32x128xf32>
    %437 = arith.mulf %432, %436 : vector<32x128xf32>
    %438 = vector.broadcast %416 : vector<1x128xf32> to vector<32x128xf32>
    %439 = arith.mulf %437, %438 : vector<32x128xf32>
    %440 = vector.broadcast %417 : vector<1x128xf32> to vector<32x128xf32>
    %441 = arith.addf %439, %440 : vector<32x128xf32>
    %442 = vector.shape_cast %441 : vector<32x128xf32> to vector<1x32x128xf32>
    %c0_182 = arith.constant 0 : index
    %c0_183 = arith.constant 0 : index
    %c0_184 = arith.constant 0 : index
    %443 = vector.load %arg20[%c0_182, %c0_183, %c0_184] : memref<1x32x128xf32, #tpu.memory_space<vmem>>, vector<1x32x128xf32>
    tpu.vector_store %arg20[%c0_182, %c0_183, %c0_184], %442 {strides = array<i32>} : memref<1x32x128xf32, #tpu.memory_space<vmem>>, vector<1x32x128xf32>,
    return
  }
  func.func @transform_0(%arg0: i32) -> (i32, i32, i32) {
    %c0_i32 = arith.constant 0 : i32
    %c0_i32_0 = arith.constant 0 : i32
    %c0_i32_1 = arith.constant 0 : i32
    return %arg0, %c0_i32, %c0_i32_0 : i32, i32, i32
  }
  func.func @transform_1(%arg0: i32) -> (i32, i32) {
    %c0_i32 = arith.constant 0 : i32
    %c0_i32_0 = arith.constant 0 : i32
    %c0_i32_1 = arith.constant 0 : i32
    return %c0_i32, %c0_i32_0 : i32, i32
  }
  func.func @transform_2(%arg0: i32) -> (i32, i32) {
    %c0_i32 = arith.constant 0 : i32
    %c0_i32_0 = arith.constant 0 : i32
    %c0_i32_1 = arith.constant 0 : i32
    return %c0_i32, %c0_i32_0 : i32, i32
  }
  func.func @transform_3(%arg0: i32) -> (i32, i32) {
    %c0_i32 = arith.constant 0 : i32
    %c0_i32_0 = arith.constant 0 : i32
    %c0_i32_1 = arith.constant 0 : i32
    return %c0_i32, %c0_i32_0 : i32, i32
  }
  func.func @transform_4(%arg0: i32) -> (i32, i32) {
    %c0_i32 = arith.constant 0 : i32
    %c0_i32_0 = arith.constant 0 : i32
    %c0_i32_1 = arith.constant 0 : i32
    return %c0_i32, %c0_i32_0 : i32, i32
  }
  func.func @transform_5(%arg0: i32) -> (i32, i32, i32) {
    %c0_i32 = arith.constant 0 : i32
    %c0_i32_0 = arith.constant 0 : i32
    %c0_i32_1 = arith.constant 0 : i32
    %c0_i32_2 = arith.constant 0 : i32
    return %c0_i32, %c0_i32_0, %c0_i32_1 : i32, i32, i32
  }
  func.func @transform_6(%arg0: i32) -> (i32, i32, i32) {
    %c0_i32 = arith.constant 0 : i32
    %c0_i32_0 = arith.constant 0 : i32
    %c0_i32_1 = arith.constant 0 : i32
    %c0_i32_2 = arith.constant 0 : i32
    return %c0_i32, %c0_i32_0, %c0_i32_1 : i32, i32, i32
  }
  func.func @transform_7(%arg0: i32) -> (i32, i32, i32) {
    %c0_i32 = arith.constant 0 : i32
    %c0_i32_0 = arith.constant 0 : i32
    %c0_i32_1 = arith.constant 0 : i32
    %c0_i32_2 = arith.constant 0 : i32
    return %c0_i32, %c0_i32_0, %c0_i32_1 : i32, i32, i32
  }
  func.func @transform_8(%arg0: i32) -> (i32, i32, i32) {
    %c0_i32 = arith.constant 0 : i32
    %c0_i32_0 = arith.constant 0 : i32
    %c0_i32_1 = arith.constant 0 : i32
    %c0_i32_2 = arith.constant 0 : i32
    return %c0_i32, %c0_i32_0, %c0_i32_1 : i32, i32, i32
  }
  func.func @transform_9(%arg0: i32) -> (i32, i32, i32) {
    %c0_i32 = arith.constant 0 : i32
    %c0_i32_0 = arith.constant 0 : i32
    %c0_i32_1 = arith.constant 0 : i32
    %c0_i32_2 = arith.constant 0 : i32
    return %c0_i32, %c0_i32_0, %c0_i32_1 : i32, i32, i32
  }
  func.func @transform_10(%arg0: i32) -> (i32, i32, i32) {
    %c0_i32 = arith.constant 0 : i32
    %c0_i32_0 = arith.constant 0 : i32
    %c0_i32_1 = arith.constant 0 : i32
    %c0_i32_2 = arith.constant 0 : i32
    return %c0_i32, %c0_i32_0, %c0_i32_1 : i32, i32, i32
  }
  func.func @transform_11(%arg0: i32) -> (i32, i32, i32) {
    %c0_i32 = arith.constant 0 : i32
    %c0_i32_0 = arith.constant 0 : i32
    %c0_i32_1 = arith.constant 0 : i32
    %c0_i32_2 = arith.constant 0 : i32
    return %c0_i32, %c0_i32_0, %c0_i32_1 : i32, i32, i32
  }
  func.func @transform_12(%arg0: i32) -> (i32, i32, i32) {
    %c0_i32 = arith.constant 0 : i32
    %c0_i32_0 = arith.constant 0 : i32
    %c0_i32_1 = arith.constant 0 : i32
    %c0_i32_2 = arith.constant 0 : i32
    return %c0_i32, %c0_i32_0, %c0_i32_1 : i32, i32, i32
  }
  func.func @transform_13(%arg0: i32) -> (i32, i32, i32) {
    %c0_i32 = arith.constant 0 : i32
    %c0_i32_0 = arith.constant 0 : i32
    %c0_i32_1 = arith.constant 0 : i32
    %c0_i32_2 = arith.constant 0 : i32
    return %c0_i32, %c0_i32_0, %c0_i32_1 : i32, i32, i32
  }
  func.func @transform_14(%arg0: i32) -> (i32, i32, i32) {
    %c0_i32 = arith.constant 0 : i32
    %c0_i32_0 = arith.constant 0 : i32
    %c0_i32_1 = arith.constant 0 : i32
    %c0_i32_2 = arith.constant 0 : i32
    return %c0_i32, %c0_i32_0, %c0_i32_1 : i32, i32, i32
  }
  func.func @transform_15(%arg0: i32) -> (i32, i32, i32) {
    %c0_i32 = arith.constant 0 : i32
    %c0_i32_0 = arith.constant 0 : i32
    %c0_i32_1 = arith.constant 0 : i32
    %c0_i32_2 = arith.constant 0 : i32
    return %c0_i32, %c0_i32_0, %c0_i32_1 : i32, i32, i32
  }
  func.func @transform_16(%arg0: i32) -> (i32, i32, i32) {
    %c0_i32 = arith.constant 0 : i32
    %c0_i32_0 = arith.constant 0 : i32
    %c0_i32_1 = arith.constant 0 : i32
    %c0_i32_2 = arith.constant 0 : i32
    return %c0_i32, %c0_i32_0, %c0_i32_1 : i32, i32, i32
  }
  func.func @transform_17(%arg0: i32) -> (i32, i32) {
    %c0_i32 = arith.constant 0 : i32
    %c0_i32_0 = arith.constant 0 : i32
    %c0_i32_1 = arith.constant 0 : i32
    return %c0_i32, %c0_i32_0 : i32, i32
  }
  func.func @transform_18(%arg0: i32) -> (i32, i32) {
    %c0_i32 = arith.constant 0 : i32
    %c0_i32_0 = arith.constant 0 : i32
    %c0_i32_1 = arith.constant 0 : i32
    return %c0_i32, %c0_i32_0 : i32, i32
  }
  func.func @transform_19(%arg0: i32) -> (i32, i32, i32) {
    %c0_i32 = arith.constant 0 : i32
    %c0_i32_0 = arith.constant 0 : i32
    %c0_i32_1 = arith.constant 0 : i32
    return %arg0, %c0_i32, %c0_i32_0 : i32, i32, i32
  }
}

</mosaic_0001>

<llo_original>
// kernel: mul.15
$region0: #{mul.15}
  %s0 = inlined_call_operand.vmem [shape: f32[4,4], index: 0, kind: input, shape index: {}]
  %s1 = inlined_call_operand.vmem [shape: f32[16], index: 1, kind: output, shape index: {}]
  $region1: #{mul.15} parent=0
    #allocation0 [shape = 'u8[4096]{0}', space=vmem, size = 0x1000, scoped, tag = 'scoped mem for output reshape']
    #allocation1 [shape = 'u8[4096]{0}', space=vmem, size = 0x1000, scoped, tag = 'scoped mem for input reshape']
    %s3 = sshllo.u32 0, 4
    %v4 = vld [vmem:[%s0] sm:%s3]
    %5 = vst [vmem:[#allocation1] sm:%s3] %v4
    %v6 = vld [vmem:[#allocation1] sm:$0x1]
    %vm7 = vcmask 31744
    %8 = vst.msk [vmem:[#allocation0] sm:$0x1] %vm7, %v6
    %s9 = scalar_lea.vmem [#allocation1], 3
    %v10 = vld [vmem:[%s9] sm:$0x1]
    %11 = vrot.lane.b32.xlu0 %v10, 12
    %v12 = vpop.permute.xlu0 %11
    %vm13 = vcmask 130144
    %14 = vst.msk [vmem:[#allocation0] sm:$0x1] %vm13, %v12
    %s15 = scalar_lea.vmem [#allocation1], 2
    %v16 = vld [vmem:[%s15] sm:$0x1]
    %17 = vrot.lane.b32.xlu0 %v16, 8
    %v18 = vpop.permute.xlu0 %17
    %vm19 = vcmask 97344
    %20 = vst.msk [vmem:[#allocation0] sm:$0x1] %vm19, %v18
    %s21 = scalar_lea.vmem [#allocation1], 1
    %v22 = vld [vmem:[%s21] sm:$0x1]
    %23 = vrot.lane.b32.xlu0 %v22, 4
    %v24 = vpop.permute.xlu0 %23
    %vm25 = vcmask 64544
    %26 = vst.msk [vmem:[#allocation0] sm:$0x1] %vm25, %v24
    %s28 = sshllo.u32 0, 1
    %v30 = vld [vmem:[#allocation0] sm:%s28]
    %s31 = sshllo.u32 0, 1
    %32 = vst [vmem:[%s1] sm:%s31] %v30

// kernel: sat_img_encoder_forward.1
$region0: #{sat_img_encoder_forward.1}
  #allocation0 [shape = 'u32[]', space=smem, size = 0x4, offset = 0x4, fixed_abs, tag = 'smem constant byte address 0x4 - core index']
  #allocation1 [shape = 'u32[144,128]{1,0:T(1,128)}', space=vmem, size = 0x12000, scoped, tag = 'internal scratch']
  %s0 = inlined_call_operand.vmem [shape: bf16[2,16,192], index: 0, kind: input, shape index: {}]
  %s1 = inlined_call_operand.vmem [shape: bf16[192,128], index: 1, kind: input, shape index: {}]
  %s2 = inlined_call_operand.vmem [shape: f32[1,128], index: 2, kind: input, shape index: {}]
  %s3 = inlined_call_operand.vmem [shape: f32[16,128], index: 3, kind: input, shape index: {}]
  %s4 = inlined_call_operand.vmem [shape: f32[1,128], index: 4, kind: input, shape index: {}]
  %s5 = inlined_call_operand.vmem [shape: f32[2,1,128], index: 5, kind: input, shape index: {}]
  %s6 = inlined_call_operand.vmem [shape: f32[2,1,128], index: 6, kind: input, shape index: {}]
  %s7 = inlined_call_operand.vmem [shape: bf16[2,128,384], index: 7, kind: input, shape index: {}]
  %s8 = inlined_call_operand.vmem [shape: f32[2,1,384], index: 8, kind: input, shape index: {}]
  %s9 = inlined_call_operand.vmem [shape: bf16[2,128,128], index: 9, kind: input, shape index: {}]
  %s10 = inlined_call_operand.vmem [shape: f32[2,1,128], index: 10, kind: input, shape index: {}]
  %s11 = inlined_call_operand.vmem [shape: f32[2,1,128], index: 11, kind: input, shape index: {}]
  %s12 = inlined_call_operand.vmem [shape: f32[2,1,128], index: 12, kind: input, shape index: {}]
  %s13 = inlined_call_operand.vmem [shape: bf16[2,128,512], index: 13, kind: input, shape index: {}]
  %s14 = inlined_call_operand.vmem [shape: f32[2,1,512], index: 14, kind: input, shape index: {}]
  %s15 = inlined_call_operand.vmem [shape: bf16[2,512,128], index: 15, kind: input, shape index: {}]
  %s16 = inlined_call_operand.vmem [shape: f32[2,1,128], index: 16, kind: input, shape index: {}]
  %s17 = inlined_call_operand.vmem [shape: f32[1,128], index: 17, kind: input, shape index: {}]
  %s18 = inlined_call_operand.vmem [shape: f32[1,128], index: 18, kind: input, shape index: {}]
  %s19 = inlined_call_operand.vmem [shape: f32[2,32,128], index: 19, kind: output, shape index: {}]
  %s20 = sld [smem:[#allocation0]]
  $region109: #{sat_img_encoder_forward.1} parent=0
    _
  %s22 = ssub.s32 1, %s20
  %s23 = scalar_select 0, %s22, %s20
  loop: start=0, step=1, limit=4
  $region2: #{sat_img_encoder_forward.1} parent=0 // loop_pre_header
    _
  $region3: #{sat_img_encoder_forward.1} parent=0 // loop_header
    %s25 = sphi 0, %s29
    %p26 = scmp.ge.s32.totalorder %s25, 4
    %s35 = sphi 0, %s37
    %s38 = sphi 0, %s35
    %s39 = sphi 0, %s38
    %s55 = sphi 0, %s39
    %s59 = sphi 0, %s59
    %s61 = sphi 0, %s59
    %s62 = sphi 0, %s61
    %s76 = sphi 0, %s62
    %s80 = sphi 0, %s80
    %s82 = sphi 0, %s80
    %s83 = sphi 0, %s82
    %s97 = sphi 0, %s83
    %s101 = sphi 0, %s101
    %s103 = sphi 0, %s101
    %s104 = sphi 0, %s103
    %s118 = sphi 0, %s104
    %s122 = sphi 0, %s122
    %s124 = sphi 0, %s122
    %s125 = sphi 0, %s124
    %s139 = sphi 0, %s125
    %s143 = sphi 0, %s143
    %s145 = sphi 0, %s143
    %s146 = sphi 0, %s145
    %s160 = sphi 0, %s146
    %s164 = sphi 0, %s164
    %s166 = sphi 0, %s164
    %s167 = sphi 0, %s166
    %s181 = sphi 0, %s167
    %s185 = sphi 0, %s185
    %s187 = sphi 0, %s185
    %s188 = sphi 0, %s187
    %s202 = sphi 0, %s188
    %s206 = sphi 0, %s206
    %s208 = sphi 0, %s206
    %s209 = sphi 0, %s208
    %s223 = sphi 0, %s209
    %s227 = sphi 0, %s227
    %s229 = sphi 0, %s227
    %s230 = sphi 0, %s229
    %s244 = sphi 0, %s230
    %s248 = sphi 0, %s248
    %s250 = sphi 0, %s248
    %s251 = sphi 0, %s250
    %s265 = sphi 0, %s251
    %s269 = sphi 0, %s269
    %s271 = sphi 0, %s269
    %s272 = sphi 0, %s271
    %s286 = sphi 0, %s272
    %s290 = sphi 0, %s290
    %s292 = sphi 0, %s290
    %s293 = sphi 0, %s292
    %s307 = sphi 0, %s293
    %s311 = sphi 0, %s311
    %s313 = sphi 0, %s311
    %s314 = sphi 0, %s313
    %s328 = sphi 0, %s314
    %s332 = sphi 0, %s332
    %s334 = sphi 0, %s332
    %s335 = sphi 0, %s334
    %s349 = sphi 0, %s335
    %s353 = sphi 0, %s353
    %s355 = sphi 0, %s353
    %s356 = sphi 0, %s355
    %s370 = sphi 0, %s356
    %s374 = sphi 0, %s374
    %s376 = sphi 0, %s374
    %s377 = sphi 0, %s376
    %s391 = sphi 0, %s377
    %s395 = sphi 0, %s395
    %s397 = sphi 0, %s395
    %s398 = sphi 0, %s397
    %s412 = sphi 0, %s398
    %s416 = sphi 0, %s416
    %s418 = sphi 0, %s416
    %s419 = sphi 0, %s418
    %s433 = sphi 0, %s419
    %s439 = sphi 0, %s441
    %s442 = sphi 0, %s439
    %s443 = sphi 0, %s442
    %s459 = sphi 0, %s443
  $region4: #{sat_img_encoder_forward.1} parent=0 // loop_header_branch
    %28 = sbr.rel (%p26) target = $region8
  $region5: #{sat_img_encoder_forward.1} parent=0 // loop_body
    %s30 = ssub.s32 %s25, 1
    %s31 = ssub.s32 %s25, 2
    %s32 = sadd.s32 %s25, 1
    %s33 = ssub.s32 %s25, %s32
    %p34 = scmp.eq.s32.totalorder %s33, 0
    %s36 = sadd.s32 %s35, 1
    %s37 = scalar_select %p34, %s35, %s36
    %p40 = pneg %p34
    %p41 = scmp.eq.s32.totalorder %s25, 1
    %p42 = por %p40, %p41
    %p43 = scmp.ne.s32.totalorder %s35, %s38
    %p44 = scmp.eq.s32.totalorder %s25, 0
    %p45 = por %p43, %p44
    %p46 = scmp.ne.s32.totalorder %s35, %s38
    %p47 = scmp.eq.s32.totalorder %s30, 1
    %p48 = por %p46, %p47
    %p49 = scmp.ne.s32.totalorder %s38, %s39
    %p50 = scmp.eq.s32.totalorder %s30, 0
    %p51 = por %p49, %p50
    %p52 = scmp.ne.s32.totalorder %s38, %s39
    %p53 = scmp.eq.s32.totalorder %s31, 1
    %p54 = por %p52, %p53
    %p56 = scmp.ne.s32.totalorder %s39, %s55
    %p57 = scmp.eq.s32.totalorder %s31, 0
    %p58 = por %p56, %p57
    %s60 = sadd.s32 %s59, 1
    %p63 = scmp.eq.s32.totalorder %s25, 1
    %p64 = scmp.ne.s32.totalorder %s59, %s61
    %p65 = scmp.eq.s32.totalorder %s25, 0
    %p66 = por %p64, %p65
    %p67 = scmp.ne.s32.totalorder %s59, %s61
    %p68 = scmp.eq.s32.totalorder %s30, 1
    %p69 = por %p67, %p68
    %p70 = scmp.ne.s32.totalorder %s61, %s62
    %p71 = scmp.eq.s32.totalorder %s30, 0
    %p72 = por %p70, %p71
    %p73 = scmp.ne.s32.totalorder %s61, %s62
    %p74 = scmp.eq.s32.totalorder %s31, 1
    %p75 = por %p73, %p74
    %p77 = scmp.ne.s32.totalorder %s62, %s76
    %p78 = scmp.eq.s32.totalorder %s31, 0
    %p79 = por %p77, %p78
    %s81 = sadd.s32 %s80, 1
    %p84 = scmp.eq.s32.totalorder %s25, 1
    %p85 = scmp.ne.s32.totalorder %s80, %s82
    %p86 = scmp.eq.s32.totalorder %s25, 0
    %p87 = por %p85, %p86
    %p88 = scmp.ne.s32.totalorder %s80, %s82
    %p89 = scmp.eq.s32.totalorder %s30, 1
    %p90 = por %p88, %p89
    %p91 = scmp.ne.s32.totalorder %s82, %s83
    %p92 = scmp.eq.s32.totalorder %s30, 0
    %p93 = por %p91, %p92
    %p94 = scmp.ne.s32.totalorder %s82, %s83
    %p95 = scmp.eq.s32.totalorder %s31, 1
    %p96 = por %p94, %p95
    %p98 = scmp.ne.s32.totalorder %s83, %s97
    %p99 = scmp.eq.s32.totalorder %s31, 0
    %p100 = por %p98, %p99
    %s102 = sadd.s32 %s101, 1
    %p105 = scmp.eq.s32.totalorder %s25, 1
    %p106 = scmp.ne.s32.totalorder %s101, %s103
    %p107 = scmp.eq.s32.totalorder %s25, 0
    %p108 = por %p106, %p107
    %p109 = scmp.ne.s32.totalorder %s101, %s103
    %p110 = scmp.eq.s32.totalorder %s30, 1
    %p111 = por %p109, %p110
    %p112 = scmp.ne.s32.totalorder %s103, %s104
    %p113 = scmp.eq.s32.totalorder %s30, 0
    %p114 = por %p112, %p113
    %p115 = scmp.ne.s32.totalorder %s103, %s104
    %p116 = scmp.eq.s32.totalorder %s31, 1
    %p117 = por %p115, %p116
    %p119 = scmp.ne.s32.totalorder %s104, %s118
    %p120 = scmp.eq.s32.totalorder %s31, 0
    %p121 = por %p119, %p120
    %s123 = sadd.s32 %s122, 1
    %p126 = scmp.eq.s32.totalorder %s25, 1
    %p127 = scmp.ne.s32.totalorder %s122, %s124
    %p128 = scmp.eq.s32.totalorder %s25, 0
    %p129 = por %p127, %p128
    %p130 = scmp.ne.s32.totalorder %s122, %s124
    %p131 = scmp.eq.s32.totalorder %s30, 1
    %p132 = por %p130, %p131
    %p133 = scmp.ne.s32.totalorder %s124, %s125
    %p134 = scmp.eq.s32.totalorder %s30, 0
    %p135 = por %p133, %p134
    %p136 = scmp.ne.s32.totalorder %s124, %s125
    %p137 = scmp.eq.s32.totalorder %s31, 1
    %p138 = por %p136, %p137
    %p140 = scmp.ne.s32.totalorder %s125, %s139
    %p141 = scmp.eq.s32.totalorder %s31, 0
    %p142 = por %p140, %p141
    %s144 = sadd.s32 %s143, 1
    %p147 = scmp.eq.s32.totalorder %s25, 1
    %p148 = scmp.ne.s32.totalorder %s143, %s145
    %p149 = scmp.eq.s32.totalorder %s25, 0
    %p150 = por %p148, %p149
    %p151 = scmp.ne.s32.totalorder %s143, %s145
    %p152 = scmp.eq.s32.totalorder %s30, 1
    %p153 = por %p151, %p152
    %p154 = scmp.ne.s32.totalorder %s145, %s146
    %p155 = scmp.eq.s32.totalorder %s30, 0
    %p156 = por %p154, %p155
    %p157 = scmp.ne.s32.totalorder %s145, %s146
    %p158 = scmp.eq.s32.totalorder %s31, 1
    %p159 = por %p157, %p158
    %p161 = scmp.ne.s32.totalorder %s146, %s160
    %p162 = scmp.eq.s32.totalorder %s31, 0
    %p163 = por %p161, %p162
    %s165 = sadd.s32 %s164, 1
    %p168 = scmp.eq.s32.totalorder %s25, 1
    %p169 = scmp.ne.s32.totalorder %s164, %s166
    %p170 = scmp.eq.s32.totalorder %s25, 0
    %p171 = por %p169, %p170
    %p172 = scmp.ne.s32.totalorder %s164, %s166
    %p173 = scmp.eq.s32.totalorder %s30, 1
    %p174 = por %p172, %p173
    %p175 = scmp.ne.s32.totalorder %s166, %s167
    %p176 = scmp.eq.s32.totalorder %s30, 0
    %p177 = por %p175, %p176
    %p178 = scmp.ne.s32.totalorder %s166, %s167
    %p179 = scmp.eq.s32.totalorder %s31, 1
    %p180 = por %p178, %p179
    %p182 = scmp.ne.s32.totalorder %s167, %s181
    %p183 = scmp.eq.s32.totalorder %s31, 0
    %p184 = por %p182, %p183
    %s186 = sadd.s32 %s185, 1
    %p189 = scmp.eq.s32.totalorder %s25, 1
    %p190 = scmp.ne.s32.totalorder %s185, %s187
    %p191 = scmp.eq.s32.totalorder %s25, 0
    %p192 = por %p190, %p191
    %p193 = scmp.ne.s32.totalorder %s185, %s187
    %p194 = scmp.eq.s32.totalorder %s30, 1
    %p195 = por %p193, %p194
    %p196 = scmp.ne.s32.totalorder %s187, %s188
    %p197 = scmp.eq.s32.totalorder %s30, 0
    %p198 = por %p196, %p197
    %p199 = scmp.ne.s32.totalorder %s187, %s188
    %p200 = scmp.eq.s32.totalorder %s31, 1
    %p201 = por %p199, %p200
    %p203 = scmp.ne.s32.totalorder %s188, %s202
    %p204 = scmp.eq.s32.totalorder %s31, 0
    %p205 = por %p203, %p204
    %s207 = sadd.s32 %s206, 1
    %p210 = scmp.eq.s32.totalorder %s25, 1
    %p211 = scmp.ne.s32.totalorder %s206, %s208
    %p212 = scmp.eq.s32.totalorder %s25, 0
    %p213 = por %p211, %p212
    %p214 = scmp.ne.s32.totalorder %s206, %s208
    %p215 = scmp.eq.s32.totalorder %s30, 1
    %p216 = por %p214, %p215
    %p217 = scmp.ne.s32.totalorder %s208, %s209
    %p218 = scmp.eq.s32.totalorder %s30, 0
    %p219 = por %p217, %p218
    %p220 = scmp.ne.s32.totalorder %s208, %s209
    %p221 = scmp.eq.s32.totalorder %s31, 1
    %p222 = por %p220, %p221
    %p224 = scmp.ne.s32.totalorder %s209, %s223
    %p225 = scmp.eq.s32.totalorder %s31, 0
    %p226 = por %p224, %p225
    %s228 = sadd.s32 %s227, 1
    %p231 = scmp.eq.s32.totalorder %s25, 1
    %p232 = scmp.ne.s32.totalorder %s227, %s229
    %p233 = scmp.eq.s32.totalorder %s25, 0
    %p234 = por %p232, %p233
    %p235 = scmp.ne.s32.totalorder %s227, %s229
    %p236 = scmp.eq.s32.totalorder %s30, 1
    %p237 = por %p235, %p236
    %p238 = scmp.ne.s32.totalorder %s229, %s230
    %p239 = scmp.eq.s32.totalorder %s30, 0
    %p240 = por %p238, %p239
    %p241 = scmp.ne.s32.totalorder %s229, %s230
    %p242 = scmp.eq.s32.totalorder %s31, 1
    %p243 = por %p241, %p242
    %p245 = scmp.ne.s32.totalorder %s230, %s244
    %p246 = scmp.eq.s32.totalorder %s31, 0
    %p247 = por %p245, %p246
    %s249 = sadd.s32 %s248, 1
    %p252 = scmp.eq.s32.totalorder %s25, 1
    %p253 = scmp.ne.s32.totalorder %s248, %s250
    %p254 = scmp.eq.s32.totalorder %s25, 0
    %p255 = por %p253, %p254
    %p256 = scmp.ne.s32.totalorder %s248, %s250
    %p257 = scmp.eq.s32.totalorder %s30, 1
    %p258 = por %p256, %p257
    %p259 = scmp.ne.s32.totalorder %s250, %s251
    %p260 = scmp.eq.s32.totalorder %s30, 0
    %p261 = por %p259, %p260
    %p262 = scmp.ne.s32.totalorder %s250, %s251
    %p263 = scmp.eq.s32.totalorder %s31, 1
    %p264 = por %p262, %p263
    %p266 = scmp.ne.s32.totalorder %s251, %s265
    %p267 = scmp.eq.s32.totalorder %s31, 0
    %p268 = por %p266, %p267
    %s270 = sadd.s32 %s269, 1
    %p273 = scmp.eq.s32.totalorder %s25, 1
    %p274 = scmp.ne.s32.totalorder %s269, %s271
    %p275 = scmp.eq.s32.totalorder %s25, 0
    %p276 = por %p274, %p275
    %p277 = scmp.ne.s32.totalorder %s269, %s271
    %p278 = scmp.eq.s32.totalorder %s30, 1
    %p279 = por %p277, %p278
    %p280 = scmp.ne.s32.totalorder %s271, %s272
    %p281 = scmp.eq.s32.totalorder %s30, 0
    %p282 = por %p280, %p281
    %p283 = scmp.ne.s32.totalorder %s271, %s272
    %p284 = scmp.eq.s32.totalorder %s31, 1
    %p285 = por %p283, %p284
    %p287 = scmp.ne.s32.totalorder %s272, %s286
    %p288 = scmp.eq.s32.totalorder %s31, 0
    %p289 = por %p287, %p288
    %s291 = sadd.s32 %s290, 1
    %p294 = scmp.eq.s32.totalorder %s25, 1
    %p295 = scmp.ne.s32.totalorder %s290, %s292
    %p296 = scmp.eq.s32.totalorder %s25, 0
    %p297 = por %p295, %p296
    %p298 = scmp.ne.s32.totalorder %s290, %s292
    %p299 = scmp.eq.s32.totalorder %s30, 1
    %p300 = por %p298, %p299
    %p301 = scmp.ne.s32.totalorder %s292, %s293
    %p302 = scmp.eq.s32.totalorder %s30, 0
    %p303 = por %p301, %p302
    %p304 = scmp.ne.s32.totalorder %s292, %s293
    %p305 = scmp.eq.s32.totalorder %s31, 1
    %p306 = por %p304, %p305
    %p308 = scmp.ne.s32.totalorder %s293, %s307
    %p309 = scmp.eq.s32.totalorder %s31, 0
    %p310 = por %p308, %p309
    %s312 = sadd.s32 %s311, 1
    %p315 = scmp.eq.s32.totalorder %s25, 1
    %p316 = scmp.ne.s32.totalorder %s311, %s313
    %p317 = scmp.eq.s32.totalorder %s25, 0
    %p318 = por %p316, %p317
    %p319 = scmp.ne.s32.totalorder %s311, %s313
    %p320 = scmp.eq.s32.totalorder %s30, 1
    %p321 = por %p319, %p320
    %p322 = scmp.ne.s32.totalorder %s313, %s314
    %p323 = scmp.eq.s32.totalorder %s30, 0
    %p324 = por %p322, %p323
    %p325 = scmp.ne.s32.totalorder %s313, %s314
    %p326 = scmp.eq.s32.totalorder %s31, 1
    %p327 = por %p325, %p326
    %p329 = scmp.ne.s32.totalorder %s314, %s328
    %p330 = scmp.eq.s32.totalorder %s31, 0
    %p331 = por %p329, %p330
    %s333 = sadd.s32 %s332, 1
    %p336 = scmp.eq.s32.totalorder %s25, 1
    %p337 = scmp.ne.s32.totalorder %s332, %s334
    %p338 = scmp.eq.s32.totalorder %s25, 0
    %p339 = por %p337, %p338
    %p340 = scmp.ne.s32.totalorder %s332, %s334
    %p341 = scmp.eq.s32.totalorder %s30, 1
    %p342 = por %p340, %p341
    %p343 = scmp.ne.s32.totalorder %s334, %s335
    %p344 = scmp.eq.s32.totalorder %s30, 0
    %p345 = por %p343, %p344
    %p346 = scmp.ne.s32.totalorder %s334, %s335
    %p347 = scmp.eq.s32.totalorder %s31, 1
    %p348 = por %p346, %p347
    %p350 = scmp.ne.s32.totalorder %s335, %s349
    %p351 = scmp.eq.s32.totalorder %s31, 0
    %p352 = por %p350, %p351
    %s354 = sadd.s32 %s353, 1
    %p357 = scmp.eq.s32.totalorder %s25, 1
    %p358 = scmp.ne.s32.totalorder %s353, %s355
    %p359 = scmp.eq.s32.totalorder %s25, 0
    %p360 = por %p358, %p359
    %p361 = scmp.ne.s32.totalorder %s353, %s355
    %p362 = scmp.eq.s32.totalorder %s30, 1
    %p363 = por %p361, %p362
    %p364 = scmp.ne.s32.totalorder %s355, %s356
    %p365 = scmp.eq.s32.totalorder %s30, 0
    %p366 = por %p364, %p365
    %p367 = scmp.ne.s32.totalorder %s355, %s356
    %p368 = scmp.eq.s32.totalorder %s31, 1
    %p369 = por %p367, %p368
    %p371 = scmp.ne.s32.totalorder %s356, %s370
    %p372 = scmp.eq.s32.totalorder %s31, 0
    %p373 = por %p371, %p372
    %s375 = sadd.s32 %s374, 1
    %p378 = scmp.eq.s32.totalorder %s25, 1
    %p379 = scmp.ne.s32.totalorder %s374, %s376
    %p380 = scmp.eq.s32.totalorder %s25, 0
    %p381 = por %p379, %p380
    %p382 = scmp.ne.s32.totalorder %s374, %s376
    %p383 = scmp.eq.s32.totalorder %s30, 1
    %p384 = por %p382, %p383
    %p385 = scmp.ne.s32.totalorder %s376, %s377
    %p386 = scmp.eq.s32.totalorder %s30, 0
    %p387 = por %p385, %p386
    %p388 = scmp.ne.s32.totalorder %s376, %s377
    %p389 = scmp.eq.s32.totalorder %s31, 1
    %p390 = por %p388, %p389
    %p392 = scmp.ne.s32.totalorder %s377, %s391
    %p393 = scmp.eq.s32.totalorder %s31, 0
    %p394 = por %p392, %p393
    %s396 = sadd.s32 %s395, 1
    %p399 = scmp.eq.s32.totalorder %s25, 1
    %p400 = scmp.ne.s32.totalorder %s395, %s397
    %p401 = scmp.eq.s32.totalorder %s25, 0
    %p402 = por %p400, %p401
    %p403 = scmp.ne.s32.totalorder %s395, %s397
    %p404 = scmp.eq.s32.totalorder %s30, 1
    %p405 = por %p403, %p404
    %p406 = scmp.ne.s32.totalorder %s397, %s398
    %p407 = scmp.eq.s32.totalorder %s30, 0
    %p408 = por %p406, %p407
    %p409 = scmp.ne.s32.totalorder %s397, %s398
    %p410 = scmp.eq.s32.totalorder %s31, 1
    %p411 = por %p409, %p410
    %p413 = scmp.ne.s32.totalorder %s398, %s412
    %p414 = scmp.eq.s32.totalorder %s31, 0
    %p415 = por %p413, %p414
    %s417 = sadd.s32 %s416, 1
    %p420 = scmp.eq.s32.totalorder %s25, 1
    %p421 = scmp.ne.s32.totalorder %s416, %s418
    %p422 = scmp.eq.s32.totalorder %s25, 0
    %p423 = por %p421, %p422
    %p424 = scmp.ne.s32.totalorder %s416, %s418
    %p425 = scmp.eq.s32.totalorder %s30, 1
    %p426 = por %p424, %p425
    %p427 = scmp.ne.s32.totalorder %s418, %s419
    %p428 = scmp.eq.s32.totalorder %s30, 0
    %p429 = por %p427, %p428
    %p430 = scmp.ne.s32.totalorder %s418, %s419
    %p431 = scmp.eq.s32.totalorder %s31, 1
    %p432 = por %p430, %p431
    %p434 = scmp.ne.s32.totalorder %s419, %s433
    %p435 = scmp.eq.s32.totalorder %s31, 0
    %p436 = por %p434, %p435
    %s437 = ssub.s32 %s25, %s32
    %p438 = scmp.eq.s32.totalorder %s437, 0
    %s440 = sadd.s32 %s439, 1
    %s441 = scalar_select %p438, %s439, %s440
    %p444 = pneg %p438
    %p445 = scmp.eq.s32.totalorder %s25, 1
    %p446 = por %p444, %p445
    %p447 = scmp.ne.s32.totalorder %s439, %s442
    %p448 = scmp.eq.s32.totalorder %s25, 0
    %p449 = por %p447, %p448
    %p450 = scmp.ne.s32.totalorder %s439, %s442
    %p451 = scmp.eq.s32.totalorder %s30, 1
    %p452 = por %p450, %p451
    %p453 = scmp.ne.s32.totalorder %s442, %s443
    %p454 = scmp.eq.s32.totalorder %s30, 0
    %p455 = por %p453, %p454
    %p456 = scmp.ne.s32.totalorder %s442, %s443
    %p457 = scmp.eq.s32.totalorder %s31, 1
    %p458 = por %p456, %p457
    %p460 = scmp.ne.s32.totalorder %s443, %s459
    %p461 = scmp.eq.s32.totalorder %s31, 0
    %p462 = por %p460, %p461
    %p463 = scmp.le.s32.totalorder 1, %s25
    %p464 = scmp.lt.s32.totalorder %s25, 3
    %p465 = pnand %p463, %p464
    %p466 = pneg %p465
    // Predicated region
    $region9: #{sat_img_encoder_forward.1} parent=5 // pred_check
      _
    $region10: #{sat_img_encoder_forward.1} parent=5 // pred_check_branch
      %468 = sbr.rel (%p465) target = $region12
    $region11: #{sat_img_encoder_forward.1} parent=5 // pred_region
      %s469 = ssub.s32 %s25, 1
      // Predicated region
      $region13: #{sat_img_encoder_forward.1} parent=11 // pred_check
        %p470 = pneg %p72
      $region14: #{sat_img_encoder_forward.1} parent=11 // pred_check_branch
        %472 = sbr.rel (%p470) target = $region16
      $region15: #{sat_img_encoder_forward.1} parent=11 // pred_region
        _
      $region16: #{sat_img_encoder_forward.1} parent=11 // pred_fallthru
        _
      // Predicated region
      $region17: #{sat_img_encoder_forward.1} parent=11 // pred_check
        %p473 = pneg %p93
      $region18: #{sat_img_encoder_forward.1} parent=11 // pred_check_branch
        %475 = sbr.rel (%p473) target = $region20
      $region19: #{sat_img_encoder_forward.1} parent=11 // pred_region
        _
      $region20: #{sat_img_encoder_forward.1} parent=11 // pred_fallthru
        _
      // Predicated region
      $region21: #{sat_img_encoder_forward.1} parent=11 // pred_check
        %p476 = pneg %p114
      $region22: #{sat_img_encoder_forward.1} parent=11 // pred_check_branch
        %478 = sbr.rel (%p476) target = $region24
      $region23: #{sat_img_encoder_forward.1} parent=11 // pred_region
        _
      $region24: #{sat_img_encoder_forward.1} parent=11 // pred_fallthru
        _
      // Predicated region
      $region25: #{sat_img_encoder_forward.1} parent=11 // pred_check
        %p479 = pneg %p135
      $region26: #{sat_img_encoder_forward.1} parent=11 // pred_check_branch
        %481 = sbr.rel (%p479) target = $region28
      $region27: #{sat_img_encoder_forward.1} parent=11 // pred_region
        _
      $region28: #{sat_img_encoder_forward.1} parent=11 // pred_fallthru
        _
      // Predicated region
      $region29: #{sat_img_encoder_forward.1} parent=11 // pred_check
        %p482 = pneg %p156
      $region30: #{sat_img_encoder_forward.1} parent=11 // pred_check_branch
        %484 = sbr.rel (%p482) target = $region32
      $region31: #{sat_img_encoder_forward.1} parent=11 // pred_region
        _
      $region32: #{sat_img_encoder_forward.1} parent=11 // pred_fallthru
        _
      // Predicated region
      $region33: #{sat_img_encoder_forward.1} parent=11 // pred_check
        %p485 = pneg %p177
      $region34: #{sat_img_encoder_forward.1} parent=11 // pred_check_branch
        %487 = sbr.rel (%p485) target = $region36
      $region35: #{sat_img_encoder_forward.1} parent=11 // pred_region
        _
      $region36: #{sat_img_encoder_forward.1} parent=11 // pred_fallthru
        _
      // Predicated region
      $region37: #{sat_img_encoder_forward.1} parent=11 // pred_check
        %p488 = pneg %p198
      $region38: #{sat_img_encoder_forward.1} parent=11 // pred_check_branch
        %490 = sbr.rel (%p488) target = $region40
      $region39: #{sat_img_encoder_forward.1} parent=11 // pred_region
        _
      $region40: #{sat_img_encoder_forward.1} parent=11 // pred_fallthru
        _
      // Predicated region
      $region41: #{sat_img_encoder_forward.1} parent=11 // pred_check
        %p491 = pneg %p219
      $region42: #{sat_img_encoder_forward.1} parent=11 // pred_check_branch
        %493 = sbr.rel (%p491) target = $region44
      $region43: #{sat_img_encoder_forward.1} parent=11 // pred_region
        _
      $region44: #{sat_img_encoder_forward.1} parent=11 // pred_fallthru
        _
      // Predicated region
      $region45: #{sat_img_encoder_forward.1} parent=11 // pred_check
        %p494 = pneg %p240
      $region46: #{sat_img_encoder_forward.1} parent=11 // pred_check_branch
        %496 = sbr.rel (%p494) target = $region48
      $region47: #{sat_img_encoder_forward.1} parent=11 // pred_region
        _
      $region48: #{sat_img_encoder_forward.1} parent=11 // pred_fallthru
        _
      // Predicated region
      $region49: #{sat_img_encoder_forward.1} parent=11 // pred_check
        %p497 = pneg %p261
      $region50: #{sat_img_encoder_forward.1} parent=11 // pred_check_branch
        %499 = sbr.rel (%p497) target = $region52
      $region51: #{sat_img_encoder_forward.1} parent=11 // pred_region
        _
      $region52: #{sat_img_encoder_forward.1} parent=11 // pred_fallthru
        _
      // Predicated region
      $region53: #{sat_img_encoder_forward.1} parent=11 // pred_check
        %p500 = pneg %p282
      $region54: #{sat_img_encoder_forward.1} parent=11 // pred_check_branch
        %502 = sbr.rel (%p500) target = $region56
      $region55: #{sat_img_encoder_forward.1} parent=11 // pred_region
        _
      $region56: #{sat_img_encoder_forward.1} parent=11 // pred_fallthru
        _
      // Predicated region
      $region57: #{sat_img_encoder_forward.1} parent=11 // pred_check
        %p503 = pneg %p303
      $region58: #{sat_img_encoder_forward.1} parent=11 // pred_check_branch
        %505 = sbr.rel (%p503) target = $region60
      $region59: #{sat_img_encoder_forward.1} parent=11 // pred_region
        _
      $region60: #{sat_img_encoder_forward.1} parent=11 // pred_fallthru
        _
      // Predicated region
      $region61: #{sat_img_encoder_forward.1} parent=11 // pred_check
        %p506 = pneg %p324
      $region62: #{sat_img_encoder_forward.1} parent=11 // pred_check_branch
        %508 = sbr.rel (%p506) target = $region64
      $region63: #{sat_img_encoder_forward.1} parent=11 // pred_region
        _
      $region64: #{sat_img_encoder_forward.1} parent=11 // pred_fallthru
        _
      // Predicated region
      $region65: #{sat_img_encoder_forward.1} parent=11 // pred_check
        %p509 = pneg %p345
      $region66: #{sat_img_encoder_forward.1} parent=11 // pred_check_branch
        %511 = sbr.rel (%p509) target = $region68
      $region67: #{sat_img_encoder_forward.1} parent=11 // pred_region
        _
      $region68: #{sat_img_encoder_forward.1} parent=11 // pred_fallthru
        _
      // Predicated region
      $region69: #{sat_img_encoder_forward.1} parent=11 // pred_check
        %p512 = pneg %p366
      $region70: #{sat_img_encoder_forward.1} parent=11 // pred_check_branch
        %514 = sbr.rel (%p512) target = $region72
      $region71: #{sat_img_encoder_forward.1} parent=11 // pred_region
        _
      $region72: #{sat_img_encoder_forward.1} parent=11 // pred_fallthru
        _
      // Predicated region
      $region73: #{sat_img_encoder_forward.1} parent=11 // pred_check
        %p515 = pneg %p387
      $region74: #{sat_img_encoder_forward.1} parent=11 // pred_check_branch
        %517 = sbr.rel (%p515) target = $region76
      $region75: #{sat_img_encoder_forward.1} parent=11 // pred_region
        _
      $region76: #{sat_img_encoder_forward.1} parent=11 // pred_fallthru
        _
      // Predicated region
      $region77: #{sat_img_encoder_forward.1} parent=11 // pred_check
        %p518 = pneg %p408
      $region78: #{sat_img_encoder_forward.1} parent=11 // pred_check_branch
        %520 = sbr.rel (%p518) target = $region80
      $region79: #{sat_img_encoder_forward.1} parent=11 // pred_region
        _
      $region80: #{sat_img_encoder_forward.1} parent=11 // pred_fallthru
        _
      // Predicated region
      $region81: #{sat_img_encoder_forward.1} parent=11 // pred_check
        %p521 = pneg %p429
      $region82: #{sat_img_encoder_forward.1} parent=11 // pred_check_branch
        %523 = sbr.rel (%p521) target = $region84
      $region83: #{sat_img_encoder_forward.1} parent=11 // pred_region
        _
      $region84: #{sat_img_encoder_forward.1} parent=11 // pred_fallthru
        _
    $region12: #{sat_img_encoder_forward.1} parent=5 // pred_fallthru
      _
    %p524 = scmp.lt.s32.totalorder %s25, 2
    // Predicated region
    $region85: #{sat_img_encoder_forward.1} parent=5 // pred_check
      %p525 = pneg %p524
    $region86: #{sat_img_encoder_forward.1} parent=5 // pred_check_branch
      %527 = sbr.rel (%p525) target = $region88
    $region87: #{sat_img_encoder_forward.1} parent=5 // pred_region
      // Predicated region
      $region89: #{sat_img_encoder_forward.1} parent=87 // pred_check
        %p528 = pneg %p45
      $region90: #{sat_img_encoder_forward.1} parent=87 // pred_check_branch
        %530 = sbr.rel (%p528) target = $region92
      $region91: #{sat_img_encoder_forward.1} parent=87 // pred_region
        %p531 = scmp.lt.s32.totalorder %s25, 1
        %s532 = scalar_select %p531, %s25, 1
        %s533 = smul.addr %s532, 4
        %s534 = smul.addr %s533, 4
        %s535 = scalar_lea.vmem %s0, %s534
      $region92: #{sat_img_encoder_forward.1} parent=87 // pred_fallthru
        _
    $region88: #{sat_img_encoder_forward.1} parent=5 // pred_fallthru
      _
    %p536 = scmp.le.s32.totalorder 1, %s25
    %p537 = scmp.lt.s32.totalorder %s25, 3
    %p538 = pnand %p536, %p537
    %p539 = pneg %p538
    // Predicated region
    $region93: #{sat_img_encoder_forward.1} parent=5 // pred_check
      _
    $region94: #{sat_img_encoder_forward.1} parent=5 // pred_check_branch
      %541 = sbr.rel (%p538) target = $region96
    $region95: #{sat_img_encoder_forward.1} parent=5 // pred_region
      %s542 = ssub.s32 %s25, 1
      %p543 = scmp.lt.s32.totalorder %s30, 1
      %s544 = scalar_select %p543, %s30, 1
      %s545 = smul.addr %s544, 4
      %s546 = smul.addr %s545, 4
      %s547 = scalar_lea.vmem %s0, %s546
      %p548 = pneg %p51
      %p549 = pneg %p48
      %p550 = pneg %p72
      %p551 = pneg %p69
      %p552 = pneg %p93
      %p553 = pneg %p90
      %p554 = pneg %p114
      %p555 = pneg %p111
      %p556 = pneg %p135
      %p557 = pneg %p132
      %p558 = pneg %p156
      %p559 = pneg %p153
      %p560 = pneg %p177
      %p561 = pneg %p174
      %p562 = pneg %p198
      %p563 = pneg %p195
      %p564 = pneg %p219
      %p565 = pneg %p216
      %p566 = pneg %p240
      %p567 = pneg %p237
      %p568 = pneg %p261
      %p569 = pneg %p258
      %p570 = pneg %p282
      %p571 = pneg %p279
      %p572 = pneg %p303
      %p573 = pneg %p300
      %p574 = pneg %p324
      %p575 = pneg %p321
      %p576 = pneg %p345
      %p577 = pneg %p342
      %p578 = pneg %p366
      %p579 = pneg %p363
      %p580 = pneg %p387
      %p581 = pneg %p384
      %p582 = pneg %p408
      %p583 = pneg %p405
      %p584 = pneg %p429
      %p585 = pneg %p426
      %p586 = pneg %p455
      %p587 = pneg %p452
      %p588 = scmp.lt.s32.totalorder %s30, 1
      %s589 = scalar_select %p588, %s30, 1
      %s590 = smul.addr %s589, 4
      %s591 = smul.addr %s590, 8
      %s592 = scalar_lea.vmem %s19, %s591
      %p593 = scmp.lt.s32.totalorder %s30, 1
      %s594 = scalar_select %p593, %s30, 1
      %s595 = smul.addr %s594, 4
      %s596 = smul.addr %s595, 4
      %s597 = scalar_lea.vmem %s0, %s596
      %p598 = scmp.lt.s32.totalorder %s30, 1
      %s599 = scalar_select %p598, %s30, 1
      %s600 = smul.addr %s599, 4
      %s601 = smul.addr %s600, 8
      %s602 = scalar_lea.vmem %s19, %s601
      %v604 = vld [vmem:[%s597] sm:$0xff]
      %v605 = vld [vmem:[%s597 + $0x8] sm:$0xff]
      %v606 = vld [vmem:[%s1] sm:$0xf]
      %v607 = vld [vmem:[%s1 + $0x4] sm:$0xf]
      %v608 = vld [vmem:[%s1 + $0x8] sm:$0xf]
      %v609 = vld [vmem:[%s1 + $0xc] sm:$0xf]
      %v610 = vld [vmem:[%s1 + $0x10] sm:$0xf]
      %v611 = vld [vmem:[%s1 + $0x14] sm:$0xf]
      %v612 = vld [vmem:[%s1 + $0x18] sm:$0xf]
      %v613 = vld [vmem:[%s1 + $0x1c] sm:$0xf]
      %v614 = vld [vmem:[%s1 + $0x20] sm:$0xf]
      %v615 = vld [vmem:[%s1 + $0x24] sm:$0xf]
      %v616 = vld [vmem:[%s1 + $0x28] sm:$0xf]
      %v617 = vld [vmem:[%s1 + $0x2c] sm:$0xf]
      %v618 = vld [vmem:[%s1 + $0x30] sm:$0xf]
      %v619 = vld [vmem:[%s1 + $0x34] sm:$0xf]
      %v620 = vld [vmem:[%s1 + $0x38] sm:$0xf]
      %v621 = vld [vmem:[%s1 + $0x3c] sm:$0xf]
      %v622 = vld [vmem:[%s1 + $0x40] sm:$0xf]
      %v623 = vld [vmem:[%s1 + $0x44] sm:$0xf]
      %v624 = vld [vmem:[%s1 + $0x48] sm:$0xf]
      %v625 = vld [vmem:[%s1 + $0x4c] sm:$0xf]
      %v626 = vld [vmem:[%s1 + $0x50] sm:$0xf]
      %v627 = vld [vmem:[%s1 + $0x54] sm:$0xf]
      %v628 = vld [vmem:[%s1 + $0x58] sm:$0xf]
      %v629 = vld [vmem:[%s1 + $0x5c] sm:$0xf]
      %v630 = vld [vmem:[%s2] sm:$0x1]
      %v632 = vlaneseq
      %v633 = vshrl.u32 %v632, 7
      %v634 = vsub.s32 0, %v633
      %v635 = vrot.slane %v630, %v634
      %v639 = vunpack.c.l.b16 %v604
      %v640 = vunpack.c.h.b16 %v604
      %v641 = vunpack.c.l.b16 %v605
      %v642 = vunpack.c.h.b16 %v605
      %v643 = vpack.c.b16 %v641, %v639
      %v644 = vpack.c.b16 %v642, %v640
      %v670 = vunpack.c.l.b16 %v606
      %v671 = vunpack.c.l.b16 %v607
      %v672 = vunpack.c.l.b16 %v608
      %v673 = vunpack.c.l.b16 %v609
      %v674 = vunpack.c.l.b16 %v610
      %v675 = vunpack.c.l.b16 %v611
      %v676 = vunpack.c.l.b16 %v612
      %v677 = vunpack.c.l.b16 %v613
      %v678 = vunpack.c.l.b16 %v614
      %v679 = vunpack.c.l.b16 %v615
      %v680 = vunpack.c.l.b16 %v616
      %v681 = vunpack.c.l.b16 %v617
      %v682 = vunpack.c.l.b16 %v618
      %v683 = vunpack.c.l.b16 %v619
      %v684 = vunpack.c.l.b16 %v620
      %v685 = vunpack.c.l.b16 %v621
      %v686 = vunpack.c.l.b16 %v622
      %v687 = vunpack.c.l.b16 %v623
      %v688 = vunpack.c.l.b16 %v624
      %v689 = vunpack.c.l.b16 %v625
      %v690 = vunpack.c.l.b16 %v626
      %v691 = vunpack.c.l.b16 %v627
      %v692 = vunpack.c.l.b16 %v628
      %v693 = vunpack.c.l.b16 %v629
      %v694 = vpack.c.b16 %v671, %v670
      %v695 = vpack.c.b16 %v673, %v672
      %v696 = vpack.c.b16 %v675, %v674
      %v697 = vpack.c.b16 %v677, %v676
      %v698 = vpack.c.b16 %v679, %v678
      %v699 = vpack.c.b16 %v681, %v680
      %v700 = vpack.c.b16 %v683, %v682
      %v701 = vpack.c.b16 %v685, %v684
      %v702 = vpack.c.b16 %v687, %v686
      %v703 = vpack.c.b16 %v689, %v688
      %v704 = vpack.c.b16 %v691, %v690
      %v705 = vpack.c.b16 %v693, %v692
      %vm718 = vcmask 523264
      %v720 = vsel %vm718, %v644, 0
      %722 = vmatprep.subr.bf16.mxu0 0
      %723 = vmatpush1.bf16.msra.mxu0 %v694
      %724 = vmatprep.subr.bf16.mxu0 0
      %725 = vmatpush1.bf16.msra.mxu0 %v695
      %726 = vmatprep.subr.bf16.mxu0 0
      %727 = vmatpush1.bf16.msra.mxu0 %v696
      %728 = vmatprep.subr.bf16.mxu0 0
      %729 = vmatpush1.bf16.msra.mxu0 %v697
      %730 = vmatprep.subr.bf16.mxu0 0
      %731 = vmatpush1.bf16.msra.mxu0 %v698
      %732 = vmatprep.subr.bf16.mxu0 0
      %733 = vmatpush1.bf16.msra.mxu0 %v699
      %734 = vmatprep.subr.bf16.mxu0 0
      %735 = vmatpush1.bf16.msra.mxu0 %v700
      %736 = vmatprep.subr.bf16.mxu0 0
      %737 = vmatpush1.bf16.msra.mxu0 %v701
      %738 = vmatprep.subr.bf16.mxu0 0
      %739 = vmatpush1.bf16.msra.mxu0 %v702
      %740 = vmatprep.subr.bf16.mxu0 0
      %741 = vmatpush1.bf16.msra.mxu0 %v703
      %742 = vmatprep.subr.bf16.mxu0 0
      %743 = vmatpush1.bf16.msra.mxu0 %v704
      %744 = vmatprep.subr.bf16.mxu0 0
      %745 = vmatpush1.bf16.msra.mxu0 %v705
      %746 = vmatprep.subr.bf16.mxu0 0
      %747 = vmatpush1.bf16.msra.mxu0 0
      %748 = vmatprep.subr.bf16.mxu0 0
      %749 = vmatpush1.bf16.msra.mxu0 0
      %750 = vmatprep.subr.bf16.mxu0 0
      %751 = vmatpush1.bf16.msra.mxu0 0
      %752 = vmatprep.subr.bf16.mxu0 0
      %753 = vmatpush1.bf16.msra.mxu0 0
      %754 = vmatprep.mubr.bf16.mxu0 %v720
      %755 = vmatmul.mubr.bf16.gmra.mrb[0].mxu0 %v643
      %v756 = vpop.f32.mrb[0].mxu0
      %v757 = vadd.f32 %v635, %v756
      %v758 = vpop.f32.mrb[0].mxu0
      %v759 = vpop.f32.mrb[0].mxu0
      %v760 = vadd.f32 %v635, %v759
      %v761 = vpop.f32.mrb[0].mxu0
      %762 = vdwg.mxu0
      %v763 = vld [vmem:[%s3] sm:$0xff]
      %v764 = vld [vmem:[%s3 + $0x8] sm:$0xff]
      %v765 = vadd.f32 %v757, %v763
      %v766 = vadd.f32 %v760, %v764
      %v767 = vld [vmem:[%s4] sm:$0x1]
      %vm770 = vcmask 1040384
      %v771 = vrot.slane %v765, 7
      %v772 = vrot.slane %v766, 7
      %v773 = vsel %vm770, %v771, %v772
      %v777 = vsel %vm770, %v767, %v771
      %v778 = vsel %vm770, %v772, 0.0
      %v779 = vlaneseq
      %v780 = vand.u32 %v779, 127
      %vm781 = vcmp.lt.s32.totalorder %v780, 17
      %v782 = vsel %vm781, 0.0, -1e+30
      %v783 = vld [vmem:[%s5] sm:$0x1]
      %v784 = vld [vmem:[%s6] sm:$0x1]
      %785 = vadd.xlane.f32.xlu0 %v777
      %v786 = vpop.xlane.xlu0 %785
      %787 = vadd.xlane.f32.xlu0 %v773
      %v788 = vpop.xlane.xlu0 %787
      %789 = vadd.xlane.f32.xlu0 %v778
      %v790 = vpop.xlane.xlu0 %789
      %791 = vadd.xlane.f32.xlu0 0.0
      %v792 = vpop.xlane.xlu0 %791
      %v793 = vrcp.pop 128.0
      %v794 = vmul.f32 %v786, %v793
      %v795 = vmul.f32 %v788, %v793
      %v796 = vmul.f32 %v790, %v793
      %v797 = vmul.f32 %v792, %v793
      %v798 = vmul.f32 %v777, %v777
      %v799 = vmul.f32 %v773, %v773
      %v800 = vmul.f32 %v778, %v778
      %801 = vadd.xlane.f32.xlu0 %v798
      %v802 = vpop.xlane.xlu0 %801
      %803 = vadd.xlane.f32.xlu0 %v799
      %v804 = vpop.xlane.xlu0 %803
      %805 = vadd.xlane.f32.xlu0 %v800
      %v806 = vpop.xlane.xlu0 %805
      %v807 = vmul.f32 %v802, %v793
      %v808 = vmul.f32 %v804, %v793
      %v809 = vmul.f32 %v806, %v793
      %v810 = vmul.f32 %v794, %v794
      %v811 = vmul.f32 %v795, %v795
      %v812 = vmul.f32 %v796, %v796
      %v813 = vmul.f32 %v797, %v797
      %v814 = vsub.f32 %v807, %v810
      %v815 = vsub.f32 %v808, %v811
      %v816 = vsub.f32 %v809, %v812
      %v817 = vsub.f32 %v797, %v813
      %v818 = vmax.f32 %v814, 0.0
      %v819 = vmax.f32 %v815, 0.0
      %v820 = vmax.f32 %v816, 0.0
      %v821 = vmax.f32 %v817, 0.0
      %v822 = vsub.f32 %v777, %v794
      %v823 = vsub.f32 %v773, %v795
      %v824 = vsub.f32 %v778, %v796
      %v825 = vsub.f32 0.0, %v797
      %v826 = vadd.f32 %v818, 1e-06
      %v827 = vadd.f32 %v819, 1e-06
      %v828 = vadd.f32 %v820, 1e-06
      %v829 = vadd.f32 %v821, 1e-06
      %v830 = vrsqrt.pop %v826
      %v831 = vrsqrt.pop %v827
      %v832 = vrsqrt.pop %v828
      %v833 = vrsqrt.pop %v829
      %v834 = vmul.f32 %v822, %v830
      %v835 = vmul.f32 %v823, %v831
      %v836 = vmul.f32 %v824, %v832
      %v837 = vmul.f32 %v825, %v833
      %v839 = vlaneseq
      %v840 = vshrl.u32 %v839, 7
      %v841 = vsub.s32 0, %v840
      %v842 = vrot.slane %v783, %v841
      %v844 = vmul.f32 %v834, %v842
      %v845 = vmul.f32 %v835, %v842
      %v846 = vmul.f32 %v836, %v842
      %v847 = vmul.f32 %v837, %v842
      %v849 = vlaneseq
      %v850 = vshrl.u32 %v849, 7
      %v851 = vsub.s32 0, %v850
      %v852 = vrot.slane %v784, %v851
      %v854 = vadd.f32 %v844, %v852
      %v855 = vadd.f32 %v845, %v852
      %v856 = vadd.f32 %v846, %v852
      %v857 = vadd.f32 %v847, %v852
      %v858 = vpack.c.bf16 %v855, %v854
      %v859 = vpack.c.bf16 %v857, %v856
      %v860 = vld [vmem:[%s7] sm:$0xff]
      %v861 = vld [vmem:[%s7 + $0x8] sm:$0xf]
      %v862 = vld [vmem:[%s7 + $0xc] sm:$0xff]
      %v863 = vld [vmem:[%s7 + $0x14] sm:$0xf]
      %v864 = vld [vmem:[%s7 + $0x18] sm:$0xff]
      %v865 = vld [vmem:[%s7 + $0x20] sm:$0xf]
      %v866 = vld [vmem:[%s7 + $0x24] sm:$0xff]
      %v867 = vld [vmem:[%s7 + $0x2c] sm:$0xf]
      %v868 = vld [vmem:[%s7 + $0x30] sm:$0xff]
      %v869 = vld [vmem:[%s7 + $0x38] sm:$0xf]
      %v870 = vld [vmem:[%s7 + $0x3c] sm:$0xff]
      %v871 = vld [vmem:[%s7 + $0x44] sm:$0xf]
      %v872 = vld [vmem:[%s7 + $0x48] sm:$0xff]
      %v873 = vld [vmem:[%s7 + $0x50] sm:$0xf]
      %v874 = vld [vmem:[%s7 + $0x54] sm:$0xff]
      %v875 = vld [vmem:[%s7 + $0x5c] sm:$0xf]
      %v876 = vld [vmem:[%s7 + $0x60] sm:$0xff]
      %v877 = vld [vmem:[%s7 + $0x68] sm:$0xf]
      %v878 = vld [vmem:[%s7 + $0x6c] sm:$0xff]
      %v879 = vld [vmem:[%s7 + $0x74] sm:$0xf]
      %v880 = vld [vmem:[%s7 + $0x78] sm:$0xff]
      %v881 = vld [vmem:[%s7 + $0x80] sm:$0xf]
      %v882 = vld [vmem:[%s7 + $0x84] sm:$0xff]
      %v883 = vld [vmem:[%s7 + $0x8c] sm:$0xf]
      %v884 = vld [vmem:[%s7 + $0x90] sm:$0xff]
      %v885 = vld [vmem:[%s7 + $0x98] sm:$0xf]
      %v886 = vld [vmem:[%s7 + $0x9c] sm:$0xff]
      %v887 = vld [vmem:[%s7 + $0xa4] sm:$0xf]
      %v888 = vld [vmem:[%s7 + $0xa8] sm:$0xff]
      %v889 = vld [vmem:[%s7 + $0xb0] sm:$0xf]
      %v890 = vld [vmem:[%s7 + $0xb4] sm:$0xff]
      %v891 = vld [vmem:[%s7 + $0xbc] sm:$0xf]
      %v892 = vld [vmem:[%s8] sm:$0x7]
      %v894 = vlaneseq
      %v895 = vshrl.u32 %v894, 7
      %v896 = vsub.s32 0, %v895
      %v897 = vrot.slane %v892, %v896
      %v898 = vlaneseq
      %v899 = vshrl.u32 %v898, 7
      %v900 = vsub.s32 1, %v899
      %v901 = vrot.slane %v892, %v900
      %v902 = vlaneseq
      %v903 = vshrl.u32 %v902, 7
      %v904 = vsub.s32 2, %v903
      %v905 = vrot.slane %v892, %v904
      %v941 = vunpack.c.l.b16 %v860
      %v942 = vunpack.c.h.b16 %v860
      %v943 = vunpack.c.l.b16 %v861
      %v944 = vunpack.c.l.b16 %v862
      %v945 = vunpack.c.h.b16 %v862
      %v946 = vunpack.c.l.b16 %v863
      %v947 = vunpack.c.l.b16 %v864
      %v948 = vunpack.c.h.b16 %v864
      %v949 = vunpack.c.l.b16 %v865
      %v950 = vunpack.c.l.b16 %v866
      %v951 = vunpack.c.h.b16 %v866
      %v952 = vunpack.c.l.b16 %v867
      %v953 = vunpack.c.l.b16 %v868
      %v954 = vunpack.c.h.b16 %v868
      %v955 = vunpack.c.l.b16 %v869
      %v956 = vunpack.c.l.b16 %v870
      %v957 = vunpack.c.h.b16 %v870
      %v958 = vunpack.c.l.b16 %v871
      %v959 = vunpack.c.l.b16 %v872
      %v960 = vunpack.c.h.b16 %v872
      %v961 = vunpack.c.l.b16 %v873
      %v962 = vunpack.c.l.b16 %v874
      %v963 = vunpack.c.h.b16 %v874
      %v964 = vunpack.c.l.b16 %v875
      %v965 = vunpack.c.l.b16 %v876
      %v966 = vunpack.c.h.b16 %v876
      %v967 = vunpack.c.l.b16 %v877
      %v968 = vunpack.c.l.b16 %v878
      %v969 = vunpack.c.h.b16 %v878
      %v970 = vunpack.c.l.b16 %v879
      %v971 = vunpack.c.l.b16 %v880
      %v972 = vunpack.c.h.b16 %v880
      %v973 = vunpack.c.l.b16 %v881
      %v974 = vunpack.c.l.b16 %v882
      %v975 = vunpack.c.h.b16 %v882
      %v976 = vunpack.c.l.b16 %v883
      %v977 = vunpack.c.l.b16 %v884
      %v978 = vunpack.c.h.b16 %v884
      %v979 = vunpack.c.l.b16 %v885
      %v980 = vunpack.c.l.b16 %v886
      %v981 = vunpack.c.h.b16 %v886
      %v982 = vunpack.c.l.b16 %v887
      %v983 = vunpack.c.l.b16 %v888
      %v984 = vunpack.c.h.b16 %v888
      %v985 = vunpack.c.l.b16 %v889
      %v986 = vunpack.c.l.b16 %v890
      %v987 = vunpack.c.h.b16 %v890
      %v988 = vunpack.c.l.b16 %v891
      %v989 = vpack.c.b16 %v944, %v941
      %v990 = vpack.c.b16 %v945, %v942
      %v991 = vpack.c.b16 %v946, %v943
      %v992 = vpack.c.b16 %v950, %v947
      %v993 = vpack.c.b16 %v951, %v948
      %v994 = vpack.c.b16 %v952, %v949
      %v995 = vpack.c.b16 %v956, %v953
      %v996 = vpack.c.b16 %v957, %v954
      %v997 = vpack.c.b16 %v958, %v955
      %v998 = vpack.c.b16 %v962, %v959
      %v999 = vpack.c.b16 %v963, %v960
      %v1000 = vpack.c.b16 %v964, %v961
      %v1001 = vpack.c.b16 %v968, %v965
      %v1002 = vpack.c.b16 %v969, %v966
      %v1003 = vpack.c.b16 %v970, %v967
      %v1004 = vpack.c.b16 %v974, %v971
      %v1005 = vpack.c.b16 %v975, %v972
      %v1006 = vpack.c.b16 %v976, %v973
      %v1007 = vpack.c.b16 %v980, %v977
      %v1008 = vpack.c.b16 %v981, %v978
      %v1009 = vpack.c.b16 %v982, %v979
      %v1010 = vpack.c.b16 %v986, %v983
      %v1011 = vpack.c.b16 %v987, %v984
      %v1012 = vpack.c.b16 %v988, %v985
      %1037 = vmatprep.subr.bf16.mxu0 %v990
      %1038 = vmatpush1.bf16.msra.mxu0 %v989
      %1039 = vmatprep.subr.bf16.mxu0 %v993
      %1040 = vmatpush1.bf16.msra.mxu0 %v992
      %1041 = vmatprep.subr.bf16.mxu0 %v996
      %1042 = vmatpush1.bf16.msra.mxu0 %v995
      %1043 = vmatprep.subr.bf16.mxu0 %v999
      %1044 = vmatpush1.bf16.msra.mxu0 %v998
      %1045 = vmatprep.subr.bf16.mxu0 %v1002
      %1046 = vmatpush1.bf16.msra.mxu0 %v1001
      %1047 = vmatprep.subr.bf16.mxu0 %v1005
      %1048 = vmatpush1.bf16.msra.mxu0 %v1004
      %1049 = vmatprep.subr.bf16.mxu0 %v1008
      %1050 = vmatpush1.bf16.msra.mxu0 %v1007
      %1051 = vmatprep.subr.bf16.mxu0 %v1011
      %1052 = vmatpush1.bf16.msra.mxu0 %v1010
      %1053 = vmatprep.subr.bf16.mxu0 0
      %1054 = vmatpush1.bf16.msra.mxu0 0
      %1055 = vmatprep.subr.bf16.mxu0 0
      %1056 = vmatpush1.bf16.msra.mxu0 0
      %1057 = vmatprep.subr.bf16.mxu0 0
      %1058 = vmatpush1.bf16.msra.mxu0 0
      %1059 = vmatprep.subr.bf16.mxu0 0
      %1060 = vmatpush1.bf16.msra.mxu0 0
      %1061 = vmatprep.subr.bf16.mxu0 0
      %1062 = vmatpush1.bf16.msra.mxu0 0
      %1063 = vmatprep.subr.bf16.mxu0 0
      %1064 = vmatpush1.bf16.msra.mxu0 0
      %1065 = vmatprep.subr.bf16.mxu0 0
      %1066 = vmatpush1.bf16.msra.mxu0 0
      %1067 = vmatprep.subr.bf16.mxu0 0
      %1068 = vmatpush1.bf16.msra.mxu0 0
      %1069 = vmatprep.mubr.bf16.mxu0 0
      %1070 = vmatmul.mubr.bf16.gmra.mrb[0].mxu0 %v858
      %v1071 = vpop.f32.mrb[0].mxu0
      %v1072 = vadd.f32 %v897, %v1071
      %v1073 = vpop.f32.mrb[0].mxu0
      %v1074 = vadd.f32 %v901, %v1073
      %v1075 = vpop.f32.mrb[0].mxu0
      %v1076 = vadd.f32 %v897, %v1075
      %v1077 = vpop.f32.mrb[0].mxu0
      %v1078 = vadd.f32 %v901, %v1077
      %1079 = vmatprep.mubr.bf16.mxu0 0
      %1080 = vmatmul.mubr.bf16.gmra.mrb[0].mxu0 %v859
      %v1081 = vpop.f32.mrb[0].mxu0
      %v1082 = vadd.f32 %v897, %v1081
      %v1083 = vpop.f32.mrb[0].mxu0
      %v1084 = vadd.f32 %v901, %v1083
      %v1085 = vpop.f32.mrb[0].mxu0
      %v1086 = vadd.f32 %v897, %v1085
      %v1087 = vpop.f32.mrb[0].mxu0
      %v1088 = vadd.f32 %v901, %v1087
      %1089 = vdwg.mxu0
      %1090 = vmatprep.subr.bf16.mxu0 0
      %1091 = vmatpush1.bf16.msra.mxu0 %v991
      %1092 = vmatprep.subr.bf16.mxu0 0
      %1093 = vmatpush1.bf16.msra.mxu0 %v994
      %1094 = vmatprep.subr.bf16.mxu0 0
      %1095 = vmatpush1.bf16.msra.mxu0 %v997
      %1096 = vmatprep.subr.bf16.mxu0 0
      %1097 = vmatpush1.bf16.msra.mxu0 %v1000
      %1098 = vmatprep.subr.bf16.mxu0 0
      %1099 = vmatpush1.bf16.msra.mxu0 %v1003
      %1100 = vmatprep.subr.bf16.mxu0 0
      %1101 = vmatpush1.bf16.msra.mxu0 %v1006
      %1102 = vmatprep.subr.bf16.mxu0 0
      %1103 = vmatpush1.bf16.msra.mxu0 %v1009
      %1104 = vmatprep.subr.bf16.mxu0 0
      %1105 = vmatpush1.bf16.msra.mxu0 %v1012
      %1106 = vmatprep.subr.bf16.mxu0 0
      %1107 = vmatpush1.bf16.msra.mxu0 0
      %1108 = vmatprep.subr.bf16.mxu0 0
      %1109 = vmatpush1.bf16.msra.mxu0 0
      %1110 = vmatprep.subr.bf16.mxu0 0
      %1111 = vmatpush1.bf16.msra.mxu0 0
      %1112 = vmatprep.subr.bf16.mxu0 0
      %1113 = vmatpush1.bf16.msra.mxu0 0
      %1114 = vmatprep.subr.bf16.mxu0 0
      %1115 = vmatpush1.bf16.msra.mxu0 0
      %1116 = vmatprep.subr.bf16.mxu0 0
      %1117 = vmatpush1.bf16.msra.mxu0 0
      %1118 = vmatprep.subr.bf16.mxu0 0
      %1119 = vmatpush1.bf16.msra.mxu0 0
      %1120 = vmatprep.subr.bf16.mxu0 0
      %1121 = vmatpush1.bf16.msra.mxu0 0
      %1122 = vmatprep.mubr.bf16.mxu0 0
      %1123 = vmatmul.mubr.bf16.gmra.mrb[0].mxu0 %v858
      %v1124 = vpop.f32.mrb[0].mxu0
      %v1125 = vadd.f32 %v905, %v1124
      %v1126 = vpop.f32.mrb[0].mxu0
      %v1127 = vpop.f32.mrb[0].mxu0
      %v1128 = vadd.f32 %v905, %v1127
      %v1129 = vpop.f32.mrb[0].mxu0
      %1130 = vmatprep.mubr.bf16.mxu0 0
      %1131 = vmatmul.mubr.bf16.gmra.mrb[0].mxu0 %v859
      %v1132 = vpop.f32.mrb[0].mxu0
      %v1133 = vadd.f32 %v905, %v1132
      %v1134 = vpop.f32.mrb[0].mxu0
      %v1135 = vpop.f32.mrb[0].mxu0
      %v1136 = vadd.f32 %v905, %v1135
      %v1137 = vpop.f32.mrb[0].mxu0
      %1138 = vdwg.mxu0
      %v1139 = vpack.c.bf16 %v1076, %v1072
      %v1140 = vpack.c.bf16 %v1078, %v1074
      %v1141 = vpack.c.bf16 %v1128, %v1125
      %v1142 = vpack.c.bf16 %v1086, %v1082
      %v1143 = vpack.c.bf16 %v1088, %v1084
      %v1144 = vpack.c.bf16 %v1136, %v1133
      %v1145 = vld [vmem:[%s9] sm:$0xf]
      %v1146 = vld [vmem:[%s9 + $0x4] sm:$0xf]
      %v1147 = vld [vmem:[%s9 + $0x8] sm:$0xf]
      %v1148 = vld [vmem:[%s9 + $0xc] sm:$0xf]
      %v1149 = vld [vmem:[%s9 + $0x10] sm:$0xf]
      %v1150 = vld [vmem:[%s9 + $0x14] sm:$0xf]
      %v1151 = vld [vmem:[%s9 + $0x18] sm:$0xf]
      %v1152 = vld [vmem:[%s9 + $0x1c] sm:$0xf]
      %v1153 = vld [vmem:[%s9 + $0x20] sm:$0xf]
      %v1154 = vld [vmem:[%s9 + $0x24] sm:$0xf]
      %v1155 = vld [vmem:[%s9 + $0x28] sm:$0xf]
      %v1156 = vld [vmem:[%s9 + $0x2c] sm:$0xf]
      %v1157 = vld [vmem:[%s9 + $0x30] sm:$0xf]
      %v1158 = vld [vmem:[%s9 + $0x34] sm:$0xf]
      %v1159 = vld [vmem:[%s9 + $0x38] sm:$0xf]
      %v1160 = vld [vmem:[%s9 + $0x3c] sm:$0xf]
      %vm1161 = vcmask 261120
      %v1163 = vsel %vm1161, %v1139, 0
      %v1166 = vsel %vm1161, %v1142, 0
      %v1169 = vsel %vm1161, %v1140, 0
      %v1172 = vsel %vm1161, %v1143, 0
      %1174 = vmatprep.subr.bf16.mxu0 0
      %1175 = vmatpush1.bf16.xpose.msra.mxu0 %v1169
      %1176 = vmatprep.subr.bf16.mxu0 0
      %1177 = vmatpush1.bf16.xpose.msra.mxu0 %v1172
      %1178 = vmatprep.subr.bf16.mxu0 0
      %1179 = vmatpush1.bf16.xpose.msra.mxu0 0
      %1180 = vmatprep.subr.bf16.mxu0 0
      %1181 = vmatpush1.bf16.xpose.msra.mxu0 0
      %1182 = vmatprep.subr.bf16.mxu0 0
      %1183 = vmatpush1.bf16.xpose.msra.mxu0 0
      %1184 = vmatprep.subr.bf16.mxu0 0
      %1185 = vmatpush1.bf16.xpose.msra.mxu0 0
      %1186 = vmatprep.subr.bf16.mxu0 0
      %1187 = vmatpush1.bf16.xpose.msra.mxu0 0
      %1188 = vmatprep.subr.bf16.mxu0 0
      %1189 = vmatpush1.bf16.xpose.msra.mxu0 0
      %1190 = vmatprep.subr.bf16.mxu0 0
      %1191 = vmatpush1.bf16.xpose.msra.mxu0 0
      %1192 = vmatprep.subr.bf16.mxu0 0
      %1193 = vmatpush1.bf16.xpose.msra.mxu0 0
      %1194 = vmatprep.subr.bf16.mxu0 0
      %1195 = vmatpush1.bf16.xpose.msra.mxu0 0
      %1196 = vmatprep.subr.bf16.mxu0 0
      %1197 = vmatpush1.bf16.xpose.msra.mxu0 0
      %1198 = vmatprep.subr.bf16.mxu0 0
      %1199 = vmatpush1.bf16.xpose.msra.mxu0 0
      %1200 = vmatprep.subr.bf16.mxu0 0
      %1201 = vmatpush1.bf16.xpose.msra.mxu0 0
      %1202 = vmatprep.subr.bf16.mxu0 0
      %1203 = vmatpush1.bf16.xpose.msra.mxu0 0
      %1204 = vmatprep.subr.bf16.mxu0 0
      %1205 = vmatpush1.bf16.xpose.msra.mxu0 0
      %1206 = vmatprep.mubr.bf16.mxu0 0
      %1207 = vmatmul.mubr.bf16.gmra.mrb[0].mxu0 %v1163
      %v1208 = vpop.f32.mrb[0].mxu0
      %v1209 = vadd.f32 0.0, %v1208
      %v1210 = vpop.f32.mrb[0].mxu0
      %v1211 = vpop.f32.mrb[0].mxu0
      %v1212 = vadd.f32 0.0, %v1211
      %v1213 = vpop.f32.mrb[0].mxu0
      %1214 = vmatprep.mubr.bf16.mxu0 0
      %1215 = vmatmul.mubr.bf16.gmra.mrb[0].mxu0 %v1166
      %v1216 = vpop.f32.mrb[0].mxu0
      %v1217 = vadd.f32 0.0, %v1216
      %v1218 = vpop.f32.mrb[0].mxu0
      %v1219 = vpop.f32.mrb[0].mxu0
      %v1220 = vadd.f32 0.0, %v1219
      %v1221 = vpop.f32.mrb[0].mxu0
      %1222 = vdwg.mxu0
      %v1223 = vmul.f32 %v1209, 0.17677669
      %v1224 = vmul.f32 %v1212, 0.17677669
      %v1225 = vmul.f32 %v1217, 0.17677669
      %v1226 = vmul.f32 %v1220, 0.17677669
      %v1227 = vadd.f32 %v1223, %v782
      %v1228 = vadd.f32 %v1224, %v782
      %v1229 = vadd.f32 %v1225, %v782
      %v1230 = vadd.f32 %v1226, %v782
      %v1231 = vsel %vm1161, %v1227, -inf
      %1232 = vmax.xlane.f32.xlu0 %v1231
      %v1233 = vpop.xlane.xlu0 %1232
      %v1234 = vsel %vm1161, %v1228, -inf
      %1235 = vmax.xlane.f32.xlu0 %v1234
      %v1236 = vpop.xlane.xlu0 %1235
      %v1237 = vsel %vm1161, %v1229, -inf
      %1238 = vmax.xlane.f32.xlu0 %v1237
      %v1239 = vpop.xlane.xlu0 %1238
      %v1240 = vsel %vm1161, %v1230, -inf
      %1241 = vmax.xlane.f32.xlu0 %v1240
      %v1242 = vpop.xlane.xlu0 %1241
      %v1243 = vsub.f32 %v1227, %v1233
      %v1244 = vsub.f32 %v1228, %v1236
      %v1245 = vsub.f32 %v1229, %v1239
      %v1246 = vsub.f32 %v1230, %v1242
      %v1247 = vmul.f32 %v1243, 1.442695
      %v1248 = vpow.pop %v1247
      %v1249 = vmul.f32 %v1244, 1.442695
      %v1250 = vpow.pop %v1249
      %v1251 = vmul.f32 %v1245, 1.442695
      %v1252 = vpow.pop %v1251
      %v1253 = vmul.f32 %v1246, 1.442695
      %v1254 = vpow.pop %v1253
      %v1255 = vsel %vm1161, %v1248, 0.0
      %1256 = vadd.xlane.f32.xlu0 %v1255
      %v1257 = vpop.xlane.xlu0 %1256
      %v1258 = vsel %vm1161, %v1250, 0.0
      %1259 = vadd.xlane.f32.xlu0 %v1258
      %v1260 = vpop.xlane.xlu0 %1259
      %v1261 = vsel %vm1161, %v1252, 0.0
      %1262 = vadd.xlane.f32.xlu0 %v1261
      %v1263 = vpop.xlane.xlu0 %1262
      %v1264 = vsel %vm1161, %v1254, 0.0
      %1265 = vadd.xlane.f32.xlu0 %v1264
      %v1266 = vpop.xlane.xlu0 %1265
      %v1267 = vpack.c.bf16 %v1250, %v1248
      %v1268 = vpack.c.bf16 %v1254, %v1252
      %v1270 = vsel %vm1161, %v1267, 0
      %v1273 = vsel %vm1161, %v1268, 0
      %1275 = vmatprep.subr.bf16.mxu0 0
      %1276 = vmatpush1.bf16.msra.mxu0 %v1141
      %1277 = vmatprep.subr.bf16.mxu0 0
      %1278 = vmatpush1.bf16.msra.mxu0 %v1144
      %1279 = vmatprep.subr.bf16.mxu0 0
      %1280 = vmatpush1.bf16.msra.mxu0 0
      %1281 = vmatprep.subr.bf16.mxu0 0
      %1282 = vmatpush1.bf16.msra.mxu0 0
      %1283 = vmatprep.subr.bf16.mxu0 0
      %1284 = vmatpush1.bf16.msra.mxu0 0
      %1285 = vmatprep.subr.bf16.mxu0 0
      %1286 = vmatpush1.bf16.msra.mxu0 0
      %1287 = vmatprep.subr.bf16.mxu0 0
      %1288 = vmatpush1.bf16.msra.mxu0 0
      %1289 = vmatprep.subr.bf16.mxu0 0
      %1290 = vmatpush1.bf16.msra.mxu0 0
      %1291 = vmatprep.subr.bf16.mxu0 0
      %1292 = vmatpush1.bf16.msra.mxu0 0
      %1293 = vmatprep.subr.bf16.mxu0 0
      %1294 = vmatpush1.bf16.msra.mxu0 0
      %1295 = vmatprep.subr.bf16.mxu0 0
      %1296 = vmatpush1.bf16.msra.mxu0 0
      %1297 = vmatprep.subr.bf16.mxu0 0
      %1298 = vmatpush1.bf16.msra.mxu0 0
      %1299 = vmatprep.subr.bf16.mxu0 0
      %1300 = vmatpush1.bf16.msra.mxu0 0
      %1301 = vmatprep.subr.bf16.mxu0 0
      %1302 = vmatpush1.bf16.msra.mxu0 0
      %1303 = vmatprep.subr.bf16.mxu0 0
      %1304 = vmatpush1.bf16.msra.mxu0 0
      %1305 = vmatprep.subr.bf16.mxu0 0
      %1306 = vmatpush1.bf16.msra.mxu0 0
      %1307 = vmatprep.mubr.bf16.mxu0 0
      %1308 = vmatmul.mubr.bf16.gmra.mrb[0].mxu0 %v1270
      %v1309 = vpop.f32.mrb[0].mxu0
      %v1310 = vadd.f32 0.0, %v1309
      %v1311 = vpop.f32.mrb[0].mxu0
      %v1312 = vpop.f32.mrb[0].mxu0
      %v1313 = vadd.f32 0.0, %v1312
      %v1314 = vpop.f32.mrb[0].mxu0
      %1315 = vmatprep.mubr.bf16.mxu0 0
      %1316 = vmatmul.mubr.bf16.gmra.mrb[0].mxu0 %v1273
      %v1317 = vpop.f32.mrb[0].mxu0
      %v1318 = vadd.f32 0.0, %v1317
      %v1319 = vpop.f32.mrb[0].mxu0
      %v1320 = vpop.f32.mrb[0].mxu0
      %v1321 = vadd.f32 0.0, %v1320
      %v1322 = vpop.f32.mrb[0].mxu0
      %1323 = vdwg.mxu0
      %v1324 = vrcp.pop %v1257
      %v1325 = vrcp.pop %v1260
      %v1326 = vrcp.pop %v1263
      %v1327 = vrcp.pop %v1266
      %v1328 = vmul.f32 %v1310, %v1324
      %v1329 = vmul.f32 %v1313, %v1325
      %v1330 = vmul.f32 %v1318, %v1326
      %v1331 = vmul.f32 %v1321, %v1327
      %v1332 = vpack.c.bf16 %v1329, %v1328
      %v1333 = vpack.c.bf16 %v1331, %v1330
      %1336 = vrot.lane.b32.xlu0 %v1139, 96
      %v1337 = vpop.permute.xlu0 %1336
      %1338 = vrot.lane.b32.xlu0 %v1142, 96
      %v1339 = vpop.permute.xlu0 %1338
      %1342 = vrot.lane.b32.xlu0 %v1140, 96
      %v1343 = vpop.permute.xlu0 %1342
      %1344 = vrot.lane.b32.xlu0 %v1143, 96
      %v1345 = vpop.permute.xlu0 %1344
      %v1347 = vsel %vm1161, %v1337, 0
      %v1350 = vsel %vm1161, %v1339, 0
      %v1353 = vsel %vm1161, %v1343, 0
      %v1356 = vsel %vm1161, %v1345, 0
      %1358 = vmatprep.subr.bf16.mxu0 0
      %1359 = vmatpush1.bf16.xpose.msra.mxu0 %v1353
      %1360 = vmatprep.subr.bf16.mxu0 0
      %1361 = vmatpush1.bf16.xpose.msra.mxu0 %v1356
      %1362 = vmatprep.subr.bf16.mxu0 0
      %1363 = vmatpush1.bf16.xpose.msra.mxu0 0
      %1364 = vmatprep.subr.bf16.mxu0 0
      %1365 = vmatpush1.bf16.xpose.msra.mxu0 0
      %1366 = vmatprep.subr.bf16.mxu0 0
      %1367 = vmatpush1.bf16.xpose.msra.mxu0 0
      %1368 = vmatprep.subr.bf16.mxu0 0
      %1369 = vmatpush1.bf16.xpose.msra.mxu0 0
      %1370 = vmatprep.subr.bf16.mxu0 0
      %1371 = vmatpush1.bf16.xpose.msra.mxu0 0
      %1372 = vmatprep.subr.bf16.mxu0 0
      %1373 = vmatpush1.bf16.xpose.msra.mxu0 0
      %1374 = vmatprep.subr.bf16.mxu0 0
      %1375 = vmatpush1.bf16.xpose.msra.mxu0 0
      %1376 = vmatprep.subr.bf16.mxu0 0
      %1377 = vmatpush1.bf16.xpose.msra.mxu0 0
      %1378 = vmatprep.subr.bf16.mxu0 0
      %1379 = vmatpush1.bf16.xpose.msra.mxu0 0
      %1380 = vmatprep.subr.bf16.mxu0 0
      %1381 = vmatpush1.bf16.xpose.msra.mxu0 0
      %1382 = vmatprep.subr.bf16.mxu0 0
      %1383 = vmatpush1.bf16.xpose.msra.mxu0 0
      %1384 = vmatprep.subr.bf16.mxu0 0
      %1385 = vmatpush1.bf16.xpose.msra.mxu0 0
      %1386 = vmatprep.subr.bf16.mxu0 0
      %1387 = vmatpush1.bf16.xpose.msra.mxu0 0
      %1388 = vmatprep.subr.bf16.mxu0 0
      %1389 = vmatpush1.bf16.xpose.msra.mxu0 0
      %1390 = vmatprep.mubr.bf16.mxu0 0
      %1391 = vmatmul.mubr.bf16.gmra.mrb[0].mxu0 %v1347
      %v1392 = vpop.f32.mrb[0].mxu0
      %v1393 = vadd.f32 0.0, %v1392
      %v1394 = vpop.f32.mrb[0].mxu0
      %v1395 = vpop.f32.mrb[0].mxu0
      %v1396 = vadd.f32 0.0, %v1395
      %v1397 = vpop.f32.mrb[0].mxu0
      %1398 = vmatprep.mubr.bf16.mxu0 0
      %1399 = vmatmul.mubr.bf16.gmra.mrb[0].mxu0 %v1350
      %v1400 = vpop.f32.mrb[0].mxu0
      %v1401 = vadd.f32 0.0, %v1400
      %v1402 = vpop.f32.mrb[0].mxu0
      %v1403 = vpop.f32.mrb[0].mxu0
      %v1404 = vadd.f32 0.0, %v1403
      %v1405 = vpop.f32.mrb[0].mxu0
      %1406 = vdwg.mxu0
      %v1407 = vmul.f32 %v1393, 0.17677669
      %v1408 = vmul.f32 %v1396, 0.17677669
      %v1409 = vmul.f32 %v1401, 0.17677669
      %v1410 = vmul.f32 %v1404, 0.17677669
      %v1411 = vadd.f32 %v1407, %v782
      %v1412 = vadd.f32 %v1408, %v782
      %v1413 = vadd.f32 %v1409, %v782
      %v1414 = vadd.f32 %v1410, %v782
      %v1415 = vsel %vm1161, %v1411, -inf
      %1416 = vmax.xlane.f32.xlu0 %v1415
      %v1417 = vpop.xlane.xlu0 %1416
      %v1418 = vsel %vm1161, %v1412, -inf
      %1419 = vmax.xlane.f32.xlu0 %v1418
      %v1420 = vpop.xlane.xlu0 %1419
      %v1421 = vsel %vm1161, %v1413, -inf
      %1422 = vmax.xlane.f32.xlu0 %v1421
      %v1423 = vpop.xlane.xlu0 %1422
      %v1424 = vsel %vm1161, %v1414, -inf
      %1425 = vmax.xlane.f32.xlu0 %v1424
      %v1426 = vpop.xlane.xlu0 %1425
      %v1427 = vsub.f32 %v1411, %v1417
      %v1428 = vsub.f32 %v1412, %v1420
      %v1429 = vsub.f32 %v1413, %v1423
      %v1430 = vsub.f32 %v1414, %v1426
      %v1431 = vmul.f32 %v1427, 1.442695
      %v1432 = vpow.pop %v1431
      %v1433 = vmul.f32 %v1428, 1.442695
      %v1434 = vpow.pop %v1433
      %v1435 = vmul.f32 %v1429, 1.442695
      %v1436 = vpow.pop %v1435
      %v1437 = vmul.f32 %v1430, 1.442695
      %v1438 = vpow.pop %v1437
      %v1439 = vsel %vm1161, %v1432, 0.0
      %1440 = vadd.xlane.f32.xlu0 %v1439
      %v1441 = vpop.xlane.xlu0 %1440
      %v1442 = vsel %vm1161, %v1434, 0.0
      %1443 = vadd.xlane.f32.xlu0 %v1442
      %v1444 = vpop.xlane.xlu0 %1443
      %v1445 = vsel %vm1161, %v1436, 0.0
      %1446 = vadd.xlane.f32.xlu0 %v1445
      %v1447 = vpop.xlane.xlu0 %1446
      %v1448 = vsel %vm1161, %v1438, 0.0
      %1449 = vadd.xlane.f32.xlu0 %v1448
      %v1450 = vpop.xlane.xlu0 %1449
      %v1451 = vpack.c.bf16 %v1434, %v1432
      %v1452 = vpack.c.bf16 %v1438, %v1436
      %1455 = vrot.lane.b32.xlu0 %v1141, 96
      %v1456 = vpop.permute.xlu0 %1455
      %1457 = vrot.lane.b32.xlu0 %v1144, 96
      %v1458 = vpop.permute.xlu0 %1457
      %v1462 = vsel %vm1161, %v1451, 0
      %v1465 = vsel %vm1161, %v1452, 0
      %1467 = vmatprep.subr.bf16.mxu0 0
      %1468 = vmatpush1.bf16.msra.mxu0 %v1456
      %1469 = vmatprep.subr.bf16.mxu0 0
      %1470 = vmatpush1.bf16.msra.mxu0 %v1458
      %1471 = vmatprep.subr.bf16.mxu0 0
      %1472 = vmatpush1.bf16.msra.mxu0 0
      %1473 = vmatprep.subr.bf16.mxu0 0
      %1474 = vmatpush1.bf16.msra.mxu0 0
      %1475 = vmatprep.subr.bf16.mxu0 0
      %1476 = vmatpush1.bf16.msra.mxu0 0
      %1477 = vmatprep.subr.bf16.mxu0 0
      %1478 = vmatpush1.bf16.msra.mxu0 0
      %1479 = vmatprep.subr.bf16.mxu0 0
      %1480 = vmatpush1.bf16.msra.mxu0 0
      %1481 = vmatprep.subr.bf16.mxu0 0
      %1482 = vmatpush1.bf16.msra.mxu0 0
      %1483 = vmatprep.subr.bf16.mxu0 0
      %1484 = vmatpush1.bf16.msra.mxu0 0
      %1485 = vmatprep.subr.bf16.mxu0 0
      %1486 = vmatpush1.bf16.msra.mxu0 0
      %1487 = vmatprep.subr.bf16.mxu0 0
      %1488 = vmatpush1.bf16.msra.mxu0 0
      %1489 = vmatprep.subr.bf16.mxu0 0
      %1490 = vmatpush1.bf16.msra.mxu0 0
      %1491 = vmatprep.subr.bf16.mxu0 0
      %1492 = vmatpush1.bf16.msra.mxu0 0
      %1493 = vmatprep.subr.bf16.mxu0 0
      %1494 = vmatpush1.bf16.msra.mxu0 0
      %1495 = vmatprep.subr.bf16.mxu0 0
      %1496 = vmatpush1.bf16.msra.mxu0 0
      %1497 = vmatprep.subr.bf16.mxu0 0
      %1498 = vmatpush1.bf16.msra.mxu0 0
      %1499 = vmatprep.mubr.bf16.mxu0 0
      %1500 = vmatmul.mubr.bf16.gmra.mrb[0].mxu0 %v1462
      %v1501 = vpop.f32.mrb[0].mxu0
      %v1502 = vadd.f32 0.0, %v1501
      %v1503 = vpop.f32.mrb[0].mxu0
      %v1504 = vpop.f32.mrb[0].mxu0
      %v1505 = vadd.f32 0.0, %v1504
      %v1506 = vpop.f32.mrb[0].mxu0
      %1507 = vmatprep.mubr.bf16.mxu0 0
      %1508 = vmatmul.mubr.bf16.gmra.mrb[0].mxu0 %v1465
      %v1509 = vpop.f32.mrb[0].mxu0
      %v1510 = vadd.f32 0.0, %v1509
      %v1511 = vpop.f32.mrb[0].mxu0
      %v1512 = vpop.f32.mrb[0].mxu0
      %v1513 = vadd.f32 0.0, %v1512
      %v1514 = vpop.f32.mrb[0].mxu0
      %1515 = vdwg.mxu0
      %v1516 = vrcp.pop %v1441
      %v1517 = vrcp.pop %v1444
      %v1518 = vrcp.pop %v1447
      %v1519 = vrcp.pop %v1450
      %v1520 = vmul.f32 %v1502, %v1516
      %v1521 = vmul.f32 %v1505, %v1517
      %v1522 = vmul.f32 %v1510, %v1518
      %v1523 = vmul.f32 %v1513, %v1519
      %v1524 = vpack.c.bf16 %v1521, %v1520
      %v1525 = vpack.c.bf16 %v1523, %v1522
      %v1530 = vunpack.c.l.b16 %v1149
      %v1531 = vunpack.c.l.b16 %v1150
      %v1532 = vunpack.c.l.b16 %v1151
      %v1533 = vunpack.c.l.b16 %v1152
      %v1534 = vpack.c.b16 %v1531, %v1530
      %v1535 = vpack.c.b16 %v1533, %v1532
      %v1539 = vsel %vm1161, %v1524, 0
      %v1542 = vsel %vm1161, %v1525, 0
      %1544 = vmatprep.subr.bf16.mxu0 0
      %1545 = vmatpush1.bf16.msra.mxu0 %v1534
      %1546 = vmatprep.subr.bf16.mxu0 0
      %1547 = vmatpush1.bf16.msra.mxu0 %v1535
      %1548 = vmatprep.subr.bf16.mxu0 0
      %1549 = vmatpush1.bf16.msra.mxu0 0
      %1550 = vmatprep.subr.bf16.mxu0 0
      %1551 = vmatpush1.bf16.msra.mxu0 0
      %1552 = vmatprep.subr.bf16.mxu0 0
      %1553 = vmatpush1.bf16.msra.mxu0 0
      %1554 = vmatprep.subr.bf16.mxu0 0
      %1555 = vmatpush1.bf16.msra.mxu0 0
      %1556 = vmatprep.subr.bf16.mxu0 0
      %1557 = vmatpush1.bf16.msra.mxu0 0
      %1558 = vmatprep.subr.bf16.mxu0 0
      %1559 = vmatpush1.bf16.msra.mxu0 0
      %1560 = vmatprep.subr.bf16.mxu0 0
      %1561 = vmatpush1.bf16.msra.mxu0 0
      %1562 = vmatprep.subr.bf16.mxu0 0
      %1563 = vmatpush1.bf16.msra.mxu0 0
      %1564 = vmatprep.subr.bf16.mxu0 0
      %1565 = vmatpush1.bf16.msra.mxu0 0
      %1566 = vmatprep.subr.bf16.mxu0 0
      %1567 = vmatpush1.bf16.msra.mxu0 0
      %1568 = vmatprep.subr.bf16.mxu0 0
      %1569 = vmatpush1.bf16.msra.mxu0 0
      %1570 = vmatprep.subr.bf16.mxu0 0
      %1571 = vmatpush1.bf16.msra.mxu0 0
      %1572 = vmatprep.subr.bf16.mxu0 0
      %1573 = vmatpush1.bf16.msra.mxu0 0
      %1574 = vmatprep.subr.bf16.mxu0 0
      %1575 = vmatpush1.bf16.msra.mxu0 0
      %1576 = vmatprep.mubr.bf16.mxu0 0
      %1577 = vmatmul.mubr.bf16.gmra.mrb[0].mxu0 %v1539
      %v1578 = vpop.f32.mrb[0].mxu0
      %v1579 = vadd.f32 0.0, %v1578
      %v1580 = vpop.f32.mrb[0].mxu0
      %v1581 = vpop.f32.mrb[0].mxu0
      %v1582 = vadd.f32 0.0, %v1581
      %v1583 = vpop.f32.mrb[0].mxu0
      %1584 = vmatprep.mubr.bf16.mxu0 0
      %1585 = vmatmul.mubr.bf16.gmra.mrb[0].mxu0 %v1542
      %v1586 = vpop.f32.mrb[0].mxu0
      %v1587 = vadd.f32 0.0, %v1586
      %v1588 = vpop.f32.mrb[0].mxu0
      %v1589 = vpop.f32.mrb[0].mxu0
      %v1590 = vadd.f32 0.0, %v1589
      %v1591 = vpop.f32.mrb[0].mxu0
      %1592 = vdwg.mxu0
      %v1597 = vunpack.c.l.b16 %v1145
      %v1598 = vunpack.c.l.b16 %v1146
      %v1599 = vunpack.c.l.b16 %v1147
      %v1600 = vunpack.c.l.b16 %v1148
      %v1601 = vpack.c.b16 %v1598, %v1597
      %v1602 = vpack.c.b16 %v1600, %v1599
      %v1606 = vsel %vm1161, %v1332, 0
      %v1609 = vsel %vm1161, %v1333, 0
      %1611 = vmatprep.subr.bf16.mxu0 0
      %1612 = vmatpush1.bf16.msra.mxu0 %v1601
      %1613 = vmatprep.subr.bf16.mxu0 0
      %1614 = vmatpush1.bf16.msra.mxu0 %v1602
      %1615 = vmatprep.subr.bf16.mxu0 0
      %1616 = vmatpush1.bf16.msra.mxu0 0
      %1617 = vmatprep.subr.bf16.mxu0 0
      %1618 = vmatpush1.bf16.msra.mxu0 0
      %1619 = vmatprep.subr.bf16.mxu0 0
      %1620 = vmatpush1.bf16.msra.mxu0 0
      %1621 = vmatprep.subr.bf16.mxu0 0
      %1622 = vmatpush1.bf16.msra.mxu0 0
      %1623 = vmatprep.subr.bf16.mxu0 0
      %1624 = vmatpush1.bf16.msra.mxu0 0
      %1625 = vmatprep.subr.bf16.mxu0 0
      %1626 = vmatpush1.bf16.msra.mxu0 0
      %1627 = vmatprep.subr.bf16.mxu0 0
      %1628 = vmatpush1.bf16.msra.mxu0 0
      %1629 = vmatprep.subr.bf16.mxu0 0
      %1630 = vmatpush1.bf16.msra.mxu0 0
      %1631 = vmatprep.subr.bf16.mxu0 0
      %1632 = vmatpush1.bf16.msra.mxu0 0
      %1633 = vmatprep.subr.bf16.mxu0 0
      %1634 = vmatpush1.bf16.msra.mxu0 0
      %1635 = vmatprep.subr.bf16.mxu0 0
      %1636 = vmatpush1.bf16.msra.mxu0 0
      %1637 = vmatprep.subr.bf16.mxu0 0
      %1638 = vmatpush1.bf16.msra.mxu0 0
      %1639 = vmatprep.subr.bf16.mxu0 0
      %1640 = vmatpush1.bf16.msra.mxu0 0
      %1641 = vmatprep.subr.bf16.mxu0 0
      %1642 = vmatpush1.bf16.msra.mxu0 0
      %1643 = vmatprep.mubr.bf16.mxu0 0
      %1644 = vmatmul.mubr.bf16.gmra.mrb[0].mxu0 %v1606
      %v1645 = vpop.f32.mrb[0].mxu0
      %v1646 = vadd.f32 %v1579, %v1645
      %v1647 = vpop.f32.mrb[0].mxu0
      %v1648 = vpop.f32.mrb[0].mxu0
      %v1649 = vadd.f32 %v1582, %v1648
      %v1650 = vpop.f32.mrb[0].mxu0
      %1651 = vmatprep.mubr.bf16.mxu0 0
      %1652 = vmatmul.mubr.bf16.gmra.mrb[0].mxu0 %v1609
      %v1653 = vpop.f32.mrb[0].mxu0
      %v1654 = vadd.f32 %v1587, %v1653
      %v1655 = vpop.f32.mrb[0].mxu0
      %v1656 = vpop.f32.mrb[0].mxu0
      %v1657 = vadd.f32 %v1590, %v1656
      %v1658 = vpop.f32.mrb[0].mxu0
      %1659 = vdwg.mxu0
      %1660 = vrot.lane.b32.xlu0 %v1139, 64
      %v1661 = vpop.permute.xlu0 %1660
      %1662 = vrot.lane.b32.xlu0 %v1142, 64
      %v1663 = vpop.permute.xlu0 %1662
      %1664 = vrot.lane.b32.xlu0 %v1140, 64
      %v1665 = vpop.permute.xlu0 %1664
      %1666 = vrot.lane.b32.xlu0 %v1143, 64
      %v1667 = vpop.permute.xlu0 %1666
      %v1669 = vsel %vm1161, %v1661, 0
      %v1672 = vsel %vm1161, %v1663, 0
      %v1675 = vsel %vm1161, %v1665, 0
      %v1678 = vsel %vm1161, %v1667, 0
      %1680 = vmatprep.subr.bf16.mxu0 0
      %1681 = vmatpush1.bf16.xpose.msra.mxu0 %v1675
      %1682 = vmatprep.subr.bf16.mxu0 0
      %1683 = vmatpush1.bf16.xpose.msra.mxu0 %v1678
      %1684 = vmatprep.subr.bf16.mxu0 0
      %1685 = vmatpush1.bf16.xpose.msra.mxu0 0
      %1686 = vmatprep.subr.bf16.mxu0 0
      %1687 = vmatpush1.bf16.xpose.msra.mxu0 0
      %1688 = vmatprep.subr.bf16.mxu0 0
      %1689 = vmatpush1.bf16.xpose.msra.mxu0 0
      %1690 = vmatprep.subr.bf16.mxu0 0
      %1691 = vmatpush1.bf16.xpose.msra.mxu0 0
      %1692 = vmatprep.subr.bf16.mxu0 0
      %1693 = vmatpush1.bf16.xpose.msra.mxu0 0
      %1694 = vmatprep.subr.bf16.mxu0 0
      %1695 = vmatpush1.bf16.xpose.msra.mxu0 0
      %1696 = vmatprep.subr.bf16.mxu0 0
      %1697 = vmatpush1.bf16.xpose.msra.mxu0 0
      %1698 = vmatprep.subr.bf16.mxu0 0
      %1699 = vmatpush1.bf16.xpose.msra.mxu0 0
      %1700 = vmatprep.subr.bf16.mxu0 0
      %1701 = vmatpush1.bf16.xpose.msra.mxu0 0
      %1702 = vmatprep.subr.bf16.mxu0 0
      %1703 = vmatpush1.bf16.xpose.msra.mxu0 0
      %1704 = vmatprep.subr.bf16.mxu0 0
      %1705 = vmatpush1.bf16.xpose.msra.mxu0 0
      %1706 = vmatprep.subr.bf16.mxu0 0
      %1707 = vmatpush1.bf16.xpose.msra.mxu0 0
      %1708 = vmatprep.subr.bf16.mxu0 0
      %1709 = vmatpush1.bf16.xpose.msra.mxu0 0
      %1710 = vmatprep.subr.bf16.mxu0 0
      %1711 = vmatpush1.bf16.xpose.msra.mxu0 0
      %1712 = vmatprep.mubr.bf16.mxu0 0
      %1713 = vmatmul.mubr.bf16.gmra.mrb[0].mxu0 %v1669
      %v1714 = vpop.f32.mrb[0].mxu0
      %v1715 = vadd.f32 0.0, %v1714
      %v1716 = vpop.f32.mrb[0].mxu0
      %v1717 = vpop.f32.mrb[0].mxu0
      %v1718 = vadd.f32 0.0, %v1717
      %v1719 = vpop.f32.mrb[0].mxu0
      %1720 = vmatprep.mubr.bf16.mxu0 0
      %1721 = vmatmul.mubr.bf16.gmra.mrb[0].mxu0 %v1672
      %v1722 = vpop.f32.mrb[0].mxu0
      %v1723 = vadd.f32 0.0, %v1722
      %v1724 = vpop.f32.mrb[0].mxu0
      %v1725 = vpop.f32.mrb[0].mxu0
      %v1726 = vadd.f32 0.0, %v1725
      %v1727 = vpop.f32.mrb[0].mxu0
      %1728 = vdwg.mxu0
      %v1729 = vmul.f32 %v1715, 0.17677669
      %v1730 = vmul.f32 %v1718, 0.17677669
      %v1731 = vmul.f32 %v1723, 0.17677669
      %v1732 = vmul.f32 %v1726, 0.17677669
      %v1733 = vadd.f32 %v1729, %v782
      %v1734 = vadd.f32 %v1730, %v782
      %v1735 = vadd.f32 %v1731, %v782
      %v1736 = vadd.f32 %v1732, %v782
      %v1737 = vsel %vm1161, %v1733, -inf
      %1738 = vmax.xlane.f32.xlu0 %v1737
      %v1739 = vpop.xlane.xlu0 %1738
      %v1740 = vsel %vm1161, %v1734, -inf
      %1741 = vmax.xlane.f32.xlu0 %v1740
      %v1742 = vpop.xlane.xlu0 %1741
      %v1743 = vsel %vm1161, %v1735, -inf
      %1744 = vmax.xlane.f32.xlu0 %v1743
      %v1745 = vpop.xlane.xlu0 %1744
      %v1746 = vsel %vm1161, %v1736, -inf
      %1747 = vmax.xlane.f32.xlu0 %v1746
      %v1748 = vpop.xlane.xlu0 %1747
      %v1749 = vsub.f32 %v1733, %v1739
      %v1750 = vsub.f32 %v1734, %v1742
      %v1751 = vsub.f32 %v1735, %v1745
      %v1752 = vsub.f32 %v1736, %v1748
      %v1753 = vmul.f32 %v1749, 1.442695
      %v1754 = vpow.pop %v1753
      %v1755 = vmul.f32 %v1750, 1.442695
      %v1756 = vpow.pop %v1755
      %v1757 = vmul.f32 %v1751, 1.442695
      %v1758 = vpow.pop %v1757
      %v1759 = vmul.f32 %v1752, 1.442695
      %v1760 = vpow.pop %v1759
      %v1761 = vsel %vm1161, %v1754, 0.0
      %1762 = vadd.xlane.f32.xlu0 %v1761
      %v1763 = vpop.xlane.xlu0 %1762
      %v1764 = vsel %vm1161, %v1756, 0.0
      %1765 = vadd.xlane.f32.xlu0 %v1764
      %v1766 = vpop.xlane.xlu0 %1765
      %v1767 = vsel %vm1161, %v1758, 0.0
      %1768 = vadd.xlane.f32.xlu0 %v1767
      %v1769 = vpop.xlane.xlu0 %1768
      %v1770 = vsel %vm1161, %v1760, 0.0
      %1771 = vadd.xlane.f32.xlu0 %v1770
      %v1772 = vpop.xlane.xlu0 %1771
      %v1773 = vpack.c.bf16 %v1756, %v1754
      %v1774 = vpack.c.bf16 %v1760, %v1758
      %1775 = vrot.lane.b32.xlu0 %v1141, 64
      %v1776 = vpop.permute.xlu0 %1775
      %1777 = vrot.lane.b32.xlu0 %v1144, 64
      %v1778 = vpop.permute.xlu0 %1777
      %v1782 = vsel %vm1161, %v1773, 0
      %v1785 = vsel %vm1161, %v1774, 0
      %1787 = vmatprep.subr.bf16.mxu0 0
      %1788 = vmatpush1.bf16.msra.mxu0 %v1776
      %1789 = vmatprep.subr.bf16.mxu0 0
      %1790 = vmatpush1.bf16.msra.mxu0 %v1778
      %1791 = vmatprep.subr.bf16.mxu0 0
      %1792 = vmatpush1.bf16.msra.mxu0 0
      %1793 = vmatprep.subr.bf16.mxu0 0
      %1794 = vmatpush1.bf16.msra.mxu0 0
      %1795 = vmatprep.subr.bf16.mxu0 0
      %1796 = vmatpush1.bf16.msra.mxu0 0
      %1797 = vmatprep.subr.bf16.mxu0 0
      %1798 = vmatpush1.bf16.msra.mxu0 0
      %1799 = vmatprep.subr.bf16.mxu0 0
      %1800 = vmatpush1.bf16.msra.mxu0 0
      %1801 = vmatprep.subr.bf16.mxu0 0
      %1802 = vmatpush1.bf16.msra.mxu0 0
      %1803 = vmatprep.subr.bf16.mxu0 0
      %1804 = vmatpush1.bf16.msra.mxu0 0
      %1805 = vmatprep.subr.bf16.mxu0 0
      %1806 = vmatpush1.bf16.msra.mxu0 0
      %1807 = vmatprep.subr.bf16.mxu0 0
      %1808 = vmatpush1.bf16.msra.mxu0 0
      %1809 = vmatprep.subr.bf16.mxu0 0
      %1810 = vmatpush1.bf16.msra.mxu0 0
      %1811 = vmatprep.subr.bf16.mxu0 0
      %1812 = vmatpush1.bf16.msra.mxu0 0
      %1813 = vmatprep.subr.bf16.mxu0 0
      %1814 = vmatpush1.bf16.msra.mxu0 0
      %1815 = vmatprep.subr.bf16.mxu0 0
      %1816 = vmatpush1.bf16.msra.mxu0 0
      %1817 = vmatprep.subr.bf16.mxu0 0
      %1818 = vmatpush1.bf16.msra.mxu0 0
      %1819 = vmatprep.mubr.bf16.mxu0 0
      %1820 = vmatmul.mubr.bf16.gmra.mrb[0].mxu0 %v1782
      %v1821 = vpop.f32.mrb[0].mxu0
      %v1822 = vadd.f32 0.0, %v1821
      %v1823 = vpop.f32.mrb[0].mxu0
      %v1824 = vpop.f32.mrb[0].mxu0
      %v1825 = vadd.f32 0.0, %v1824
      %v1826 = vpop.f32.mrb[0].mxu0
      %1827 = vmatprep.mubr.bf16.mxu0 0
      %1828 = vmatmul.mubr.bf16.gmra.mrb[0].mxu0 %v1785
      %v1829 = vpop.f32.mrb[0].mxu0
      %v1830 = vadd.f32 0.0, %v1829
      %v1831 = vpop.f32.mrb[0].mxu0
      %v1832 = vpop.f32.mrb[0].mxu0
      %v1833 = vadd.f32 0.0, %v1832
      %v1834 = vpop.f32.mrb[0].mxu0
      %1835 = vdwg.mxu0
      %v1836 = vrcp.pop %v1763
      %v1837 = vrcp.pop %v1766
      %v1838 = vrcp.pop %v1769
      %v1839 = vrcp.pop %v1772
      %v1840 = vmul.f32 %v1822, %v1836
      %v1841 = vmul.f32 %v1825, %v1837
      %v1842 = vmul.f32 %v1830, %v1838
      %v1843 = vmul.f32 %v1833, %v1839
      %v1844 = vpack.c.bf16 %v1841, %v1840
      %v1845 = vpack.c.bf16 %v1843, %v1842
      %v1850 = vunpack.c.l.b16 %v1153
      %v1851 = vunpack.c.l.b16 %v1154
      %v1852 = vunpack.c.l.b16 %v1155
      %v1853 = vunpack.c.l.b16 %v1156
      %v1854 = vpack.c.b16 %v1851, %v1850
      %v1855 = vpack.c.b16 %v1853, %v1852
      %v1859 = vsel %vm1161, %v1844, 0
      %v1862 = vsel %vm1161, %v1845, 0
      %1864 = vmatprep.subr.bf16.mxu0 0
      %1865 = vmatpush1.bf16.msra.mxu0 %v1854
      %1866 = vmatprep.subr.bf16.mxu0 0
      %1867 = vmatpush1.bf16.msra.mxu0 %v1855
      %1868 = vmatprep.subr.bf16.mxu0 0
      %1869 = vmatpush1.bf16.msra.mxu0 0
      %1870 = vmatprep.subr.bf16.mxu0 0
      %1871 = vmatpush1.bf16.msra.mxu0 0
      %1872 = vmatprep.subr.bf16.mxu0 0
      %1873 = vmatpush1.bf16.msra.mxu0 0
      %1874 = vmatprep.subr.bf16.mxu0 0
      %1875 = vmatpush1.bf16.msra.mxu0 0
      %1876 = vmatprep.subr.bf16.mxu0 0
      %1877 = vmatpush1.bf16.msra.mxu0 0
      %1878 = vmatprep.subr.bf16.mxu0 0
      %1879 = vmatpush1.bf16.msra.mxu0 0
      %1880 = vmatprep.subr.bf16.mxu0 0
      %1881 = vmatpush1.bf16.msra.mxu0 0
      %1882 = vmatprep.subr.bf16.mxu0 0
      %1883 = vmatpush1.bf16.msra.mxu0 0
      %1884 = vmatprep.subr.bf16.mxu0 0
      %1885 = vmatpush1.bf16.msra.mxu0 0
      %1886 = vmatprep.subr.bf16.mxu0 0
      %1887 = vmatpush1.bf16.msra.mxu0 0
      %1888 = vmatprep.subr.bf16.mxu0 0
      %1889 = vmatpush1.bf16.msra.mxu0 0
      %1890 = vmatprep.subr.bf16.mxu0 0
      %1891 = vmatpush1.bf16.msra.mxu0 0
      %1892 = vmatprep.subr.bf16.mxu0 0
      %1893 = vmatpush1.bf16.msra.mxu0 0
      %1894 = vmatprep.subr.bf16.mxu0 0
      %1895 = vmatpush1.bf16.msra.mxu0 0
      %1896 = vmatprep.mubr.bf16.mxu0 0
      %1897 = vmatmul.mubr.bf16.gmra.mrb[0].mxu0 %v1859
      %v1898 = vpop.f32.mrb[0].mxu0
      %v1899 = vadd.f32 0.0, %v1898
      %v1900 = vpop.f32.mrb[0].mxu0
      %v1901 = vpop.f32.mrb[0].mxu0
      %v1902 = vadd.f32 0.0, %v1901
      %v1903 = vpop.f32.mrb[0].mxu0
      %1904 = vmatprep.mubr.bf16.mxu0 0
      %1905 = vmatmul.mubr.bf16.gmra.mrb[0].mxu0 %v1862
      %v1906 = vpop.f32.mrb[0].mxu0
      %v1907 = vadd.f32 0.0, %v1906
      %v1908 = vpop.f32.mrb[0].mxu0
      %v1909 = vpop.f32.mrb[0].mxu0
      %v1910 = vadd.f32 0.0, %v1909
      %v1911 = vpop.f32.mrb[0].mxu0
      %1912 = vdwg.mxu0
      %v1913 = vadd.f32 %v1646, %v1899
      %v1914 = vadd.f32 %v1649, %v1902
      %v1915 = vadd.f32 %v1654, %v1907
      %v1916 = vadd.f32 %v1657, %v1910
      %1917 = vrot.lane.b32.xlu0 %v1139, 32
      %v1918 = vpop.permute.xlu0 %1917
      %1919 = vrot.lane.b32.xlu0 %v1142, 32
      %v1920 = vpop.permute.xlu0 %1919
      %1921 = vrot.lane.b32.xlu0 %v1140, 32
      %v1922 = vpop.permute.xlu0 %1921
      %1923 = vrot.lane.b32.xlu0 %v1143, 32
      %v1924 = vpop.permute.xlu0 %1923
      %v1926 = vsel %vm1161, %v1918, 0
      %v1929 = vsel %vm1161, %v1920, 0
      %v1932 = vsel %vm1161, %v1922, 0
      %v1935 = vsel %vm1161, %v1924, 0
      %1937 = vmatprep.subr.bf16.mxu0 0
      %1938 = vmatpush1.bf16.xpose.msra.mxu0 %v1932
      %1939 = vmatprep.subr.bf16.mxu0 0
      %1940 = vmatpush1.bf16.xpose.msra.mxu0 %v1935
      %1941 = vmatprep.subr.bf16.mxu0 0
      %1942 = vmatpush1.bf16.xpose.msra.mxu0 0
      %1943 = vmatprep.subr.bf16.mxu0 0
      %1944 = vmatpush1.bf16.xpose.msra.mxu0 0
      %1945 = vmatprep.subr.bf16.mxu0 0
      %1946 = vmatpush1.bf16.xpose.msra.mxu0 0
      %1947 = vmatprep.subr.bf16.mxu0 0
      %1948 = vmatpush1.bf16.xpose.msra.mxu0 0
      %1949 = vmatprep.subr.bf16.mxu0 0
      %1950 = vmatpush1.bf16.xpose.msra.mxu0 0
      %1951 = vmatprep.subr.bf16.mxu0 0
      %1952 = vmatpush1.bf16.xpose.msra.mxu0 0
      %1953 = vmatprep.subr.bf16.mxu0 0
      %1954 = vmatpush1.bf16.xpose.msra.mxu0 0
      %1955 = vmatprep.subr.bf16.mxu0 0
      %1956 = vmatpush1.bf16.xpose.msra.mxu0 0
      %1957 = vmatprep.subr.bf16.mxu0 0
      %1958 = vmatpush1.bf16.xpose.msra.mxu0 0
      %1959 = vmatprep.subr.bf16.mxu0 0
      %1960 = vmatpush1.bf16.xpose.msra.mxu0 0
      %1961 = vmatprep.subr.bf16.mxu0 0
      %1962 = vmatpush1.bf16.xpose.msra.mxu0 0
      %1963 = vmatprep.subr.bf16.mxu0 0
      %1964 = vmatpush1.bf16.xpose.msra.mxu0 0
      %1965 = vmatprep.subr.bf16.mxu0 0
      %1966 = vmatpush1.bf16.xpose.msra.mxu0 0
      %1967 = vmatprep.subr.bf16.mxu0 0
      %1968 = vmatpush1.bf16.xpose.msra.mxu0 0
      %1969 = vmatprep.mubr.bf16.mxu0 0
      %1970 = vmatmul.mubr.bf16.gmra.mrb[0].mxu0 %v1926
      %v1971 = vpop.f32.mrb[0].mxu0
      %v1972 = vadd.f32 0.0, %v1971
      %v1973 = vpop.f32.mrb[0].mxu0
      %v1974 = vpop.f32.mrb[0].mxu0
      %v1975 = vadd.f32 0.0, %v1974
      %v1976 = vpop.f32.mrb[0].mxu0
      %1977 = vmatprep.mubr.bf16.mxu0 0
      %1978 = vmatmul.mubr.bf16.gmra.mrb[0].mxu0 %v1929
      %v1979 = vpop.f32.mrb[0].mxu0
      %v1980 = vadd.f32 0.0, %v1979
      %v1981 = vpop.f32.mrb[0].mxu0
      %v1982 = vpop.f32.mrb[0].mxu0
      %v1983 = vadd.f32 0.0, %v1982
      %v1984 = vpop.f32.mrb[0].mxu0
      %1985 = vdwg.mxu0
      %v1986 = vmul.f32 %v1972, 0.17677669
      %v1987 = vmul.f32 %v1975, 0.17677669
      %v1988 = vmul.f32 %v1980, 0.17677669
      %v1989 = vmul.f32 %v1983, 0.17677669
      %v1990 = vadd.f32 %v1986, %v782
      %v1991 = vadd.f32 %v1987, %v782
      %v1992 = vadd.f32 %v1988, %v782
      %v1993 = vadd.f32 %v1989, %v782
      %v1994 = vsel %vm1161, %v1990, -inf
      %1995 = vmax.xlane.f32.xlu0 %v1994
      %v1996 = vpop.xlane.xlu0 %1995
      %v1997 = vsel %vm1161, %v1991, -inf
      %1998 = vmax.xlane.f32.xlu0 %v1997
      %v1999 = vpop.xlane.xlu0 %1998
      %v2000 = vsel %vm1161, %v1992, -inf
      %2001 = vmax.xlane.f32.xlu0 %v2000
      %v2002 = vpop.xlane.xlu0 %2001
      %v2003 = vsel %vm1161, %v1993, -inf
      %2004 = vmax.xlane.f32.xlu0 %v2003
      %v2005 = vpop.xlane.xlu0 %2004
      %v2006 = vsub.f32 %v1990, %v1996
      %v2007 = vsub.f32 %v1991, %v1999
      %v2008 = vsub.f32 %v1992, %v2002
      %v2009 = vsub.f32 %v1993, %v2005
      %v2010 = vmul.f32 %v2006, 1.442695
      %v2011 = vpow.pop %v2010
      %v2012 = vmul.f32 %v2007, 1.442695
      %v2013 = vpow.pop %v2012
      %v2014 = vmul.f32 %v2008, 1.442695
      %v2015 = vpow.pop %v2014
      %v2016 = vmul.f32 %v2009, 1.442695
      %v2017 = vpow.pop %v2016
      %v2018 = vsel %vm1161, %v2011, 0.0
      %2019 = vadd.xlane.f32.xlu0 %v2018
      %v2020 = vpop.xlane.xlu0 %2019
      %v2021 = vsel %vm1161, %v2013, 0.0
      %2022 = vadd.xlane.f32.xlu0 %v2021
      %v2023 = vpop.xlane.xlu0 %2022
      %v2024 = vsel %vm1161, %v2015, 0.0
      %2025 = vadd.xlane.f32.xlu0 %v2024
      %v2026 = vpop.xlane.xlu0 %2025
      %v2027 = vsel %vm1161, %v2017, 0.0
      %2028 = vadd.xlane.f32.xlu0 %v2027
      %v2029 = vpop.xlane.xlu0 %2028
      %v2030 = vpack.c.bf16 %v2013, %v2011
      %v2031 = vpack.c.bf16 %v2017, %v2015
      %2032 = vrot.lane.b32.xlu0 %v1141, 32
      %v2033 = vpop.permute.xlu0 %2032
      %2034 = vrot.lane.b32.xlu0 %v1144, 32
      %v2035 = vpop.permute.xlu0 %2034
      %v2039 = vsel %vm1161, %v2030, 0
      %v2042 = vsel %vm1161, %v2031, 0
      %2044 = vmatprep.subr.bf16.mxu0 0
      %2045 = vmatpush1.bf16.msra.mxu0 %v2033
      %2046 = vmatprep.subr.bf16.mxu0 0
      %2047 = vmatpush1.bf16.msra.mxu0 %v2035
      %2048 = vmatprep.subr.bf16.mxu0 0
      %2049 = vmatpush1.bf16.msra.mxu0 0
      %2050 = vmatprep.subr.bf16.mxu0 0
      %2051 = vmatpush1.bf16.msra.mxu0 0
      %2052 = vmatprep.subr.bf16.mxu0 0
      %2053 = vmatpush1.bf16.msra.mxu0 0
      %2054 = vmatprep.subr.bf16.mxu0 0
      %2055 = vmatpush1.bf16.msra.mxu0 0
      %2056 = vmatprep.subr.bf16.mxu0 0
      %2057 = vmatpush1.bf16.msra.mxu0 0
      %2058 = vmatprep.subr.bf16.mxu0 0
      %2059 = vmatpush1.bf16.msra.mxu0 0
      %2060 = vmatprep.subr.bf16.mxu0 0
      %2061 = vmatpush1.bf16.msra.mxu0 0
      %2062 = vmatprep.subr.bf16.mxu0 0
      %2063 = vmatpush1.bf16.msra.mxu0 0
      %2064 = vmatprep.subr.bf16.mxu0 0
      %2065 = vmatpush1.bf16.msra.mxu0 0
      %2066 = vmatprep.subr.bf16.mxu0 0
      %2067 = vmatpush1.bf16.msra.mxu0 0
      %2068 = vmatprep.subr.bf16.mxu0 0
      %2069 = vmatpush1.bf16.msra.mxu0 0
      %2070 = vmatprep.subr.bf16.mxu0 0
      %2071 = vmatpush1.bf16.msra.mxu0 0
      %2072 = vmatprep.subr.bf16.mxu0 0
      %2073 = vmatpush1.bf16.msra.mxu0 0
      %2074 = vmatprep.subr.bf16.mxu0 0
      %2075 = vmatpush1.bf16.msra.mxu0 0
      %2076 = vmatprep.mubr.bf16.mxu0 0
      %2077 = vmatmul.mubr.bf16.gmra.mrb[0].mxu0 %v2039
      %v2078 = vpop.f32.mrb[0].mxu0
      %v2079 = vadd.f32 0.0, %v2078
      %v2080 = vpop.f32.mrb[0].mxu0
      %v2081 = vpop.f32.mrb[0].mxu0
      %v2082 = vadd.f32 0.0, %v2081
      %v2083 = vpop.f32.mrb[0].mxu0
      %2084 = vmatprep.mubr.bf16.mxu0 0
      %2085 = vmatmul.mubr.bf16.gmra.mrb[0].mxu0 %v2042
      %v2086 = vpop.f32.mrb[0].mxu0
      %v2087 = vadd.f32 0.0, %v2086
      %v2088 = vpop.f32.mrb[0].mxu0
      %v2089 = vpop.f32.mrb[0].mxu0
      %v2090 = vadd.f32 0.0, %v2089
      %v2091 = vpop.f32.mrb[0].mxu0
      %2092 = vdwg.mxu0
      %v2093 = vrcp.pop %v2020
      %v2094 = vrcp.pop %v2023
      %v2095 = vrcp.pop %v2026
      %v2096 = vrcp.pop %v2029
      %v2097 = vmul.f32 %v2079, %v2093
      %v2098 = vmul.f32 %v2082, %v2094
      %v2099 = vmul.f32 %v2087, %v2095
      %v2100 = vmul.f32 %v2090, %v2096
      %v2101 = vpack.c.bf16 %v2098, %v2097
      %v2102 = vpack.c.bf16 %v2100, %v2099
      %v2107 = vunpack.c.l.b16 %v1157
      %v2108 = vunpack.c.l.b16 %v1158
      %v2109 = vunpack.c.l.b16 %v1159
      %v2110 = vunpack.c.l.b16 %v1160
      %v2111 = vpack.c.b16 %v2108, %v2107
      %v2112 = vpack.c.b16 %v2110, %v2109
      %v2116 = vsel %vm1161, %v2101, 0
      %v2119 = vsel %vm1161, %v2102, 0
      %2121 = vmatprep.subr.bf16.mxu0 0
      %2122 = vmatpush1.bf16.msra.mxu0 %v2111
      %2123 = vmatprep.subr.bf16.mxu0 0
      %2124 = vmatpush1.bf16.msra.mxu0 %v2112
      %2125 = vmatprep.subr.bf16.mxu0 0
      %2126 = vmatpush1.bf16.msra.mxu0 0
      %2127 = vmatprep.subr.bf16.mxu0 0
      %2128 = vmatpush1.bf16.msra.mxu0 0
      %2129 = vmatprep.subr.bf16.mxu0 0
      %2130 = vmatpush1.bf16.msra.mxu0 0
      %2131 = vmatprep.subr.bf16.mxu0 0
      %2132 = vmatpush1.bf16.msra.mxu0 0
      %2133 = vmatprep.subr.bf16.mxu0 0
      %2134 = vmatpush1.bf16.msra.mxu0 0
      %2135 = vmatprep.subr.bf16.mxu0 0
      %2136 = vmatpush1.bf16.msra.mxu0 0
      %2137 = vmatprep.subr.bf16.mxu0 0
      %2138 = vmatpush1.bf16.msra.mxu0 0
      %2139 = vmatprep.subr.bf16.mxu0 0
      %2140 = vmatpush1.bf16.msra.mxu0 0
      %2141 = vmatprep.subr.bf16.mxu0 0
      %2142 = vmatpush1.bf16.msra.mxu0 0
      %2143 = vmatprep.subr.bf16.mxu0 0
      %2144 = vmatpush1.bf16.msra.mxu0 0
      %2145 = vmatprep.subr.bf16.mxu0 0
      %2146 = vmatpush1.bf16.msra.mxu0 0
      %2147 = vmatprep.subr.bf16.mxu0 0
      %2148 = vmatpush1.bf16.msra.mxu0 0
      %2149 = vmatprep.subr.bf16.mxu0 0
      %2150 = vmatpush1.bf16.msra.mxu0 0
      %2151 = vmatprep.subr.bf16.mxu0 0
      %2152 = vmatpush1.bf16.msra.mxu0 0
      %2153 = vmatprep.mubr.bf16.mxu0 0
      %2154 = vmatmul.mubr.bf16.gmra.mrb[0].mxu0 %v2116
      %v2155 = vpop.f32.mrb[0].mxu0
      %v2156 = vadd.f32 0.0, %v2155
      %v2157 = vpop.f32.mrb[0].mxu0
      %v2158 = vpop.f32.mrb[0].mxu0
      %v2159 = vadd.f32 0.0, %v2158
      %v2160 = vpop.f32.mrb[0].mxu0
      %2161 = vmatprep.mubr.bf16.mxu0 0
      %2162 = vmatmul.mubr.bf16.gmra.mrb[0].mxu0 %v2119
      %v2163 = vpop.f32.mrb[0].mxu0
      %v2164 = vadd.f32 0.0, %v2163
      %v2165 = vpop.f32.mrb[0].mxu0
      %v2166 = vpop.f32.mrb[0].mxu0
      %v2167 = vadd.f32 0.0, %v2166
      %v2168 = vpop.f32.mrb[0].mxu0
      %2169 = vdwg.mxu0
      %v2170 = vadd.f32 %v1913, %v2156
      %v2171 = vadd.f32 %v1914, %v2159
      %v2172 = vadd.f32 %v1915, %v2164
      %v2173 = vadd.f32 %v1916, %v2167
      %v2174 = vadd.f32 %v777, %v2170
      %v2175 = vadd.f32 %v773, %v2171
      %v2176 = vadd.f32 %v778, %v2172
      %v2177 = vadd.f32 %v2173, 0.0
      %v2178 = vld [vmem:[%s10] sm:$0x1]
      %v2180 = vlaneseq
      %v2181 = vshrl.u32 %v2180, 7
      %v2182 = vsub.s32 0, %v2181
      %v2183 = vrot.slane %v2178, %v2182
      %v2185 = vadd.f32 %v2174, %v2183
      %v2186 = vadd.f32 %v2175, %v2183
      %v2187 = vadd.f32 %v2176, %v2183
      %v2188 = vadd.f32 %v2177, %v2183
      %v2189 = vld [vmem:[%s11] sm:$0x1]
      %v2190 = vld [vmem:[%s12] sm:$0x1]
      %2191 = vadd.xlane.f32.xlu0 %v2185
      %v2192 = vpop.xlane.xlu0 %2191
      %2193 = vadd.xlane.f32.xlu0 %v2186
      %v2194 = vpop.xlane.xlu0 %2193
      %2195 = vadd.xlane.f32.xlu0 %v2187
      %v2196 = vpop.xlane.xlu0 %2195
      %2197 = vadd.xlane.f32.xlu0 %v2188
      %v2198 = vpop.xlane.xlu0 %2197
      %v2199 = vmul.f32 %v2192, %v793
      %v2200 = vmul.f32 %v2194, %v793
      %v2201 = vmul.f32 %v2196, %v793
      %v2202 = vmul.f32 %v2198, %v793
      %v2203 = vmul.f32 %v2185, %v2185
      %v2204 = vmul.f32 %v2186, %v2186
      %v2205 = vmul.f32 %v2187, %v2187
      %v2206 = vmul.f32 %v2188, %v2188
      %2207 = vadd.xlane.f32.xlu0 %v2203
      %v2208 = vpop.xlane.xlu0 %2207
      %2209 = vadd.xlane.f32.xlu0 %v2204
      %v2210 = vpop.xlane.xlu0 %2209
      %2211 = vadd.xlane.f32.xlu0 %v2205
      %v2212 = vpop.xlane.xlu0 %2211
      %2213 = vadd.xlane.f32.xlu0 %v2206
      %v2214 = vpop.xlane.xlu0 %2213
      %v2215 = vmul.f32 %v2208, %v793
      %v2216 = vmul.f32 %v2210, %v793
      %v2217 = vmul.f32 %v2212, %v793
      %v2218 = vmul.f32 %v2214, %v793
      %v2219 = vmul.f32 %v2199, %v2199
      %v2220 = vmul.f32 %v2200, %v2200
      %v2221 = vmul.f32 %v2201, %v2201
      %v2222 = vmul.f32 %v2202, %v2202
      %v2223 = vsub.f32 %v2215, %v2219
      %v2224 = vsub.f32 %v2216, %v2220
      %v2225 = vsub.f32 %v2217, %v2221
      %v2226 = vsub.f32 %v2218, %v2222
      %v2227 = vmax.f32 %v2223, 0.0
      %v2228 = vmax.f32 %v2224, 0.0
      %v2229 = vmax.f32 %v2225, 0.0
      %v2230 = vmax.f32 %v2226, 0.0
      %v2231 = vsub.f32 %v2185, %v2199
      %v2232 = vsub.f32 %v2186, %v2200
      %v2233 = vsub.f32 %v2187, %v2201
      %v2234 = vsub.f32 %v2188, %v2202
      %v2235 = vadd.f32 %v2227, 1e-06
      %v2236 = vadd.f32 %v2228, 1e-06
      %v2237 = vadd.f32 %v2229, 1e-06
      %v2238 = vadd.f32 %v2230, 1e-06
      %v2239 = vrsqrt.pop %v2235
      %v2240 = vrsqrt.pop %v2236
      %v2241 = vrsqrt.pop %v2237
      %v2242 = vrsqrt.pop %v2238
      %v2243 = vmul.f32 %v2231, %v2239
      %v2244 = vmul.f32 %v2232, %v2240
      %v2245 = vmul.f32 %v2233, %v2241
      %v2246 = vmul.f32 %v2234, %v2242
      %v2248 = vlaneseq
      %v2249 = vshrl.u32 %v2248, 7
      %v2250 = vsub.s32 0, %v2249
      %v2251 = vrot.slane %v2189, %v2250
      %v2253 = vmul.f32 %v2243, %v2251
      %v2254 = vmul.f32 %v2244, %v2251
      %v2255 = vmul.f32 %v2245, %v2251
      %v2256 = vmul.f32 %v2246, %v2251
      %v2258 = vlaneseq
      %v2259 = vshrl.u32 %v2258, 7
      %v2260 = vsub.s32 0, %v2259
      %v2261 = vrot.slane %v2190, %v2260
      %v2263 = vadd.f32 %v2253, %v2261
      %v2264 = vadd.f32 %v2254, %v2261
      %v2265 = vadd.f32 %v2255, %v2261
      %v2266 = vadd.f32 %v2256, %v2261
      %v2267 = vpack.c.bf16 %v2264, %v2263
      %v2268 = vpack.c.bf16 %v2266, %v2265
      %v2269 = vld [vmem:[%s13] sm:$0xff]
      %v2270 = vld [vmem:[%s13 + $0x8] sm:$0xff]
      %v2271 = vld [vmem:[%s13 + $0x10] sm:$0xff]
      %v2272 = vld [vmem:[%s13 + $0x18] sm:$0xff]
      %v2273 = vld [vmem:[%s13 + $0x20] sm:$0xff]
      %v2274 = vld [vmem:[%s13 + $0x28] sm:$0xff]
      %v2275 = vld [vmem:[%s13 + $0x30] sm:$0xff]
      %v2276 = vld [vmem:[%s13 + $0x38] sm:$0xff]
      %v2277 = vld [vmem:[%s13 + $0x40] sm:$0xff]
      %v2278 = vld [vmem:[%s13 + $0x48] sm:$0xff]
      %v2279 = vld [vmem:[%s13 + $0x50] sm:$0xff]
      %v2280 = vld [vmem:[%s13 + $0x58] sm:$0xff]
      %v2281 = vld [vmem:[%s13 + $0x60] sm:$0xff]
      %v2282 = vld [vmem:[%s13 + $0x68] sm:$0xff]
      %v2283 = vld [vmem:[%s13 + $0x70] sm:$0xff]
      %v2284 = vld [vmem:[%s13 + $0x78] sm:$0xff]
      %v2285 = vld [vmem:[%s13 + $0x80] sm:$0xff]
      %v2286 = vld [vmem:[%s13 + $0x88] sm:$0xff]
      %v2287 = vld [vmem:[%s13 + $0x90] sm:$0xff]
      %v2288 = vld [vmem:[%s13 + $0x98] sm:$0xff]
      %v2289 = vld [vmem:[%s13 + $0xa0] sm:$0xff]
      %v2290 = vld [vmem:[%s13 + $0xa8] sm:$0xff]
      %v2291 = vld [vmem:[%s13 + $0xb0] sm:$0xff]
      %v2292 = vld [vmem:[%s13 + $0xb8] sm:$0xff]
      %v2293 = vld [vmem:[%s13 + $0xc0] sm:$0xff]
      %v2294 = vld [vmem:[%s13 + $0xc8] sm:$0xff]
      %v2295 = vld [vmem:[%s13 + $0xd0] sm:$0xff]
      %v2296 = vld [vmem:[%s13 + $0xd8] sm:$0xff]
      %v2297 = vld [vmem:[%s13 + $0xe0] sm:$0xff]
      %v2298 = vld [vmem:[%s13 + $0xe8] sm:$0xff]
      %v2299 = vld [vmem:[%s13 + $0xf0] sm:$0xff]
      %v2300 = vld [vmem:[%s13 + $0xf8] sm:$0xff]
      %v2301 = vld [vmem:[%s14] sm:$0xf]
      %v2303 = vlaneseq
      %v2304 = vshrl.u32 %v2303, 7
      %v2305 = vsub.s32 0, %v2304
      %v2306 = vrot.slane %v2301, %v2305
      %v2307 = vlaneseq
      %v2308 = vshrl.u32 %v2307, 7
      %v2309 = vsub.s32 1, %v2308
      %v2310 = vrot.slane %v2301, %v2309
      %v2311 = vlaneseq
      %v2312 = vshrl.u32 %v2311, 7
      %v2313 = vsub.s32 2, %v2312
      %v2314 = vrot.slane %v2301, %v2313
      %v2315 = vlaneseq
      %v2316 = vshrl.u32 %v2315, 7
      %v2317 = vsub.s32 3, %v2316
      %v2318 = vrot.slane %v2301, %v2317
      %v2355 = vunpack.c.l.b16 %v2269
      %v2356 = vunpack.c.h.b16 %v2269
      %v2357 = vunpack.c.l.b16 %v2270
      %v2358 = vunpack.c.h.b16 %v2270
      %v2359 = vunpack.c.l.b16 %v2271
      %v2360 = vunpack.c.h.b16 %v2271
      %v2361 = vunpack.c.l.b16 %v2272
      %v2362 = vunpack.c.h.b16 %v2272
      %v2363 = vunpack.c.l.b16 %v2273
      %v2364 = vunpack.c.h.b16 %v2273
      %v2365 = vunpack.c.l.b16 %v2274
      %v2366 = vunpack.c.h.b16 %v2274
      %v2367 = vunpack.c.l.b16 %v2275
      %v2368 = vunpack.c.h.b16 %v2275
      %v2369 = vunpack.c.l.b16 %v2276
      %v2370 = vunpack.c.h.b16 %v2276
      %v2371 = vunpack.c.l.b16 %v2277
      %v2372 = vunpack.c.h.b16 %v2277
      %v2373 = vunpack.c.l.b16 %v2278
      %v2374 = vunpack.c.h.b16 %v2278
      %v2375 = vunpack.c.l.b16 %v2279
      %v2376 = vunpack.c.h.b16 %v2279
      %v2377 = vunpack.c.l.b16 %v2280
      %v2378 = vunpack.c.h.b16 %v2280
      %v2379 = vunpack.c.l.b16 %v2281
      %v2380 = vunpack.c.h.b16 %v2281
      %v2381 = vunpack.c.l.b16 %v2282
      %v2382 = vunpack.c.h.b16 %v2282
      %v2383 = vunpack.c.l.b16 %v2283
      %v2384 = vunpack.c.h.b16 %v2283
      %v2385 = vunpack.c.l.b16 %v2284
      %v2386 = vunpack.c.h.b16 %v2284
      %v2387 = vunpack.c.l.b16 %v2285
      %v2388 = vunpack.c.h.b16 %v2285
      %v2389 = vunpack.c.l.b16 %v2286
      %v2390 = vunpack.c.h.b16 %v2286
      %v2391 = vunpack.c.l.b16 %v2287
      %v2392 = vunpack.c.h.b16 %v2287
      %v2393 = vunpack.c.l.b16 %v2288
      %v2394 = vunpack.c.h.b16 %v2288
      %v2395 = vunpack.c.l.b16 %v2289
      %v2396 = vunpack.c.h.b16 %v2289
      %v2397 = vunpack.c.l.b16 %v2290
      %v2398 = vunpack.c.h.b16 %v2290
      %v2399 = vunpack.c.l.b16 %v2291
      %v2400 = vunpack.c.h.b16 %v2291
      %v2401 = vunpack.c.l.b16 %v2292
      %v2402 = vunpack.c.h.b16 %v2292
      %v2403 = vunpack.c.l.b16 %v2293
      %v2404 = vunpack.c.h.b16 %v2293
      %v2405 = vunpack.c.l.b16 %v2294
      %v2406 = vunpack.c.h.b16 %v2294
      %v2407 = vunpack.c.l.b16 %v2295
      %v2408 = vunpack.c.h.b16 %v2295
      %v2409 = vunpack.c.l.b16 %v2296
      %v2410 = vunpack.c.h.b16 %v2296
      %v2411 = vunpack.c.l.b16 %v2297
      %v2412 = vunpack.c.h.b16 %v2297
      %v2413 = vunpack.c.l.b16 %v2298
      %v2414 = vunpack.c.h.b16 %v2298
      %v2415 = vunpack.c.l.b16 %v2299
      %v2416 = vunpack.c.h.b16 %v2299
      %v2417 = vunpack.c.l.b16 %v2300
      %v2418 = vunpack.c.h.b16 %v2300
      %v2419 = vpack.c.b16 %v2359, %v2355
      %v2420 = vpack.c.b16 %v2360, %v2356
      %v2421 = vpack.c.b16 %v2361, %v2357
      %v2422 = vpack.c.b16 %v2362, %v2358
      %v2423 = vpack.c.b16 %v2367, %v2363
      %v2424 = vpack.c.b16 %v2368, %v2364
      %v2425 = vpack.c.b16 %v2369, %v2365
      %v2426 = vpack.c.b16 %v2370, %v2366
      %v2427 = vpack.c.b16 %v2375, %v2371
      %v2428 = vpack.c.b16 %v2376, %v2372
      %v2429 = vpack.c.b16 %v2377, %v2373
      %v2430 = vpack.c.b16 %v2378, %v2374
      %v2431 = vpack.c.b16 %v2383, %v2379
      %v2432 = vpack.c.b16 %v2384, %v2380
      %v2433 = vpack.c.b16 %v2385, %v2381
      %v2434 = vpack.c.b16 %v2386, %v2382
      %v2435 = vpack.c.b16 %v2391, %v2387
      %v2436 = vpack.c.b16 %v2392, %v2388
      %v2437 = vpack.c.b16 %v2393, %v2389
      %v2438 = vpack.c.b16 %v2394, %v2390
      %v2439 = vpack.c.b16 %v2399, %v2395
      %v2440 = vpack.c.b16 %v2400, %v2396
      %v2441 = vpack.c.b16 %v2401, %v2397
      %v2442 = vpack.c.b16 %v2402, %v2398
      %v2443 = vpack.c.b16 %v2407, %v2403
      %v2444 = vpack.c.b16 %v2408, %v2404
      %v2445 = vpack.c.b16 %v2409, %v2405
      %v2446 = vpack.c.b16 %v2410, %v2406
      %v2447 = vpack.c.b16 %v2415, %v2411
      %v2448 = vpack.c.b16 %v2416, %v2412
      %v2449 = vpack.c.b16 %v2417, %v2413
      %v2450 = vpack.c.b16 %v2418, %v2414
      %2483 = vmatprep.subr.bf16.mxu0 %v2420
      %2484 = vmatpush1.bf16.msra.mxu0 %v2419
      %2485 = vmatprep.subr.bf16.mxu0 %v2424
      %2486 = vmatpush1.bf16.msra.mxu0 %v2423
      %2487 = vmatprep.subr.bf16.mxu0 %v2428
      %2488 = vmatpush1.bf16.msra.mxu0 %v2427
      %2489 = vmatprep.subr.bf16.mxu0 %v2432
      %2490 = vmatpush1.bf16.msra.mxu0 %v2431
      %2491 = vmatprep.subr.bf16.mxu0 %v2436
      %2492 = vmatpush1.bf16.msra.mxu0 %v2435
      %2493 = vmatprep.subr.bf16.mxu0 %v2440
      %2494 = vmatpush1.bf16.msra.mxu0 %v2439
      %2495 = vmatprep.subr.bf16.mxu0 %v2444
      %2496 = vmatpush1.bf16.msra.mxu0 %v2443
      %2497 = vmatprep.subr.bf16.mxu0 %v2448
      %2498 = vmatpush1.bf16.msra.mxu0 %v2447
      %2499 = vmatprep.subr.bf16.mxu0 0
      %2500 = vmatpush1.bf16.msra.mxu0 0
      %2501 = vmatprep.subr.bf16.mxu0 0
      %2502 = vmatpush1.bf16.msra.mxu0 0
      %2503 = vmatprep.subr.bf16.mxu0 0
      %2504 = vmatpush1.bf16.msra.mxu0 0
      %2505 = vmatprep.subr.bf16.mxu0 0
      %2506 = vmatpush1.bf16.msra.mxu0 0
      %2507 = vmatprep.subr.bf16.mxu0 0
      %2508 = vmatpush1.bf16.msra.mxu0 0
      %2509 = vmatprep.subr.bf16.mxu0 0
      %2510 = vmatpush1.bf16.msra.mxu0 0
      %2511 = vmatprep.subr.bf16.mxu0 0
      %2512 = vmatpush1.bf16.msra.mxu0 0
      %2513 = vmatprep.subr.bf16.mxu0 0
      %2514 = vmatpush1.bf16.msra.mxu0 0
      %2515 = vmatprep.mubr.bf16.mxu0 0
      %2516 = vmatmul.mubr.bf16.gmra.mrb[0].mxu0 %v2267
      %v2517 = vpop.f32.mrb[0].mxu0
      %v2518 = vadd.f32 %v2306, %v2517
      %v2519 = vpop.f32.mrb[0].mxu0
      %v2520 = vadd.f32 %v2310, %v2519
      %v2521 = vpop.f32.mrb[0].mxu0
      %v2522 = vadd.f32 %v2306, %v2521
      %v2523 = vpop.f32.mrb[0].mxu0
      %v2524 = vadd.f32 %v2310, %v2523
      %2525 = vmatprep.mubr.bf16.mxu0 0
      %2526 = vmatmul.mubr.bf16.gmra.mrb[0].mxu0 %v2268
      %v2527 = vpop.f32.mrb[0].mxu0
      %v2528 = vadd.f32 %v2306, %v2527
      %v2529 = vpop.f32.mrb[0].mxu0
      %v2530 = vadd.f32 %v2310, %v2529
      %v2531 = vpop.f32.mrb[0].mxu0
      %v2532 = vadd.f32 %v2306, %v2531
      %v2533 = vpop.f32.mrb[0].mxu0
      %v2534 = vadd.f32 %v2310, %v2533
      %2535 = vdwg.mxu0
      %2536 = vmatprep.subr.bf16.mxu0 %v2422
      %2537 = vmatpush1.bf16.msra.mxu0 %v2421
      %2538 = vmatprep.subr.bf16.mxu0 %v2426
      %2539 = vmatpush1.bf16.msra.mxu0 %v2425
      %2540 = vmatprep.subr.bf16.mxu0 %v2430
      %2541 = vmatpush1.bf16.msra.mxu0 %v2429
      %2542 = vmatprep.subr.bf16.mxu0 %v2434
      %2543 = vmatpush1.bf16.msra.mxu0 %v2433
      %2544 = vmatprep.subr.bf16.mxu0 %v2438
      %2545 = vmatpush1.bf16.msra.mxu0 %v2437
      %2546 = vmatprep.subr.bf16.mxu0 %v2442
      %2547 = vmatpush1.bf16.msra.mxu0 %v2441
      %2548 = vmatprep.subr.bf16.mxu0 %v2446
      %2549 = vmatpush1.bf16.msra.mxu0 %v2445
      %2550 = vmatprep.subr.bf16.mxu0 %v2450
      %2551 = vmatpush1.bf16.msra.mxu0 %v2449
      %2552 = vmatprep.subr.bf16.mxu0 0
      %2553 = vmatpush1.bf16.msra.mxu0 0
      %2554 = vmatprep.subr.bf16.mxu0 0
      %2555 = vmatpush1.bf16.msra.mxu0 0
      %2556 = vmatprep.subr.bf16.mxu0 0
      %2557 = vmatpush1.bf16.msra.mxu0 0
      %2558 = vmatprep.subr.bf16.mxu0 0
      %2559 = vmatpush1.bf16.msra.mxu0 0
      %2560 = vmatprep.subr.bf16.mxu0 0
      %2561 = vmatpush1.bf16.msra.mxu0 0
      %2562 = vmatprep.subr.bf16.mxu0 0
      %2563 = vmatpush1.bf16.msra.mxu0 0
      %2564 = vmatprep.subr.bf16.mxu0 0
      %2565 = vmatpush1.bf16.msra.mxu0 0
      %2566 = vmatprep.subr.bf16.mxu0 0
      %2567 = vmatpush1.bf16.msra.mxu0 0
      %2568 = vmatprep.mubr.bf16.mxu0 0
      %2569 = vmatmul.mubr.bf16.gmra.mrb[0].mxu0 %v2267
      %v2570 = vpop.f32.mrb[0].mxu0
      %v2571 = vadd.f32 %v2314, %v2570
      %v2572 = vpop.f32.mrb[0].mxu0
      %v2573 = vadd.f32 %v2318, %v2572
      %v2574 = vpop.f32.mrb[0].mxu0
      %v2575 = vadd.f32 %v2314, %v2574
      %v2576 = vpop.f32.mrb[0].mxu0
      %v2577 = vadd.f32 %v2318, %v2576
      %2578 = vmatprep.mubr.bf16.mxu0 0
      %2579 = vmatmul.mubr.bf16.gmra.mrb[0].mxu0 %v2268
      %v2580 = vpop.f32.mrb[0].mxu0
      %v2581 = vadd.f32 %v2314, %v2580
      %v2582 = vpop.f32.mrb[0].mxu0
      %v2583 = vadd.f32 %v2318, %v2582
      %v2584 = vpop.f32.mrb[0].mxu0
      %v2585 = vadd.f32 %v2314, %v2584
      %v2586 = vpop.f32.mrb[0].mxu0
      %v2587 = vadd.f32 %v2318, %v2586
      %2588 = vdwg.mxu0
      %v2589 = vmul.f32 %v2518, %v2518
      %v2590 = vmul.f32 %v2520, %v2520
      %v2591 = vmul.f32 %v2571, %v2571
      %v2592 = vmul.f32 %v2573, %v2573
      %v2593 = vmul.f32 %v2522, %v2522
      %v2594 = vmul.f32 %v2524, %v2524
      %v2595 = vmul.f32 %v2575, %v2575
      %v2596 = vmul.f32 %v2577, %v2577
      %v2597 = vmul.f32 %v2528, %v2528
      %v2598 = vmul.f32 %v2530, %v2530
      %v2599 = vmul.f32 %v2581, %v2581
      %v2600 = vmul.f32 %v2583, %v2583
      %v2601 = vmul.f32 %v2532, %v2532
      %v2602 = vmul.f32 %v2534, %v2534
      %v2603 = vmul.f32 %v2585, %v2585
      %v2604 = vmul.f32 %v2587, %v2587
      %v2605 = vmul.f32 %v2518, %v2589
      %v2606 = vmul.f32 %v2520, %v2590
      %v2607 = vmul.f32 %v2571, %v2591
      %v2608 = vmul.f32 %v2573, %v2592
      %v2609 = vmul.f32 %v2522, %v2593
      %v2610 = vmul.f32 %v2524, %v2594
      %v2611 = vmul.f32 %v2575, %v2595
      %v2612 = vmul.f32 %v2577, %v2596
      %v2613 = vmul.f32 %v2528, %v2597
      %v2614 = vmul.f32 %v2530, %v2598
      %v2615 = vmul.f32 %v2581, %v2599
      %v2616 = vmul.f32 %v2583, %v2600
      %v2617 = vmul.f32 %v2532, %v2601
      %v2618 = vmul.f32 %v2534, %v2602
      %v2619 = vmul.f32 %v2585, %v2603
      %v2620 = vmul.f32 %v2587, %v2604
      %v2621 = vmul.f32 %v2605, 0.044715
      %v2622 = vmul.f32 %v2606, 0.044715
      %v2623 = vmul.f32 %v2607, 0.044715
      %v2624 = vmul.f32 %v2608, 0.044715
      %v2625 = vmul.f32 %v2609, 0.044715
      %v2626 = vmul.f32 %v2610, 0.044715
      %v2627 = vmul.f32 %v2611, 0.044715
      %v2628 = vmul.f32 %v2612, 0.044715
      %v2629 = vmul.f32 %v2613, 0.044715
      %v2630 = vmul.f32 %v2614, 0.044715
      %v2631 = vmul.f32 %v2615, 0.044715
      %v2632 = vmul.f32 %v2616, 0.044715
      %v2633 = vmul.f32 %v2617, 0.044715
      %v2634 = vmul.f32 %v2618, 0.044715
      %v2635 = vmul.f32 %v2619, 0.044715
      %v2636 = vmul.f32 %v2620, 0.044715
      %v2637 = vadd.f32 %v2518, %v2621
      %v2638 = vadd.f32 %v2520, %v2622
      %v2639 = vadd.f32 %v2571, %v2623
      %v2640 = vadd.f32 %v2573, %v2624
      %v2641 = vadd.f32 %v2522, %v2625
      %v2642 = vadd.f32 %v2524, %v2626
      %v2643 = vadd.f32 %v2575, %v2627
      %v2644 = vadd.f32 %v2577, %v2628
      %v2645 = vadd.f32 %v2528, %v2629
      %v2646 = vadd.f32 %v2530, %v2630
      %v2647 = vadd.f32 %v2581, %v2631
      %v2648 = vadd.f32 %v2583, %v2632
      %v2649 = vadd.f32 %v2532, %v2633
      %v2650 = vadd.f32 %v2534, %v2634
      %v2651 = vadd.f32 %v2585, %v2635
      %v2652 = vadd.f32 %v2587, %v2636
      %v2653 = vmul.f32 %v2637, 0.7978846
      %v2654 = vmul.f32 %v2638, 0.7978846
      %v2655 = vmul.f32 %v2639, 0.7978846
      %v2656 = vmul.f32 %v2640, 0.7978846
      %v2657 = vmul.f32 %v2641, 0.7978846
      %v2658 = vmul.f32 %v2642, 0.7978846
      %v2659 = vmul.f32 %v2643, 0.7978846
      %v2660 = vmul.f32 %v2644, 0.7978846
      %v2661 = vmul.f32 %v2645, 0.7978846
      %v2662 = vmul.f32 %v2646, 0.7978846
      %v2663 = vmul.f32 %v2647, 0.7978846
      %v2664 = vmul.f32 %v2648, 0.7978846
      %v2665 = vmul.f32 %v2649, 0.7978846
      %v2666 = vmul.f32 %v2650, 0.7978846
      %v2667 = vmul.f32 %v2651, 0.7978846
      %v2668 = vmul.f32 %v2652, 0.7978846
      %v2669 = vtanh.pop %v2653
      %v2670 = vtanh.pop %v2654
      %v2671 = vtanh.pop %v2655
      %v2672 = vtanh.pop %v2656
      %v2673 = vtanh.pop %v2657
      %v2674 = vtanh.pop %v2658
      %v2675 = vtanh.pop %v2659
      %v2676 = vtanh.pop %v2660
      %v2677 = vtanh.pop %v2661
      %v2678 = vtanh.pop %v2662
      %v2679 = vtanh.pop %v2663
      %v2680 = vtanh.pop %v2664
      %v2681 = vtanh.pop %v2665
      %v2682 = vtanh.pop %v2666
      %v2683 = vtanh.pop %v2667
      %v2684 = vtanh.pop %v2668
      %v2685 = vadd.f32 %v2669, 1.0
      %v2686 = vadd.f32 %v2670, 1.0
      %v2687 = vadd.f32 %v2671, 1.0
      %v2688 = vadd.f32 %v2672, 1.0
      %v2689 = vadd.f32 %v2673, 1.0
      %v2690 = vadd.f32 %v2674, 1.0
      %v2691 = vadd.f32 %v2675, 1.0
      %v2692 = vadd.f32 %v2676, 1.0
      %v2693 = vadd.f32 %v2677, 1.0
      %v2694 = vadd.f32 %v2678, 1.0
      %v2695 = vadd.f32 %v2679, 1.0
      %v2696 = vadd.f32 %v2680, 1.0
      %v2697 = vadd.f32 %v2681, 1.0
      %v2698 = vadd.f32 %v2682, 1.0
      %v2699 = vadd.f32 %v2683, 1.0
      %v2700 = vadd.f32 %v2684, 1.0
      %v2701 = vmul.f32 %v2685, 0.5
      %v2702 = vmul.f32 %v2686, 0.5
      %v2703 = vmul.f32 %v2687, 0.5
      %v2704 = vmul.f32 %v2688, 0.5
      %v2705 = vmul.f32 %v2689, 0.5
      %v2706 = vmul.f32 %v2690, 0.5
      %v2707 = vmul.f32 %v2691, 0.5
      %v2708 = vmul.f32 %v2692, 0.5
      %v2709 = vmul.f32 %v2693, 0.5
      %v2710 = vmul.f32 %v2694, 0.5
      %v2711 = vmul.f32 %v2695, 0.5
      %v2712 = vmul.f32 %v2696, 0.5
      %v2713 = vmul.f32 %v2697, 0.5
      %v2714 = vmul.f32 %v2698, 0.5
      %v2715 = vmul.f32 %v2699, 0.5
      %v2716 = vmul.f32 %v2700, 0.5
      %v2717 = vmul.f32 %v2518, %v2701
      %v2718 = vmul.f32 %v2520, %v2702
      %v2719 = vmul.f32 %v2571, %v2703
      %v2720 = vmul.f32 %v2573, %v2704
      %v2721 = vmul.f32 %v2522, %v2705
      %v2722 = vmul.f32 %v2524, %v2706
      %v2723 = vmul.f32 %v2575, %v2707
      %v2724 = vmul.f32 %v2577, %v2708
      %v2725 = vmul.f32 %v2528, %v2709
      %v2726 = vmul.f32 %v2530, %v2710
      %v2727 = vmul.f32 %v2581, %v2711
      %v2728 = vmul.f32 %v2583, %v2712
      %v2729 = vmul.f32 %v2532, %v2713
      %v2730 = vmul.f32 %v2534, %v2714
      %v2731 = vmul.f32 %v2585, %v2715
      %v2732 = vmul.f32 %v2587, %v2716
      %v2733 = vpack.c.bf16 %v2721, %v2717
      %v2734 = vpack.c.bf16 %v2722, %v2718
      %v2735 = vpack.c.bf16 %v2723, %v2719
      %v2736 = vpack.c.bf16 %v2724, %v2720
      %v2737 = vpack.c.bf16 %v2729, %v2725
      %v2738 = vpack.c.bf16 %v2730, %v2726
      %v2739 = vpack.c.bf16 %v2731, %v2727
      %v2740 = vpack.c.bf16 %v2732, %v2728
      %v2741 = vld [vmem:[%s15] sm:$0xf]
      %v2742 = vld [vmem:[%s15 + $0x4] sm:$0xf]
      %v2743 = vld [vmem:[%s15 + $0x8] sm:$0xf]
      %v2744 = vld [vmem:[%s15 + $0xc] sm:$0xf]
      %v2745 = vld [vmem:[%s15 + $0x10] sm:$0xf]
      %v2746 = vld [vmem:[%s15 + $0x14] sm:$0xf]
      %v2747 = vld [vmem:[%s15 + $0x18] sm:$0xf]
      %v2748 = vld [vmem:[%s15 + $0x1c] sm:$0xf]
      %v2749 = vld [vmem:[%s15 + $0x20] sm:$0xf]
      %v2750 = vld [vmem:[%s15 + $0x24] sm:$0xf]
      %v2751 = vld [vmem:[%s15 + $0x28] sm:$0xf]
      %v2752 = vld [vmem:[%s15 + $0x2c] sm:$0xf]
      %v2753 = vld [vmem:[%s15 + $0x30] sm:$0xf]
      %v2754 = vld [vmem:[%s15 + $0x34] sm:$0xf]
      %v2755 = vld [vmem:[%s15 + $0x38] sm:$0xf]
      %v2756 = vld [vmem:[%s15 + $0x3c] sm:$0xf]
      %v2757 = vld [vmem:[%s15 + $0x40] sm:$0xf]
      %v2758 = vld [vmem:[%s15 + $0x44] sm:$0xf]
      %v2759 = vld [vmem:[%s15 + $0x48] sm:$0xf]
      %v2760 = vld [vmem:[%s15 + $0x4c] sm:$0xf]
      %v2761 = vld [vmem:[%s15 + $0x50] sm:$0xf]
      %v2762 = vld [vmem:[%s15 + $0x54] sm:$0xf]
      %v2763 = vld [vmem:[%s15 + $0x58] sm:$0xf]
      %v2764 = vld [vmem:[%s15 + $0x5c] sm:$0xf]
      %v2765 = vld [vmem:[%s15 + $0x60] sm:$0xf]
      %v2766 = vld [vmem:[%s15 + $0x64] sm:$0xf]
      %v2767 = vld [vmem:[%s15 + $0x68] sm:$0xf]
      %v2768 = vld [vmem:[%s15 + $0x6c] sm:$0xf]
      %v2769 = vld [vmem:[%s15 + $0x70] sm:$0xf]
      %v2770 = vld [vmem:[%s15 + $0x74] sm:$0xf]
      %v2771 = vld [vmem:[%s15 + $0x78] sm:$0xf]
      %v2772 = vld [vmem:[%s15 + $0x7c] sm:$0xf]
      %v2773 = vld [vmem:[%s15 + $0x80] sm:$0xf]
      %v2774 = vld [vmem:[%s15 + $0x84] sm:$0xf]
      %v2775 = vld [vmem:[%s15 + $0x88] sm:$0xf]
      %v2776 = vld [vmem:[%s15 + $0x8c] sm:$0xf]
      %v2777 = vld [vmem:[%s15 + $0x90] sm:$0xf]
      %v2778 = vld [vmem:[%s15 + $0x94] sm:$0xf]
      %v2779 = vld [vmem:[%s15 + $0x98] sm:$0xf]
      %v2780 = vld [vmem:[%s15 + $0x9c] sm:$0xf]
      %v2781 = vld [vmem:[%s15 + $0xa0] sm:$0xf]
      %v2782 = vld [vmem:[%s15 + $0xa4] sm:$0xf]
      %v2783 = vld [vmem:[%s15 + $0xa8] sm:$0xf]
      %v2784 = vld [vmem:[%s15 + $0xac] sm:$0xf]
      %v2785 = vld [vmem:[%s15 + $0xb0] sm:$0xf]
      %v2786 = vld [vmem:[%s15 + $0xb4] sm:$0xf]
      %v2787 = vld [vmem:[%s15 + $0xb8] sm:$0xf]
      %v2788 = vld [vmem:[%s15 + $0xbc] sm:$0xf]
      %v2789 = vld [vmem:[%s15 + $0xc0] sm:$0xf]
      %v2790 = vld [vmem:[%s15 + $0xc4] sm:$0xf]
      %v2791 = vld [vmem:[%s15 + $0xc8] sm:$0xf]
      %v2792 = vld [vmem:[%s15 + $0xcc] sm:$0xf]
      %v2793 = vld [vmem:[%s15 + $0xd0] sm:$0xf]
      %v2794 = vld [vmem:[%s15 + $0xd4] sm:$0xf]
      %v2795 = vld [vmem:[%s15 + $0xd8] sm:$0xf]
      %v2796 = vld [vmem:[%s15 + $0xdc] sm:$0xf]
      %v2797 = vld [vmem:[%s15 + $0xe0] sm:$0xf]
      %v2798 = vld [vmem:[%s15 + $0xe4] sm:$0xf]
      %v2799 = vld [vmem:[%s15 + $0xe8] sm:$0xf]
      %v2800 = vld [vmem:[%s15 + $0xec] sm:$0xf]
      %v2801 = vld [vmem:[%s15 + $0xf0] sm:$0xf]
      %v2802 = vld [vmem:[%s15 + $0xf4] sm:$0xf]
      %v2803 = vld [vmem:[%s15 + $0xf8] sm:$0xf]
      %v2804 = vld [vmem:[%s15 + $0xfc] sm:$0xf]
      %v2805 = vld [vmem:[%s16] sm:$0x1]
      %v2807 = vlaneseq
      %v2808 = vshrl.u32 %v2807, 7
      %v2809 = vsub.s32 0, %v2808
      %v2810 = vrot.slane %v2805, %v2809
      %v2876 = vunpack.c.l.b16 %v2741
      %v2877 = vunpack.c.l.b16 %v2742
      %v2878 = vunpack.c.l.b16 %v2743
      %v2879 = vunpack.c.l.b16 %v2744
      %v2880 = vunpack.c.l.b16 %v2745
      %v2881 = vunpack.c.l.b16 %v2746
      %v2882 = vunpack.c.l.b16 %v2747
      %v2883 = vunpack.c.l.b16 %v2748
      %v2884 = vunpack.c.l.b16 %v2749
      %v2885 = vunpack.c.l.b16 %v2750
      %v2886 = vunpack.c.l.b16 %v2751
      %v2887 = vunpack.c.l.b16 %v2752
      %v2888 = vunpack.c.l.b16 %v2753
      %v2889 = vunpack.c.l.b16 %v2754
      %v2890 = vunpack.c.l.b16 %v2755
      %v2891 = vunpack.c.l.b16 %v2756
      %v2892 = vunpack.c.l.b16 %v2757
      %v2893 = vunpack.c.l.b16 %v2758
      %v2894 = vunpack.c.l.b16 %v2759
      %v2895 = vunpack.c.l.b16 %v2760
      %v2896 = vunpack.c.l.b16 %v2761
      %v2897 = vunpack.c.l.b16 %v2762
      %v2898 = vunpack.c.l.b16 %v2763
      %v2899 = vunpack.c.l.b16 %v2764
      %v2900 = vunpack.c.l.b16 %v2765
      %v2901 = vunpack.c.l.b16 %v2766
      %v2902 = vunpack.c.l.b16 %v2767
      %v2903 = vunpack.c.l.b16 %v2768
      %v2904 = vunpack.c.l.b16 %v2769
      %v2905 = vunpack.c.l.b16 %v2770
      %v2906 = vunpack.c.l.b16 %v2771
      %v2907 = vunpack.c.l.b16 %v2772
      %v2908 = vunpack.c.l.b16 %v2773
      %v2909 = vunpack.c.l.b16 %v2774
      %v2910 = vunpack.c.l.b16 %v2775
      %v2911 = vunpack.c.l.b16 %v2776
      %v2912 = vunpack.c.l.b16 %v2777
      %v2913 = vunpack.c.l.b16 %v2778
      %v2914 = vunpack.c.l.b16 %v2779
      %v2915 = vunpack.c.l.b16 %v2780
      %v2916 = vunpack.c.l.b16 %v2781
      %v2917 = vunpack.c.l.b16 %v2782
      %v2918 = vunpack.c.l.b16 %v2783
      %v2919 = vunpack.c.l.b16 %v2784
      %v2920 = vunpack.c.l.b16 %v2785
      %v2921 = vunpack.c.l.b16 %v2786
      %v2922 = vunpack.c.l.b16 %v2787
      %v2923 = vunpack.c.l.b16 %v2788
      %v2924 = vunpack.c.l.b16 %v2789
      %v2925 = vunpack.c.l.b16 %v2790
      %v2926 = vunpack.c.l.b16 %v2791
      %v2927 = vunpack.c.l.b16 %v2792
      %v2928 = vunpack.c.l.b16 %v2793
      %v2929 = vunpack.c.l.b16 %v2794
      %v2930 = vunpack.c.l.b16 %v2795
      %v2931 = vunpack.c.l.b16 %v2796
      %v2932 = vunpack.c.l.b16 %v2797
      %v2933 = vunpack.c.l.b16 %v2798
      %v2934 = vunpack.c.l.b16 %v2799
      %v2935 = vunpack.c.l.b16 %v2800
      %v2936 = vunpack.c.l.b16 %v2801
      %v2937 = vunpack.c.l.b16 %v2802
      %v2938 = vunpack.c.l.b16 %v2803
      %v2939 = vunpack.c.l.b16 %v2804
      %v2940 = vpack.c.b16 %v2877, %v2876
      %v2941 = vpack.c.b16 %v2879, %v2878
      %v2942 = vpack.c.b16 %v2881, %v2880
      %v2943 = vpack.c.b16 %v2883, %v2882
      %v2944 = vpack.c.b16 %v2885, %v2884
      %v2945 = vpack.c.b16 %v2887, %v2886
      %v2946 = vpack.c.b16 %v2889, %v2888
      %v2947 = vpack.c.b16 %v2891, %v2890
      %v2948 = vpack.c.b16 %v2893, %v2892
      %v2949 = vpack.c.b16 %v2895, %v2894
      %v2950 = vpack.c.b16 %v2897, %v2896
      %v2951 = vpack.c.b16 %v2899, %v2898
      %v2952 = vpack.c.b16 %v2901, %v2900
      %v2953 = vpack.c.b16 %v2903, %v2902
      %v2954 = vpack.c.b16 %v2905, %v2904
      %v2955 = vpack.c.b16 %v2907, %v2906
      %v2956 = vpack.c.b16 %v2909, %v2908
      %v2957 = vpack.c.b16 %v2911, %v2910
      %v2958 = vpack.c.b16 %v2913, %v2912
      %v2959 = vpack.c.b16 %v2915, %v2914
      %v2960 = vpack.c.b16 %v2917, %v2916
      %v2961 = vpack.c.b16 %v2919, %v2918
      %v2962 = vpack.c.b16 %v2921, %v2920
      %v2963 = vpack.c.b16 %v2923, %v2922
      %v2964 = vpack.c.b16 %v2925, %v2924
      %v2965 = vpack.c.b16 %v2927, %v2926
      %v2966 = vpack.c.b16 %v2929, %v2928
      %v2967 = vpack.c.b16 %v2931, %v2930
      %v2968 = vpack.c.b16 %v2933, %v2932
      %v2969 = vpack.c.b16 %v2935, %v2934
      %v2970 = vpack.c.b16 %v2937, %v2936
      %v2971 = vpack.c.b16 %v2939, %v2938
      %3004 = vmatprep.subr.bf16.mxu0 0
      %3005 = vmatpush1.bf16.msra.mxu0 %v2940
      %3006 = vmatprep.subr.bf16.mxu0 0
      %3007 = vmatpush1.bf16.msra.mxu0 %v2941
      %3008 = vmatprep.subr.bf16.mxu0 0
      %3009 = vmatpush1.bf16.msra.mxu0 %v2942
      %3010 = vmatprep.subr.bf16.mxu0 0
      %3011 = vmatpush1.bf16.msra.mxu0 %v2943
      %3012 = vmatprep.subr.bf16.mxu0 0
      %3013 = vmatpush1.bf16.msra.mxu0 %v2944
      %3014 = vmatprep.subr.bf16.mxu0 0
      %3015 = vmatpush1.bf16.msra.mxu0 %v2945
      %3016 = vmatprep.subr.bf16.mxu0 0
      %3017 = vmatpush1.bf16.msra.mxu0 %v2946
      %3018 = vmatprep.subr.bf16.mxu0 0
      %3019 = vmatpush1.bf16.msra.mxu0 %v2947
      %3020 = vmatprep.subr.bf16.mxu0 0
      %3021 = vmatpush1.bf16.msra.mxu0 %v2948
      %3022 = vmatprep.subr.bf16.mxu0 0
      %3023 = vmatpush1.bf16.msra.mxu0 %v2949
      %3024 = vmatprep.subr.bf16.mxu0 0
      %3025 = vmatpush1.bf16.msra.mxu0 %v2950
      %3026 = vmatprep.subr.bf16.mxu0 0
      %3027 = vmatpush1.bf16.msra.mxu0 %v2951
      %3028 = vmatprep.subr.bf16.mxu0 0
      %3029 = vmatpush1.bf16.msra.mxu0 %v2952
      %3030 = vmatprep.subr.bf16.mxu0 0
      %3031 = vmatpush1.bf16.msra.mxu0 %v2953
      %3032 = vmatprep.subr.bf16.mxu0 0
      %3033 = vmatpush1.bf16.msra.mxu0 %v2954
      %3034 = vmatprep.subr.bf16.mxu0 0
      %3035 = vmatpush1.bf16.msra.mxu0 %v2955
      %3036 = vmatprep.mubr.bf16.mxu0 %v2734
      %3037 = vmatmul.mubr.bf16.gmra.mrb[0].mxu0 %v2733
      %v3038 = vpop.f32.mrb[0].mxu0
      %v3039 = vadd.f32 %v2810, %v3038
      %v3040 = vpop.f32.mrb[0].mxu0
      %v3041 = vpop.f32.mrb[0].mxu0
      %v3042 = vadd.f32 %v2810, %v3041
      %v3043 = vpop.f32.mrb[0].mxu0
      %3044 = vmatprep.mubr.bf16.mxu0 %v2738
      %3045 = vmatmul.mubr.bf16.gmra.mrb[0].mxu0 %v2737
      %v3046 = vpop.f32.mrb[0].mxu0
      %v3047 = vadd.f32 %v2810, %v3046
      %v3048 = vpop.f32.mrb[0].mxu0
      %v3049 = vpop.f32.mrb[0].mxu0
      %v3050 = vadd.f32 %v2810, %v3049
      %v3051 = vpop.f32.mrb[0].mxu0
      %3052 = vdwg.mxu0
      %3053 = vmatprep.subr.bf16.mxu0 0
      %3054 = vmatpush1.bf16.msra.mxu0 %v2956
      %3055 = vmatprep.subr.bf16.mxu0 0
      %3056 = vmatpush1.bf16.msra.mxu0 %v2957
      %3057 = vmatprep.subr.bf16.mxu0 0
      %3058 = vmatpush1.bf16.msra.mxu0 %v2958
      %3059 = vmatprep.subr.bf16.mxu0 0
      %3060 = vmatpush1.bf16.msra.mxu0 %v2959
      %3061 = vmatprep.subr.bf16.mxu0 0
      %3062 = vmatpush1.bf16.msra.mxu0 %v2960
      %3063 = vmatprep.subr.bf16.mxu0 0
      %3064 = vmatpush1.bf16.msra.mxu0 %v2961
      %3065 = vmatprep.subr.bf16.mxu0 0
      %3066 = vmatpush1.bf16.msra.mxu0 %v2962
      %3067 = vmatprep.subr.bf16.mxu0 0
      %3068 = vmatpush1.bf16.msra.mxu0 %v2963
      %3069 = vmatprep.subr.bf16.mxu0 0
      %3070 = vmatpush1.bf16.msra.mxu0 %v2964
      %3071 = vmatprep.subr.bf16.mxu0 0
      %3072 = vmatpush1.bf16.msra.mxu0 %v2965
      %3073 = vmatprep.subr.bf16.mxu0 0
      %3074 = vmatpush1.bf16.msra.mxu0 %v2966
      %3075 = vmatprep.subr.bf16.mxu0 0
      %3076 = vmatpush1.bf16.msra.mxu0 %v2967
      %3077 = vmatprep.subr.bf16.mxu0 0
      %3078 = vmatpush1.bf16.msra.mxu0 %v2968
      %3079 = vmatprep.subr.bf16.mxu0 0
      %3080 = vmatpush1.bf16.msra.mxu0 %v2969
      %3081 = vmatprep.subr.bf16.mxu0 0
      %3082 = vmatpush1.bf16.msra.mxu0 %v2970
      %3083 = vmatprep.subr.bf16.mxu0 0
      %3084 = vmatpush1.bf16.msra.mxu0 %v2971
      %3085 = vmatprep.mubr.bf16.mxu0 %v2736
      %3086 = vmatmul.mubr.bf16.gmra.mrb[0].mxu0 %v2735
      %v3087 = vpop.f32.mrb[0].mxu0
      %v3088 = vadd.f32 %v3039, %v3087
      %v3089 = vpop.f32.mrb[0].mxu0
      %v3090 = vpop.f32.mrb[0].mxu0
      %v3091 = vadd.f32 %v3042, %v3090
      %v3092 = vpop.f32.mrb[0].mxu0
      %3093 = vmatprep.mubr.bf16.mxu0 %v2740
      %3094 = vmatmul.mubr.bf16.gmra.mrb[0].mxu0 %v2739
      %v3095 = vpop.f32.mrb[0].mxu0
      %v3096 = vadd.f32 %v3047, %v3095
      %v3097 = vpop.f32.mrb[0].mxu0
      %v3098 = vpop.f32.mrb[0].mxu0
      %v3099 = vadd.f32 %v3050, %v3098
      %v3100 = vpop.f32.mrb[0].mxu0
      %3101 = vdwg.mxu0
      %v3102 = vadd.f32 %v2185, %v3088
      %v3103 = vadd.f32 %v2186, %v3091
      %v3104 = vadd.f32 %v2187, %v3096
      %v3105 = vadd.f32 %v2188, %v3099
      %s3106 = scalar_lea.vmem %s5, 1
      %v3107 = vld [vmem:[%s3106] sm:$0x1]
      %s3108 = scalar_lea.vmem %s6, 1
      %v3109 = vld [vmem:[%s3108] sm:$0x1]
      %3110 = vadd.xlane.f32.xlu0 %v3102
      %v3111 = vpop.xlane.xlu0 %3110
      %3112 = vadd.xlane.f32.xlu0 %v3103
      %v3113 = vpop.xlane.xlu0 %3112
      %3114 = vadd.xlane.f32.xlu0 %v3104
      %v3115 = vpop.xlane.xlu0 %3114
      %3116 = vadd.xlane.f32.xlu0 %v3105
      %v3117 = vpop.xlane.xlu0 %3116
      %v3118 = vmul.f32 %v3111, %v793
      %v3119 = vmul.f32 %v3113, %v793
      %v3120 = vmul.f32 %v3115, %v793
      %v3121 = vmul.f32 %v3117, %v793
      %v3122 = vmul.f32 %v3102, %v3102
      %v3123 = vmul.f32 %v3103, %v3103
      %v3124 = vmul.f32 %v3104, %v3104
      %v3125 = vmul.f32 %v3105, %v3105
      %3126 = vadd.xlane.f32.xlu0 %v3122
      %v3127 = vpop.xlane.xlu0 %3126
      %3128 = vadd.xlane.f32.xlu0 %v3123
      %v3129 = vpop.xlane.xlu0 %3128
      %3130 = vadd.xlane.f32.xlu0 %v3124
      %v3131 = vpop.xlane.xlu0 %3130
      %3132 = vadd.xlane.f32.xlu0 %v3125
      %v3133 = vpop.xlane.xlu0 %3132
      %v3134 = vmul.f32 %v3127, %v793
      %v3135 = vmul.f32 %v3129, %v793
      %v3136 = vmul.f32 %v3131, %v793
      %v3137 = vmul.f32 %v3133, %v793
      %v3138 = vmul.f32 %v3118, %v3118
      %v3139 = vmul.f32 %v3119, %v3119
      %v3140 = vmul.f32 %v3120, %v3120
      %v3141 = vmul.f32 %v3121, %v3121
      %v3142 = vsub.f32 %v3134, %v3138
      %v3143 = vsub.f32 %v3135, %v3139
      %v3144 = vsub.f32 %v3136, %v3140
      %v3145 = vsub.f32 %v3137, %v3141
      %v3146 = vmax.f32 %v3142, 0.0
      %v3147 = vmax.f32 %v3143, 0.0
      %v3148 = vmax.f32 %v3144, 0.0
      %v3149 = vmax.f32 %v3145, 0.0
      %v3150 = vsub.f32 %v3102, %v3118
      %v3151 = vsub.f32 %v3103, %v3119
      %v3152 = vsub.f32 %v3104, %v3120
      %v3153 = vsub.f32 %v3105, %v3121
      %v3154 = vadd.f32 %v3146, 1e-06
      %v3155 = vadd.f32 %v3147, 1e-06
      %v3156 = vadd.f32 %v3148, 1e-06
      %v3157 = vadd.f32 %v3149, 1e-06
      %v3158 = vrsqrt.pop %v3154
      %v3159 = vrsqrt.pop %v3155
      %v3160 = vrsqrt.pop %v3156
      %v3161 = vrsqrt.pop %v3157
      %v3162 = vmul.f32 %v3150, %v3158
      %v3163 = vmul.f32 %v3151, %v3159
      %v3164 = vmul.f32 %v3152, %v3160
      %v3165 = vmul.f32 %v3153, %v3161
      %v3167 = vlaneseq
      %v3168 = vshrl.u32 %v3167, 7
      %v3169 = vsub.s32 0, %v3168
      %v3170 = vrot.slane %v3107, %v3169
      %v3172 = vmul.f32 %v3162, %v3170
      %v3173 = vmul.f32 %v3163, %v3170
      %v3174 = vmul.f32 %v3164, %v3170
      %v3175 = vmul.f32 %v3165, %v3170
      %v3177 = vlaneseq
      %v3178 = vshrl.u32 %v3177, 7
      %v3179 = vsub.s32 0, %v3178
      %v3180 = vrot.slane %v3109, %v3179
      %v3182 = vadd.f32 %v3172, %v3180
      %v3183 = vadd.f32 %v3173, %v3180
      %v3184 = vadd.f32 %v3174, %v3180
      %v3185 = vadd.f32 %v3175, %v3180
      %v3186 = vpack.c.bf16 %v3183, %v3182
      %v3187 = vpack.c.bf16 %v3185, %v3184
      %s3188 = scalar_lea.vmem %s7, 192
      %v3189 = vld [vmem:[%s3188] sm:$0xff]
      %v3190 = vld [vmem:[%s3188 + $0x8] sm:$0xf]
      %v3191 = vld [vmem:[%s3188 + $0xc] sm:$0xff]
      %v3192 = vld [vmem:[%s3188 + $0x14] sm:$0xf]
      %v3193 = vld [vmem:[%s3188 + $0x18] sm:$0xff]
      %v3194 = vld [vmem:[%s3188 + $0x20] sm:$0xf]
      %v3195 = vld [vmem:[%s3188 + $0x24] sm:$0xff]
      %v3196 = vld [vmem:[%s3188 + $0x2c] sm:$0xf]
      %v3197 = vld [vmem:[%s3188 + $0x30] sm:$0xff]
      %v3198 = vld [vmem:[%s3188 + $0x38] sm:$0xf]
      %v3199 = vld [vmem:[%s3188 + $0x3c] sm:$0xff]
      %v3200 = vld [vmem:[%s3188 + $0x44] sm:$0xf]
      %v3201 = vld [vmem:[%s3188 + $0x48] sm:$0xff]
      %v3202 = vld [vmem:[%s3188 + $0x50] sm:$0xf]
      %v3203 = vld [vmem:[%s3188 + $0x54] sm:$0xff]
      %v3204 = vld [vmem:[%s3188 + $0x5c] sm:$0xf]
      %v3205 = vld [vmem:[%s3188 + $0x60] sm:$0xff]
      %v3206 = vld [vmem:[%s3188 + $0x68] sm:$0xf]
      %v3207 = vld [vmem:[%s3188 + $0x6c] sm:$0xff]
      %v3208 = vld [vmem:[%s3188 + $0x74] sm:$0xf]
      %v3209 = vld [vmem:[%s3188 + $0x78] sm:$0xff]
      %v3210 = vld [vmem:[%s3188 + $0x80] sm:$0xf]
      %v3211 = vld [vmem:[%s3188 + $0x84] sm:$0xff]
      %v3212 = vld [vmem:[%s3188 + $0x8c] sm:$0xf]
      %v3213 = vld [vmem:[%s3188 + $0x90] sm:$0xff]
      %v3214 = vld [vmem:[%s3188 + $0x98] sm:$0xf]
      %v3215 = vld [vmem:[%s3188 + $0x9c] sm:$0xff]
      %v3216 = vld [vmem:[%s3188 + $0xa4] sm:$0xf]
      %v3217 = vld [vmem:[%s3188 + $0xa8] sm:$0xff]
      %v3218 = vld [vmem:[%s3188 + $0xb0] sm:$0xf]
      %v3219 = vld [vmem:[%s3188 + $0xb4] sm:$0xff]
      %v3220 = vld [vmem:[%s3188 + $0xbc] sm:$0xf]
      %s3221 = scalar_lea.vmem %s8, 3
      %v3222 = vld [vmem:[%s3221] sm:$0x7]
      %v3224 = vlaneseq
      %v3225 = vshrl.u32 %v3224, 7
      %v3226 = vsub.s32 0, %v3225
      %v3227 = vrot.slane %v3222, %v3226
      %v3228 = vlaneseq
      %v3229 = vshrl.u32 %v3228, 7
      %v3230 = vsub.s32 1, %v3229
      %v3231 = vrot.slane %v3222, %v3230
      %v3232 = vlaneseq
      %v3233 = vshrl.u32 %v3232, 7
      %v3234 = vsub.s32 2, %v3233
      %v3235 = vrot.slane %v3222, %v3234
      %v3271 = vunpack.c.l.b16 %v3189
      %v3272 = vunpack.c.h.b16 %v3189
      %v3273 = vunpack.c.l.b16 %v3190
      %v3274 = vunpack.c.l.b16 %v3191
      %v3275 = vunpack.c.h.b16 %v3191
      %v3276 = vunpack.c.l.b16 %v3192
      %v3277 = vunpack.c.l.b16 %v3193
      %v3278 = vunpack.c.h.b16 %v3193
      %v3279 = vunpack.c.l.b16 %v3194
      %v3280 = vunpack.c.l.b16 %v3195
      %v3281 = vunpack.c.h.b16 %v3195
      %v3282 = vunpack.c.l.b16 %v3196
      %v3283 = vunpack.c.l.b16 %v3197
      %v3284 = vunpack.c.h.b16 %v3197
      %v3285 = vunpack.c.l.b16 %v3198
      %v3286 = vunpack.c.l.b16 %v3199
      %v3287 = vunpack.c.h.b16 %v3199
      %v3288 = vunpack.c.l.b16 %v3200
      %v3289 = vunpack.c.l.b16 %v3201
      %v3290 = vunpack.c.h.b16 %v3201
      %v3291 = vunpack.c.l.b16 %v3202
      %v3292 = vunpack.c.l.b16 %v3203
      %v3293 = vunpack.c.h.b16 %v3203
      %v3294 = vunpack.c.l.b16 %v3204
      %v3295 = vunpack.c.l.b16 %v3205
      %v3296 = vunpack.c.h.b16 %v3205
      %v3297 = vunpack.c.l.b16 %v3206
      %v3298 = vunpack.c.l.b16 %v3207
      %v3299 = vunpack.c.h.b16 %v3207
      %v3300 = vunpack.c.l.b16 %v3208
      %v3301 = vunpack.c.l.b16 %v3209
      %v3302 = vunpack.c.h.b16 %v3209
      %v3303 = vunpack.c.l.b16 %v3210
      %v3304 = vunpack.c.l.b16 %v3211
      %v3305 = vunpack.c.h.b16 %v3211
      %v3306 = vunpack.c.l.b16 %v3212
      %v3307 = vunpack.c.l.b16 %v3213
      %v3308 = vunpack.c.h.b16 %v3213
      %v3309 = vunpack.c.l.b16 %v3214
      %v3310 = vunpack.c.l.b16 %v3215
      %v3311 = vunpack.c.h.b16 %v3215
      %v3312 = vunpack.c.l.b16 %v3216
      %v3313 = vunpack.c.l.b16 %v3217
      %v3314 = vunpack.c.h.b16 %v3217
      %v3315 = vunpack.c.l.b16 %v3218
      %v3316 = vunpack.c.l.b16 %v3219
      %v3317 = vunpack.c.h.b16 %v3219
      %v3318 = vunpack.c.l.b16 %v3220
      %v3319 = vpack.c.b16 %v3274, %v3271
      %v3320 = vpack.c.b16 %v3275, %v3272
      %v3321 = vpack.c.b16 %v3276, %v3273
      %v3322 = vpack.c.b16 %v3280, %v3277
      %v3323 = vpack.c.b16 %v3281, %v3278
      %v3324 = vpack.c.b16 %v3282, %v3279
      %v3325 = vpack.c.b16 %v3286, %v3283
      %v3326 = vpack.c.b16 %v3287, %v3284
      %v3327 = vpack.c.b16 %v3288, %v3285
      %v3328 = vpack.c.b16 %v3292, %v3289
      %v3329 = vpack.c.b16 %v3293, %v3290
      %v3330 = vpack.c.b16 %v3294, %v3291
      %v3331 = vpack.c.b16 %v3298, %v3295
      %v3332 = vpack.c.b16 %v3299, %v3296
      %v3333 = vpack.c.b16 %v3300, %v3297
      %v3334 = vpack.c.b16 %v3304, %v3301
      %v3335 = vpack.c.b16 %v3305, %v3302
      %v3336 = vpack.c.b16 %v3306, %v3303
      %v3337 = vpack.c.b16 %v3310, %v3307
      %v3338 = vpack.c.b16 %v3311, %v3308
      %v3339 = vpack.c.b16 %v3312, %v3309
      %v3340 = vpack.c.b16 %v3316, %v3313
      %v3341 = vpack.c.b16 %v3317, %v3314
      %v3342 = vpack.c.b16 %v3318, %v3315
      %3367 = vmatprep.subr.bf16.mxu0 %v3320
      %3368 = vmatpush1.bf16.msra.mxu0 %v3319
      %3369 = vmatprep.subr.bf16.mxu0 %v3323
      %3370 = vmatpush1.bf16.msra.mxu0 %v3322
      %3371 = vmatprep.subr.bf16.mxu0 %v3326
      %3372 = vmatpush1.bf16.msra.mxu0 %v3325
      %3373 = vmatprep.subr.bf16.mxu0 %v3329
      %3374 = vmatpush1.bf16.msra.mxu0 %v3328
      %3375 = vmatprep.subr.bf16.mxu0 %v3332
      %3376 = vmatpush1.bf16.msra.mxu0 %v3331
      %3377 = vmatprep.subr.bf16.mxu0 %v3335
      %3378 = vmatpush1.bf16.msra.mxu0 %v3334
      %3379 = vmatprep.subr.bf16.mxu0 %v3338
      %3380 = vmatpush1.bf16.msra.mxu0 %v3337
      %3381 = vmatprep.subr.bf16.mxu0 %v3341
      %3382 = vmatpush1.bf16.msra.mxu0 %v3340
      %3383 = vmatprep.subr.bf16.mxu0 0
      %3384 = vmatpush1.bf16.msra.mxu0 0
      %3385 = vmatprep.subr.bf16.mxu0 0
      %3386 = vmatpush1.bf16.msra.mxu0 0
      %3387 = vmatprep.subr.bf16.mxu0 0
      %3388 = vmatpush1.bf16.msra.mxu0 0
      %3389 = vmatprep.subr.bf16.mxu0 0
      %3390 = vmatpush1.bf16.msra.mxu0 0
      %3391 = vmatprep.subr.bf16.mxu0 0
      %3392 = vmatpush1.bf16.msra.mxu0 0
      %3393 = vmatprep.subr.bf16.mxu0 0
      %3394 = vmatpush1.bf16.msra.mxu0 0
      %3395 = vmatprep.subr.bf16.mxu0 0
      %3396 = vmatpush1.bf16.msra.mxu0 0
      %3397 = vmatprep.subr.bf16.mxu0 0
      %3398 = vmatpush1.bf16.msra.mxu0 0
      %3399 = vmatprep.mubr.bf16.mxu0 0
      %3400 = vmatmul.mubr.bf16.gmra.mrb[0].mxu0 %v3186
      %v3401 = vpop.f32.mrb[0].mxu0
      %v3402 = vadd.f32 %v3227, %v3401
      %v3403 = vpop.f32.mrb[0].mxu0
      %v3404 = vadd.f32 %v3231, %v3403
      %v3405 = vpop.f32.mrb[0].mxu0
      %v3406 = vadd.f32 %v3227, %v3405
      %v3407 = vpop.f32.mrb[0].mxu0
      %v3408 = vadd.f32 %v3231, %v3407
      %3409 = vmatprep.mubr.bf16.mxu0 0
      %3410 = vmatmul.mubr.bf16.gmra.mrb[0].mxu0 %v3187
      %v3411 = vpop.f32.mrb[0].mxu0
      %v3412 = vadd.f32 %v3227, %v3411
      %v3413 = vpop.f32.mrb[0].mxu0
      %v3414 = vadd.f32 %v3231, %v3413
      %v3415 = vpop.f32.mrb[0].mxu0
      %v3416 = vadd.f32 %v3227, %v3415
      %v3417 = vpop.f32.mrb[0].mxu0
      %v3418 = vadd.f32 %v3231, %v3417
      %3419 = vdwg.mxu0
      %3420 = vmatprep.subr.bf16.mxu0 0
      %3421 = vmatpush1.bf16.msra.mxu0 %v3321
      %3422 = vmatprep.subr.bf16.mxu0 0
      %3423 = vmatpush1.bf16.msra.mxu0 %v3324
      %3424 = vmatprep.subr.bf16.mxu0 0
      %3425 = vmatpush1.bf16.msra.mxu0 %v3327
      %3426 = vmatprep.subr.bf16.mxu0 0
      %3427 = vmatpush1.bf16.msra.mxu0 %v3330
      %3428 = vmatprep.subr.bf16.mxu0 0
      %3429 = vmatpush1.bf16.msra.mxu0 %v3333
      %3430 = vmatprep.subr.bf16.mxu0 0
      %3431 = vmatpush1.bf16.msra.mxu0 %v3336
      %3432 = vmatprep.subr.bf16.mxu0 0
      %3433 = vmatpush1.bf16.msra.mxu0 %v3339
      %3434 = vmatprep.subr.bf16.mxu0 0
      %3435 = vmatpush1.bf16.msra.mxu0 %v3342
      %3436 = vmatprep.subr.bf16.mxu0 0
      %3437 = vmatpush1.bf16.msra.mxu0 0
      %3438 = vmatprep.subr.bf16.mxu0 0
      %3439 = vmatpush1.bf16.msra.mxu0 0
      %3440 = vmatprep.subr.bf16.mxu0 0
      %3441 = vmatpush1.bf16.msra.mxu0 0
      %3442 = vmatprep.subr.bf16.mxu0 0
      %3443 = vmatpush1.bf16.msra.mxu0 0
      %3444 = vmatprep.subr.bf16.mxu0 0
      %3445 = vmatpush1.bf16.msra.mxu0 0
      %3446 = vmatprep.subr.bf16.mxu0 0
      %3447 = vmatpush1.bf16.msra.mxu0 0
      %3448 = vmatprep.subr.bf16.mxu0 0
      %3449 = vmatpush1.bf16.msra.mxu0 0
      %3450 = vmatprep.subr.bf16.mxu0 0
      %3451 = vmatpush1.bf16.msra.mxu0 0
      %3452 = vmatprep.mubr.bf16.mxu0 0
      %3453 = vmatmul.mubr.bf16.gmra.mrb[0].mxu0 %v3186
      %v3454 = vpop.f32.mrb[0].mxu0
      %v3455 = vadd.f32 %v3235, %v3454
      %v3456 = vpop.f32.mrb[0].mxu0
      %v3457 = vpop.f32.mrb[0].mxu0
      %v3458 = vadd.f32 %v3235, %v3457
      %v3459 = vpop.f32.mrb[0].mxu0
      %3460 = vmatprep.mubr.bf16.mxu0 0
      %3461 = vmatmul.mubr.bf16.gmra.mrb[0].mxu0 %v3187
      %v3462 = vpop.f32.mrb[0].mxu0
      %v3463 = vadd.f32 %v3235, %v3462
      %v3464 = vpop.f32.mrb[0].mxu0
      %v3465 = vpop.f32.mrb[0].mxu0
      %v3466 = vadd.f32 %v3235, %v3465
      %v3467 = vpop.f32.mrb[0].mxu0
      %3468 = vdwg.mxu0
      %v3469 = vpack.c.bf16 %v3406, %v3402
      %v3470 = vpack.c.bf16 %v3408, %v3404
      %v3471 = vpack.c.bf16 %v3458, %v3455
      %v3472 = vpack.c.bf16 %v3416, %v3412
      %v3473 = vpack.c.bf16 %v3418, %v3414
      %v3474 = vpack.c.bf16 %v3466, %v3463
      %s3475 = scalar_lea.vmem %s9, 64
      %v3476 = vld [vmem:[%s3475] sm:$0xf]
      %v3477 = vld [vmem:[%s3475 + $0x4] sm:$0xf]
      %v3478 = vld [vmem:[%s3475 + $0x8] sm:$0xf]
      %v3479 = vld [vmem:[%s3475 + $0xc] sm:$0xf]
      %v3480 = vld [vmem:[%s3475 + $0x10] sm:$0xf]
      %v3481 = vld [vmem:[%s3475 + $0x14] sm:$0xf]
      %v3482 = vld [vmem:[%s3475 + $0x18] sm:$0xf]
      %v3483 = vld [vmem:[%s3475 + $0x1c] sm:$0xf]
      %v3484 = vld [vmem:[%s3475 + $0x20] sm:$0xf]
      %v3485 = vld [vmem:[%s3475 + $0x24] sm:$0xf]
      %v3486 = vld [vmem:[%s3475 + $0x28] sm:$0xf]
      %v3487 = vld [vmem:[%s3475 + $0x2c] sm:$0xf]
      %v3488 = vld [vmem:[%s3475 + $0x30] sm:$0xf]
      %v3489 = vld [vmem:[%s3475 + $0x34] sm:$0xf]
      %v3490 = vld [vmem:[%s3475 + $0x38] sm:$0xf]
      %v3491 = vld [vmem:[%s3475 + $0x3c] sm:$0xf]
      %v3493 = vsel %vm1161, %v3469, 0
      %v3496 = vsel %vm1161, %v3472, 0
      %v3499 = vsel %vm1161, %v3470, 0
      %v3502 = vsel %vm1161, %v3473, 0
      %3504 = vmatprep.subr.bf16.mxu0 0
      %3505 = vmatpush1.bf16.xpose.msra.mxu0 %v3499
      %3506 = vmatprep.subr.bf16.mxu0 0
      %3507 = vmatpush1.bf16.xpose.msra.mxu0 %v3502
      %3508 = vmatprep.subr.bf16.mxu0 0
      %3509 = vmatpush1.bf16.xpose.msra.mxu0 0
      %3510 = vmatprep.subr.bf16.mxu0 0
      %3511 = vmatpush1.bf16.xpose.msra.mxu0 0
      %3512 = vmatprep.subr.bf16.mxu0 0
      %3513 = vmatpush1.bf16.xpose.msra.mxu0 0
      %3514 = vmatprep.subr.bf16.mxu0 0
      %3515 = vmatpush1.bf16.xpose.msra.mxu0 0
      %3516 = vmatprep.subr.bf16.mxu0 0
      %3517 = vmatpush1.bf16.xpose.msra.mxu0 0
      %3518 = vmatprep.subr.bf16.mxu0 0
      %3519 = vmatpush1.bf16.xpose.msra.mxu0 0
      %3520 = vmatprep.subr.bf16.mxu0 0
      %3521 = vmatpush1.bf16.xpose.msra.mxu0 0
      %3522 = vmatprep.subr.bf16.mxu0 0
      %3523 = vmatpush1.bf16.xpose.msra.mxu0 0
      %3524 = vmatprep.subr.bf16.mxu0 0
      %3525 = vmatpush1.bf16.xpose.msra.mxu0 0
      %3526 = vmatprep.subr.bf16.mxu0 0
      %3527 = vmatpush1.bf16.xpose.msra.mxu0 0
      %3528 = vmatprep.subr.bf16.mxu0 0
      %3529 = vmatpush1.bf16.xpose.msra.mxu0 0
      %3530 = vmatprep.subr.bf16.mxu0 0
      %3531 = vmatpush1.bf16.xpose.msra.mxu0 0
      %3532 = vmatprep.subr.bf16.mxu0 0
      %3533 = vmatpush1.bf16.xpose.msra.mxu0 0
      %3534 = vmatprep.subr.bf16.mxu0 0
      %3535 = vmatpush1.bf16.xpose.msra.mxu0 0
      %3536 = vmatprep.mubr.bf16.mxu0 0
      %3537 = vmatmul.mubr.bf16.gmra.mrb[0].mxu0 %v3493
      %v3538 = vpop.f32.mrb[0].mxu0
      %v3539 = vadd.f32 0.0, %v3538
      %v3540 = vpop.f32.mrb[0].mxu0
      %v3541 = vpop.f32.mrb[0].mxu0
      %v3542 = vadd.f32 0.0, %v3541
      %v3543 = vpop.f32.mrb[0].mxu0
      %3544 = vmatprep.mubr.bf16.mxu0 0
      %3545 = vmatmul.mubr.bf16.gmra.mrb[0].mxu0 %v3496
      %v3546 = vpop.f32.mrb[0].mxu0
      %v3547 = vadd.f32 0.0, %v3546
      %v3548 = vpop.f32.mrb[0].mxu0
      %v3549 = vpop.f32.mrb[0].mxu0
      %v3550 = vadd.f32 0.0, %v3549
      %v3551 = vpop.f32.mrb[0].mxu0
      %3552 = vdwg.mxu0
      %v3553 = vmul.f32 %v3539, 0.17677669
      %v3554 = vmul.f32 %v3542, 0.17677669
      %v3555 = vmul.f32 %v3547, 0.17677669
      %v3556 = vmul.f32 %v3550, 0.17677669
      %v3557 = vadd.f32 %v3553, %v782
      %v3558 = vadd.f32 %v3554, %v782
      %v3559 = vadd.f32 %v3555, %v782
      %v3560 = vadd.f32 %v3556, %v782
      %v3561 = vsel %vm1161, %v3557, -inf
      %3562 = vmax.xlane.f32.xlu0 %v3561
      %v3563 = vpop.xlane.xlu0 %3562
      %v3564 = vsel %vm1161, %v3558, -inf
      %3565 = vmax.xlane.f32.xlu0 %v3564
      %v3566 = vpop.xlane.xlu0 %3565
      %v3567 = vsel %vm1161, %v3559, -inf
      %3568 = vmax.xlane.f32.xlu0 %v3567
      %v3569 = vpop.xlane.xlu0 %3568
      %v3570 = vsel %vm1161, %v3560, -inf
      %3571 = vmax.xlane.f32.xlu0 %v3570
      %v3572 = vpop.xlane.xlu0 %3571
      %v3573 = vsub.f32 %v3557, %v3563
      %v3574 = vsub.f32 %v3558, %v3566
      %v3575 = vsub.f32 %v3559, %v3569
      %v3576 = vsub.f32 %v3560, %v3572
      %v3577 = vmul.f32 %v3573, 1.442695
      %v3578 = vpow.pop %v3577
      %v3579 = vmul.f32 %v3574, 1.442695
      %v3580 = vpow.pop %v3579
      %v3581 = vmul.f32 %v3575, 1.442695
      %v3582 = vpow.pop %v3581
      %v3583 = vmul.f32 %v3576, 1.442695
      %v3584 = vpow.pop %v3583
      %v3585 = vsel %vm1161, %v3578, 0.0
      %3586 = vadd.xlane.f32.xlu0 %v3585
      %v3587 = vpop.xlane.xlu0 %3586
      %v3588 = vsel %vm1161, %v3580, 0.0
      %3589 = vadd.xlane.f32.xlu0 %v3588
      %v3590 = vpop.xlane.xlu0 %3589
      %v3591 = vsel %vm1161, %v3582, 0.0
      %3592 = vadd.xlane.f32.xlu0 %v3591
      %v3593 = vpop.xlane.xlu0 %3592
      %v3594 = vsel %vm1161, %v3584, 0.0
      %3595 = vadd.xlane.f32.xlu0 %v3594
      %v3596 = vpop.xlane.xlu0 %3595
      %v3597 = vpack.c.bf16 %v3580, %v3578
      %v3598 = vpack.c.bf16 %v3584, %v3582
      %v3600 = vsel %vm1161, %v3597, 0
      %v3603 = vsel %vm1161, %v3598, 0
      %3605 = vmatprep.subr.bf16.mxu0 0
      %3606 = vmatpush1.bf16.msra.mxu0 %v3471
      %3607 = vmatprep.subr.bf16.mxu0 0
      %3608 = vmatpush1.bf16.msra.mxu0 %v3474
      %3609 = vmatprep.subr.bf16.mxu0 0
      %3610 = vmatpush1.bf16.msra.mxu0 0
      %3611 = vmatprep.subr.bf16.mxu0 0
      %3612 = vmatpush1.bf16.msra.mxu0 0
      %3613 = vmatprep.subr.bf16.mxu0 0
      %3614 = vmatpush1.bf16.msra.mxu0 0
      %3615 = vmatprep.subr.bf16.mxu0 0
      %3616 = vmatpush1.bf16.msra.mxu0 0
      %3617 = vmatprep.subr.bf16.mxu0 0
      %3618 = vmatpush1.bf16.msra.mxu0 0
      %3619 = vmatprep.subr.bf16.mxu0 0
      %3620 = vmatpush1.bf16.msra.mxu0 0
      %3621 = vmatprep.subr.bf16.mxu0 0
      %3622 = vmatpush1.bf16.msra.mxu0 0
      %3623 = vmatprep.subr.bf16.mxu0 0
      %3624 = vmatpush1.bf16.msra.mxu0 0
      %3625 = vmatprep.subr.bf16.mxu0 0
      %3626 = vmatpush1.bf16.msra.mxu0 0
      %3627 = vmatprep.subr.bf16.mxu0 0
      %3628 = vmatpush1.bf16.msra.mxu0 0
      %3629 = vmatprep.subr.bf16.mxu0 0
      %3630 = vmatpush1.bf16.msra.mxu0 0
      %3631 = vmatprep.subr.bf16.mxu0 0
      %3632 = vmatpush1.bf16.msra.mxu0 0
      %3633 = vmatprep.subr.bf16.mxu0 0
      %3634 = vmatpush1.bf16.msra.mxu0 0
      %3635 = vmatprep.subr.bf16.mxu0 0
      %3636 = vmatpush1.bf16.msra.mxu0 0
      %3637 = vmatprep.mubr.bf16.mxu0 0
      %3638 = vmatmul.mubr.bf16.gmra.mrb[0].mxu0 %v3600
      %v3639 = vpop.f32.mrb[0].mxu0
      %v3640 = vadd.f32 0.0, %v3639
      %v3641 = vpop.f32.mrb[0].mxu0
      %v3642 = vpop.f32.mrb[0].mxu0
      %v3643 = vadd.f32 0.0, %v3642
      %v3644 = vpop.f32.mrb[0].mxu0
      %3645 = vmatprep.mubr.bf16.mxu0 0
      %3646 = vmatmul.mubr.bf16.gmra.mrb[0].mxu0 %v3603
      %v3647 = vpop.f32.mrb[0].mxu0
      %v3648 = vadd.f32 0.0, %v3647
      %v3649 = vpop.f32.mrb[0].mxu0
      %v3650 = vpop.f32.mrb[0].mxu0
      %v3651 = vadd.f32 0.0, %v3650
      %v3652 = vpop.f32.mrb[0].mxu0
      %3653 = vdwg.mxu0
      %v3654 = vrcp.pop %v3587
      %v3655 = vrcp.pop %v3590
      %v3656 = vrcp.pop %v3593
      %v3657 = vrcp.pop %v3596
      %v3658 = vmul.f32 %v3640, %v3654
      %v3659 = vmul.f32 %v3643, %v3655
      %v3660 = vmul.f32 %v3648, %v3656
      %v3661 = vmul.f32 %v3651, %v3657
      %v3662 = vpack.c.bf16 %v3659, %v3658
      %v3663 = vpack.c.bf16 %v3661, %v3660
      %3666 = vrot.lane.b32.xlu0 %v3469, 96
      %v3667 = vpop.permute.xlu0 %3666
      %3668 = vrot.lane.b32.xlu0 %v3472, 96
      %v3669 = vpop.permute.xlu0 %3668
      %3672 = vrot.lane.b32.xlu0 %v3470, 96
      %v3673 = vpop.permute.xlu0 %3672
      %3674 = vrot.lane.b32.xlu0 %v3473, 96
      %v3675 = vpop.permute.xlu0 %3674
      %v3677 = vsel %vm1161, %v3667, 0
      %v3680 = vsel %vm1161, %v3669, 0
      %v3683 = vsel %vm1161, %v3673, 0
      %v3686 = vsel %vm1161, %v3675, 0
      %3688 = vmatprep.subr.bf16.mxu0 0
      %3689 = vmatpush1.bf16.xpose.msra.mxu0 %v3683
      %3690 = vmatprep.subr.bf16.mxu0 0
      %3691 = vmatpush1.bf16.xpose.msra.mxu0 %v3686
      %3692 = vmatprep.subr.bf16.mxu0 0
      %3693 = vmatpush1.bf16.xpose.msra.mxu0 0
      %3694 = vmatprep.subr.bf16.mxu0 0
      %3695 = vmatpush1.bf16.xpose.msra.mxu0 0
      %3696 = vmatprep.subr.bf16.mxu0 0
      %3697 = vmatpush1.bf16.xpose.msra.mxu0 0
      %3698 = vmatprep.subr.bf16.mxu0 0
      %3699 = vmatpush1.bf16.xpose.msra.mxu0 0
      %3700 = vmatprep.subr.bf16.mxu0 0
      %3701 = vmatpush1.bf16.xpose.msra.mxu0 0
      %3702 = vmatprep.subr.bf16.mxu0 0
      %3703 = vmatpush1.bf16.xpose.msra.mxu0 0
      %3704 = vmatprep.subr.bf16.mxu0 0
      %3705 = vmatpush1.bf16.xpose.msra.mxu0 0
      %3706 = vmatprep.subr.bf16.mxu0 0
      %3707 = vmatpush1.bf16.xpose.msra.mxu0 0
      %3708 = vmatprep.subr.bf16.mxu0 0
      %3709 = vmatpush1.bf16.xpose.msra.mxu0 0
      %3710 = vmatprep.subr.bf16.mxu0 0
      %3711 = vmatpush1.bf16.xpose.msra.mxu0 0
      %3712 = vmatprep.subr.bf16.mxu0 0
      %3713 = vmatpush1.bf16.xpose.msra.mxu0 0
      %3714 = vmatprep.subr.bf16.mxu0 0
      %3715 = vmatpush1.bf16.xpose.msra.mxu0 0
      %3716 = vmatprep.subr.bf16.mxu0 0
      %3717 = vmatpush1.bf16.xpose.msra.mxu0 0
      %3718 = vmatprep.subr.bf16.mxu0 0
      %3719 = vmatpush1.bf16.xpose.msra.mxu0 0
      %3720 = vmatprep.mubr.bf16.mxu0 0
      %3721 = vmatmul.mubr.bf16.gmra.mrb[0].mxu0 %v3677
      %v3722 = vpop.f32.mrb[0].mxu0
      %v3723 = vadd.f32 0.0, %v3722
      %v3724 = vpop.f32.mrb[0].mxu0
      %v3725 = vpop.f32.mrb[0].mxu0
      %v3726 = vadd.f32 0.0, %v3725
      %v3727 = vpop.f32.mrb[0].mxu0
      %3728 = vmatprep.mubr.bf16.mxu0 0
      %3729 = vmatmul.mubr.bf16.gmra.mrb[0].mxu0 %v3680
      %v3730 = vpop.f32.mrb[0].mxu0
      %v3731 = vadd.f32 0.0, %v3730
      %v3732 = vpop.f32.mrb[0].mxu0
      %v3733 = vpop.f32.mrb[0].mxu0
      %v3734 = vadd.f32 0.0, %v3733
      %v3735 = vpop.f32.mrb[0].mxu0
      %3736 = vdwg.mxu0
      %v3737 = vmul.f32 %v3723, 0.17677669
      %v3738 = vmul.f32 %v3726, 0.17677669
      %v3739 = vmul.f32 %v3731, 0.17677669
      %v3740 = vmul.f32 %v3734, 0.17677669
      %v3741 = vadd.f32 %v3737, %v782
      %v3742 = vadd.f32 %v3738, %v782
      %v3743 = vadd.f32 %v3739, %v782
      %v3744 = vadd.f32 %v3740, %v782
      %v3745 = vsel %vm1161, %v3741, -inf
      %3746 = vmax.xlane.f32.xlu0 %v3745
      %v3747 = vpop.xlane.xlu0 %3746
      %v3748 = vsel %vm1161, %v3742, -inf
      %3749 = vmax.xlane.f32.xlu0 %v3748
      %v3750 = vpop.xlane.xlu0 %3749
      %v3751 = vsel %vm1161, %v3743, -inf
      %3752 = vmax.xlane.f32.xlu0 %v3751
      %v3753 = vpop.xlane.xlu0 %3752
      %v3754 = vsel %vm1161, %v3744, -inf
      %3755 = vmax.xlane.f32.xlu0 %v3754
      %v3756 = vpop.xlane.xlu0 %3755
      %v3757 = vsub.f32 %v3741, %v3747
      %v3758 = vsub.f32 %v3742, %v3750
      %v3759 = vsub.f32 %v3743, %v3753
      %v3760 = vsub.f32 %v3744, %v3756
      %v3761 = vmul.f32 %v3757, 1.442695
      %v3762 = vpow.pop %v3761
      %v3763 = vmul.f32 %v3758, 1.442695
      %v3764 = vpow.pop %v3763
      %v3765 = vmul.f32 %v3759, 1.442695
      %v3766 = vpow.pop %v3765
      %v3767 = vmul.f32 %v3760, 1.442695
      %v3768 = vpow.pop %v3767
      %v3769 = vsel %vm1161, %v3762, 0.0
      %3770 = vadd.xlane.f32.xlu0 %v3769
      %v3771 = vpop.xlane.xlu0 %3770
      %v3772 = vsel %vm1161, %v3764, 0.0
      %3773 = vadd.xlane.f32.xlu0 %v3772
      %v3774 = vpop.xlane.xlu0 %3773
      %v3775 = vsel %vm1161, %v3766, 0.0
      %3776 = vadd.xlane.f32.xlu0 %v3775
      %v3777 = vpop.xlane.xlu0 %3776
      %v3778 = vsel %vm1161, %v3768, 0.0
      %3779 = vadd.xlane.f32.xlu0 %v3778
      %v3780 = vpop.xlane.xlu0 %3779
      %v3781 = vpack.c.bf16 %v3764, %v3762
      %v3782 = vpack.c.bf16 %v3768, %v3766
      %3785 = vrot.lane.b32.xlu0 %v3471, 96
      %v3786 = vpop.permute.xlu0 %3785
      %3787 = vrot.lane.b32.xlu0 %v3474, 96
      %v3788 = vpop.permute.xlu0 %3787
      %v3792 = vsel %vm1161, %v3781, 0
      %v3795 = vsel %vm1161, %v3782, 0
      %3797 = vmatprep.subr.bf16.mxu0 0
      %3798 = vmatpush1.bf16.msra.mxu0 %v3786
      %3799 = vmatprep.subr.bf16.mxu0 0
      %3800 = vmatpush1.bf16.msra.mxu0 %v3788
      %3801 = vmatprep.subr.bf16.mxu0 0
      %3802 = vmatpush1.bf16.msra.mxu0 0
      %3803 = vmatprep.subr.bf16.mxu0 0
      %3804 = vmatpush1.bf16.msra.mxu0 0
      %3805 = vmatprep.subr.bf16.mxu0 0
      %3806 = vmatpush1.bf16.msra.mxu0 0
      %3807 = vmatprep.subr.bf16.mxu0 0
      %3808 = vmatpush1.bf16.msra.mxu0 0
      %3809 = vmatprep.subr.bf16.mxu0 0
      %3810 = vmatpush1.bf16.msra.mxu0 0
      %3811 = vmatprep.subr.bf16.mxu0 0
      %3812 = vmatpush1.bf16.msra.mxu0 0
      %3813 = vmatprep.subr.bf16.mxu0 0
      %3814 = vmatpush1.bf16.msra.mxu0 0
      %3815 = vmatprep.subr.bf16.mxu0 0
      %3816 = vmatpush1.bf16.msra.mxu0 0
      %3817 = vmatprep.subr.bf16.mxu0 0
      %3818 = vmatpush1.bf16.msra.mxu0 0
      %3819 = vmatprep.subr.bf16.mxu0 0
      %3820 = vmatpush1.bf16.msra.mxu0 0
      %3821 = vmatprep.subr.bf16.mxu0 0
      %3822 = vmatpush1.bf16.msra.mxu0 0
      %3823 = vmatprep.subr.bf16.mxu0 0
      %3824 = vmatpush1.bf16.msra.mxu0 0
      %3825 = vmatprep.subr.bf16.mxu0 0
      %3826 = vmatpush1.bf16.msra.mxu0 0
      %3827 = vmatprep.subr.bf16.mxu0 0
      %3828 = vmatpush1.bf16.msra.mxu0 0
      %3829 = vmatprep.mubr.bf16.mxu0 0
      %3830 = vmatmul.mubr.bf16.gmra.mrb[0].mxu0 %v3792
      %v3831 = vpop.f32.mrb[0].mxu0
      %v3832 = vadd.f32 0.0, %v3831
      %v3833 = vpop.f32.mrb[0].mxu0
      %v3834 = vpop.f32.mrb[0].mxu0
      %v3835 = vadd.f32 0.0, %v3834
      %v3836 = vpop.f32.mrb[0].mxu0
      %3837 = vmatprep.mubr.bf16.mxu0 0
      %3838 = vmatmul.mubr.bf16.gmra.mrb[0].mxu0 %v3795
      %v3839 = vpop.f32.mrb[0].mxu0
      %v3840 = vadd.f32 0.0, %v3839
      %v3841 = vpop.f32.mrb[0].mxu0
      %v3842 = vpop.f32.mrb[0].mxu0
      %v3843 = vadd.f32 0.0, %v3842
      %v3844 = vpop.f32.mrb[0].mxu0
      %3845 = vdwg.mxu0
      %v3846 = vrcp.pop %v3771
      %v3847 = vrcp.pop %v3774
      %v3848 = vrcp.pop %v3777
      %v3849 = vrcp.pop %v3780
      %v3850 = vmul.f32 %v3832, %v3846
      %v3851 = vmul.f32 %v3835, %v3847
      %v3852 = vmul.f32 %v3840, %v3848
      %v3853 = vmul.f32 %v3843, %v3849
      %v3854 = vpack.c.bf16 %v3851, %v3850
      %v3855 = vpack.c.bf16 %v3853, %v3852
      %v3860 = vunpack.c.l.b16 %v3480
      %v3861 = vunpack.c.l.b16 %v3481
      %v3862 = vunpack.c.l.b16 %v3482
      %v3863 = vunpack.c.l.b16 %v3483
      %v3864 = vpack.c.b16 %v3861, %v3860
      %v3865 = vpack.c.b16 %v3863, %v3862
      %v3869 = vsel %vm1161, %v3854, 0
      %v3872 = vsel %vm1161, %v3855, 0
      %3874 = vmatprep.subr.bf16.mxu0 0
      %3875 = vmatpush1.bf16.msra.mxu0 %v3864
      %3876 = vmatprep.subr.bf16.mxu0 0
      %3877 = vmatpush1.bf16.msra.mxu0 %v3865
      %3878 = vmatprep.subr.bf16.mxu0 0
      %3879 = vmatpush1.bf16.msra.mxu0 0
      %3880 = vmatprep.subr.bf16.mxu0 0
      %3881 = vmatpush1.bf16.msra.mxu0 0
      %3882 = vmatprep.subr.bf16.mxu0 0
      %3883 = vmatpush1.bf16.msra.mxu0 0
      %3884 = vmatprep.subr.bf16.mxu0 0
      %3885 = vmatpush1.bf16.msra.mxu0 0
      %3886 = vmatprep.subr.bf16.mxu0 0
      %3887 = vmatpush1.bf16.msra.mxu0 0
      %3888 = vmatprep.subr.bf16.mxu0 0
      %3889 = vmatpush1.bf16.msra.mxu0 0
      %3890 = vmatprep.subr.bf16.mxu0 0
      %3891 = vmatpush1.bf16.msra.mxu0 0
      %3892 = vmatprep.subr.bf16.mxu0 0
      %3893 = vmatpush1.bf16.msra.mxu0 0
      %3894 = vmatprep.subr.bf16.mxu0 0
      %3895 = vmatpush1.bf16.msra.mxu0 0
      %3896 = vmatprep.subr.bf16.mxu0 0
      %3897 = vmatpush1.bf16.msra.mxu0 0
      %3898 = vmatprep.subr.bf16.mxu0 0
      %3899 = vmatpush1.bf16.msra.mxu0 0
      %3900 = vmatprep.subr.bf16.mxu0 0
      %3901 = vmatpush1.bf16.msra.mxu0 0
      %3902 = vmatprep.subr.bf16.mxu0 0
      %3903 = vmatpush1.bf16.msra.mxu0 0
      %3904 = vmatprep.subr.bf16.mxu0 0
      %3905 = vmatpush1.bf16.msra.mxu0 0
      %3906 = vmatprep.mubr.bf16.mxu0 0
      %3907 = vmatmul.mubr.bf16.gmra.mrb[0].mxu0 %v3869
      %v3908 = vpop.f32.mrb[0].mxu0
      %v3909 = vadd.f32 0.0, %v3908
      %v3910 = vpop.f32.mrb[0].mxu0
      %v3911 = vpop.f32.mrb[0].mxu0
      %v3912 = vadd.f32 0.0, %v3911
      %v3913 = vpop.f32.mrb[0].mxu0
      %3914 = vmatprep.mubr.bf16.mxu0 0
      %3915 = vmatmul.mubr.bf16.gmra.mrb[0].mxu0 %v3872
      %v3916 = vpop.f32.mrb[0].mxu0
      %v3917 = vadd.f32 0.0, %v3916
      %v3918 = vpop.f32.mrb[0].mxu0
      %v3919 = vpop.f32.mrb[0].mxu0
      %v3920 = vadd.f32 0.0, %v3919
      %v3921 = vpop.f32.mrb[0].mxu0
      %3922 = vdwg.mxu0
      %v3927 = vunpack.c.l.b16 %v3476
      %v3928 = vunpack.c.l.b16 %v3477
      %v3929 = vunpack.c.l.b16 %v3478
      %v3930 = vunpack.c.l.b16 %v3479
      %v3931 = vpack.c.b16 %v3928, %v3927
      %v3932 = vpack.c.b16 %v3930, %v3929
      %v3936 = vsel %vm1161, %v3662, 0
      %v3939 = vsel %vm1161, %v3663, 0
      %3941 = vmatprep.subr.bf16.mxu0 0
      %3942 = vmatpush1.bf16.msra.mxu0 %v3931
      %3943 = vmatprep.subr.bf16.mxu0 0
      %3944 = vmatpush1.bf16.msra.mxu0 %v3932
      %3945 = vmatprep.subr.bf16.mxu0 0
      %3946 = vmatpush1.bf16.msra.mxu0 0
      %3947 = vmatprep.subr.bf16.mxu0 0
      %3948 = vmatpush1.bf16.msra.mxu0 0
      %3949 = vmatprep.subr.bf16.mxu0 0
      %3950 = vmatpush1.bf16.msra.mxu0 0
      %3951 = vmatprep.subr.bf16.mxu0 0
      %3952 = vmatpush1.bf16.msra.mxu0 0
      %3953 = vmatprep.subr.bf16.mxu0 0
      %3954 = vmatpush1.bf16.msra.mxu0 0
      %3955 = vmatprep.subr.bf16.mxu0 0
      %3956 = vmatpush1.bf16.msra.mxu0 0
      %3957 = vmatprep.subr.bf16.mxu0 0
      %3958 = vmatpush1.bf16.msra.mxu0 0
      %3959 = vmatprep.subr.bf16.mxu0 0
      %3960 = vmatpush1.bf16.msra.mxu0 0
      %3961 = vmatprep.subr.bf16.mxu0 0
      %3962 = vmatpush1.bf16.msra.mxu0 0
      %3963 = vmatprep.subr.bf16.mxu0 0
      %3964 = vmatpush1.bf16.msra.mxu0 0
      %3965 = vmatprep.subr.bf16.mxu0 0
      %3966 = vmatpush1.bf16.msra.mxu0 0
      %3967 = vmatprep.subr.bf16.mxu0 0
      %3968 = vmatpush1.bf16.msra.mxu0 0
      %3969 = vmatprep.subr.bf16.mxu0 0
      %3970 = vmatpush1.bf16.msra.mxu0 0
      %3971 = vmatprep.subr.bf16.mxu0 0
      %3972 = vmatpush1.bf16.msra.mxu0 0
      %3973 = vmatprep.mubr.bf16.mxu0 0
      %3974 = vmatmul.mubr.bf16.gmra.mrb[0].mxu0 %v3936
      %v3975 = vpop.f32.mrb[0].mxu0
      %v3976 = vadd.f32 %v3909, %v3975
      %v3977 = vpop.f32.mrb[0].mxu0
      %v3978 = vpop.f32.mrb[0].mxu0
      %v3979 = vadd.f32 %v3912, %v3978
      %v3980 = vpop.f32.mrb[0].mxu0
      %3981 = vmatprep.mubr.bf16.mxu0 0
      %3982 = vmatmul.mubr.bf16.gmra.mrb[0].mxu0 %v3939
      %v3983 = vpop.f32.mrb[0].mxu0
      %v3984 = vadd.f32 %v3917, %v3983
      %v3985 = vpop.f32.mrb[0].mxu0
      %v3986 = vpop.f32.mrb[0].mxu0
      %v3987 = vadd.f32 %v3920, %v3986
      %v3988 = vpop.f32.mrb[0].mxu0
      %3989 = vdwg.mxu0
      %3990 = vrot.lane.b32.xlu0 %v3469, 64
      %v3991 = vpop.permute.xlu0 %3990
      %3992 = vrot.lane.b32.xlu0 %v3472, 64
      %v3993 = vpop.permute.xlu0 %3992
      %3994 = vrot.lane.b32.xlu0 %v3470, 64
      %v3995 = vpop.permute.xlu0 %3994
      %3996 = vrot.lane.b32.xlu0 %v3473, 64
      %v3997 = vpop.permute.xlu0 %3996
      %v3999 = vsel %vm1161, %v3991, 0
      %v4002 = vsel %vm1161, %v3993, 0
      %v4005 = vsel %vm1161, %v3995, 0
      %v4008 = vsel %vm1161, %v3997, 0
      %4010 = vmatprep.subr.bf16.mxu0 0
      %4011 = vmatpush1.bf16.xpose.msra.mxu0 %v4005
      %4012 = vmatprep.subr.bf16.mxu0 0
      %4013 = vmatpush1.bf16.xpose.msra.mxu0 %v4008
      %4014 = vmatprep.subr.bf16.mxu0 0
      %4015 = vmatpush1.bf16.xpose.msra.mxu0 0
      %4016 = vmatprep.subr.bf16.mxu0 0
      %4017 = vmatpush1.bf16.xpose.msra.mxu0 0
      %4018 = vmatprep.subr.bf16.mxu0 0
      %4019 = vmatpush1.bf16.xpose.msra.mxu0 0
      %4020 = vmatprep.subr.bf16.mxu0 0
      %4021 = vmatpush1.bf16.xpose.msra.mxu0 0
      %4022 = vmatprep.subr.bf16.mxu0 0
      %4023 = vmatpush1.bf16.xpose.msra.mxu0 0
      %4024 = vmatprep.subr.bf16.mxu0 0
      %4025 = vmatpush1.bf16.xpose.msra.mxu0 0
      %4026 = vmatprep.subr.bf16.mxu0 0
      %4027 = vmatpush1.bf16.xpose.msra.mxu0 0
      %4028 = vmatprep.subr.bf16.mxu0 0
      %4029 = vmatpush1.bf16.xpose.msra.mxu0 0
      %4030 = vmatprep.subr.bf16.mxu0 0
      %4031 = vmatpush1.bf16.xpose.msra.mxu0 0
      %4032 = vmatprep.subr.bf16.mxu0 0
      %4033 = vmatpush1.bf16.xpose.msra.mxu0 0
      %4034 = vmatprep.subr.bf16.mxu0 0
      %4035 = vmatpush1.bf16.xpose.msra.mxu0 0
      %4036 = vmatprep.subr.bf16.mxu0 0
      %4037 = vmatpush1.bf16.xpose.msra.mxu0 0
      %4038 = vmatprep.subr.bf16.mxu0 0
      %4039 = vmatpush1.bf16.xpose.msra.mxu0 0
      %4040 = vmatprep.subr.bf16.mxu0 0
      %4041 = vmatpush1.bf16.xpose.msra.mxu0 0
      %4042 = vmatprep.mubr.bf16.mxu0 0
      %4043 = vmatmul.mubr.bf16.gmra.mrb[0].mxu0 %v3999
      %v4044 = vpop.f32.mrb[0].mxu0
      %v4045 = vadd.f32 0.0, %v4044
      %v4046 = vpop.f32.mrb[0].mxu0
      %v4047 = vpop.f32.mrb[0].mxu0
      %v4048 = vadd.f32 0.0, %v4047
      %v4049 = vpop.f32.mrb[0].mxu0
      %4050 = vmatprep.mubr.bf16.mxu0 0
      %4051 = vmatmul.mubr.bf16.gmra.mrb[0].mxu0 %v4002
      %v4052 = vpop.f32.mrb[0].mxu0
      %v4053 = vadd.f32 0.0, %v4052
      %v4054 = vpop.f32.mrb[0].mxu0
      %v4055 = vpop.f32.mrb[0].mxu0
      %v4056 = vadd.f32 0.0, %v4055
      %v4057 = vpop.f32.mrb[0].mxu0
      %4058 = vdwg.mxu0
      %v4059 = vmul.f32 %v4045, 0.17677669
      %v4060 = vmul.f32 %v4048, 0.17677669
      %v4061 = vmul.f32 %v4053, 0.17677669
      %v4062 = vmul.f32 %v4056, 0.17677669
      %v4063 = vadd.f32 %v4059, %v782
      %v4064 = vadd.f32 %v4060, %v782
      %v4065 = vadd.f32 %v4061, %v782
      %v4066 = vadd.f32 %v4062, %v782
      %v4067 = vsel %vm1161, %v4063, -inf
      %4068 = vmax.xlane.f32.xlu0 %v4067
      %v4069 = vpop.xlane.xlu0 %4068
      %v4070 = vsel %vm1161, %v4064, -inf
      %4071 = vmax.xlane.f32.xlu0 %v4070
      %v4072 = vpop.xlane.xlu0 %4071
      %v4073 = vsel %vm1161, %v4065, -inf
      %4074 = vmax.xlane.f32.xlu0 %v4073
      %v4075 = vpop.xlane.xlu0 %4074
      %v4076 = vsel %vm1161, %v4066, -inf
      %4077 = vmax.xlane.f32.xlu0 %v4076
      %v4078 = vpop.xlane.xlu0 %4077
      %v4079 = vsub.f32 %v4063, %v4069
      %v4080 = vsub.f32 %v4064, %v4072
      %v4081 = vsub.f32 %v4065, %v4075
      %v4082 = vsub.f32 %v4066, %v4078
      %v4083 = vmul.f32 %v4079, 1.442695
      %v4084 = vpow.pop %v4083
      %v4085 = vmul.f32 %v4080, 1.442695
      %v4086 = vpow.pop %v4085
      %v4087 = vmul.f32 %v4081, 1.442695
      %v4088 = vpow.pop %v4087
      %v4089 = vmul.f32 %v4082, 1.442695
      %v4090 = vpow.pop %v4089
      %v4091 = vsel %vm1161, %v4084, 0.0
      %4092 = vadd.xlane.f32.xlu0 %v4091
      %v4093 = vpop.xlane.xlu0 %4092
      %v4094 = vsel %vm1161, %v4086, 0.0
      %4095 = vadd.xlane.f32.xlu0 %v4094
      %v4096 = vpop.xlane.xlu0 %4095
      %v4097 = vsel %vm1161, %v4088, 0.0
      %4098 = vadd.xlane.f32.xlu0 %v4097
      %v4099 = vpop.xlane.xlu0 %4098
      %v4100 = vsel %vm1161, %v4090, 0.0
      %4101 = vadd.xlane.f32.xlu0 %v4100
      %v4102 = vpop.xlane.xlu0 %4101
      %v4103 = vpack.c.bf16 %v4086, %v4084
      %v4104 = vpack.c.bf16 %v4090, %v4088
      %4105 = vrot.lane.b32.xlu0 %v3471, 64
      %v4106 = vpop.permute.xlu0 %4105
      %4107 = vrot.lane.b32.xlu0 %v3474, 64
      %v4108 = vpop.permute.xlu0 %4107
      %v4112 = vsel %vm1161, %v4103, 0
      %v4115 = vsel %vm1161, %v4104, 0
      %4117 = vmatprep.subr.bf16.mxu0 0
      %4118 = vmatpush1.bf16.msra.mxu0 %v4106
      %4119 = vmatprep.subr.bf16.mxu0 0
      %4120 = vmatpush1.bf16.msra.mxu0 %v4108
      %4121 = vmatprep.subr.bf16.mxu0 0
      %4122 = vmatpush1.bf16.msra.mxu0 0
      %4123 = vmatprep.subr.bf16.mxu0 0
      %4124 = vmatpush1.bf16.msra.mxu0 0
      %4125 = vmatprep.subr.bf16.mxu0 0
      %4126 = vmatpush1.bf16.msra.mxu0 0
      %4127 = vmatprep.subr.bf16.mxu0 0
      %4128 = vmatpush1.bf16.msra.mxu0 0
      %4129 = vmatprep.subr.bf16.mxu0 0
      %4130 = vmatpush1.bf16.msra.mxu0 0
      %4131 = vmatprep.subr.bf16.mxu0 0
      %4132 = vmatpush1.bf16.msra.mxu0 0
      %4133 = vmatprep.subr.bf16.mxu0 0
      %4134 = vmatpush1.bf16.msra.mxu0 0
      %4135 = vmatprep.subr.bf16.mxu0 0
      %4136 = vmatpush1.bf16.msra.mxu0 0
      %4137 = vmatprep.subr.bf16.mxu0 0
      %4138 = vmatpush1.bf16.msra.mxu0 0
      %4139 = vmatprep.subr.bf16.mxu0 0
      %4140 = vmatpush1.bf16.msra.mxu0 0
      %4141 = vmatprep.subr.bf16.mxu0 0
      %4142 = vmatpush1.bf16.msra.mxu0 0
      %4143 = vmatprep.subr.bf16.mxu0 0
      %4144 = vmatpush1.bf16.msra.mxu0 0
      %4145 = vmatprep.subr.bf16.mxu0 0
      %4146 = vmatpush1.bf16.msra.mxu0 0
      %4147 = vmatprep.subr.bf16.mxu0 0
      %4148 = vmatpush1.bf16.msra.mxu0 0
      %4149 = vmatprep.mubr.bf16.mxu0 0
      %4150 = vmatmul.mubr.bf16.gmra.mrb[0].mxu0 %v4112
      %v4151 = vpop.f32.mrb[0].mxu0
      %v4152 = vadd.f32 0.0, %v4151
      %v4153 = vpop.f32.mrb[0].mxu0
      %v4154 = vpop.f32.mrb[0].mxu0
      %v4155 = vadd.f32 0.0, %v4154
      %v4156 = vpop.f32.mrb[0].mxu0
      %4157 = vmatprep.mubr.bf16.mxu0 0
      %4158 = vmatmul.mubr.bf16.gmra.mrb[0].mxu0 %v4115
      %v4159 = vpop.f32.mrb[0].mxu0
      %v4160 = vadd.f32 0.0, %v4159
      %v4161 = vpop.f32.mrb[0].mxu0
      %v4162 = vpop.f32.mrb[0].mxu0
      %v4163 = vadd.f32 0.0, %v4162
      %v4164 = vpop.f32.mrb[0].mxu0
      %4165 = vdwg.mxu0
      %v4166 = vrcp.pop %v4093
      %v4167 = vrcp.pop %v4096
      %v4168 = vrcp.pop %v4099
      %v4169 = vrcp.pop %v4102
      %v4170 = vmul.f32 %v4152, %v4166
      %v4171 = vmul.f32 %v4155, %v4167
      %v4172 = vmul.f32 %v4160, %v4168
      %v4173 = vmul.f32 %v4163, %v4169
      %v4174 = vpack.c.bf16 %v4171, %v4170
      %v4175 = vpack.c.bf16 %v4173, %v4172
      %v4180 = vunpack.c.l.b16 %v3484
      %v4181 = vunpack.c.l.b16 %v3485
      %v4182 = vunpack.c.l.b16 %v3486
      %v4183 = vunpack.c.l.b16 %v3487
      %v4184 = vpack.c.b16 %v4181, %v4180
      %v4185 = vpack.c.b16 %v4183, %v4182
      %v4189 = vsel %vm1161, %v4174, 0
      %v4192 = vsel %vm1161, %v4175, 0
      %4194 = vmatprep.subr.bf16.mxu0 0
      %4195 = vmatpush1.bf16.msra.mxu0 %v4184
      %4196 = vmatprep.subr.bf16.mxu0 0
      %4197 = vmatpush1.bf16.msra.mxu0 %v4185
      %4198 = vmatprep.subr.bf16.mxu0 0
      %4199 = vmatpush1.bf16.msra.mxu0 0
      %4200 = vmatprep.subr.bf16.mxu0 0
      %4201 = vmatpush1.bf16.msra.mxu0 0
      %4202 = vmatprep.subr.bf16.mxu0 0
      %4203 = vmatpush1.bf16.msra.mxu0 0
      %4204 = vmatprep.subr.bf16.mxu0 0
      %4205 = vmatpush1.bf16.msra.mxu0 0
      %4206 = vmatprep.subr.bf16.mxu0 0
      %4207 = vmatpush1.bf16.msra.mxu0 0
      %4208 = vmatprep.subr.bf16.mxu0 0
      %4209 = vmatpush1.bf16.msra.mxu0 0
      %4210 = vmatprep.subr.bf16.mxu0 0
      %4211 = vmatpush1.bf16.msra.mxu0 0
      %4212 = vmatprep.subr.bf16.mxu0 0
      %4213 = vmatpush1.bf16.msra.mxu0 0
      %4214 = vmatprep.subr.bf16.mxu0 0
      %4215 = vmatpush1.bf16.msra.mxu0 0
      %4216 = vmatprep.subr.bf16.mxu0 0
      %4217 = vmatpush1.bf16.msra.mxu0 0
      %4218 = vmatprep.subr.bf16.mxu0 0
      %4219 = vmatpush1.bf16.msra.mxu0 0
      %4220 = vmatprep.subr.bf16.mxu0 0
      %4221 = vmatpush1.bf16.msra.mxu0 0
      %4222 = vmatprep.subr.bf16.mxu0 0
      %4223 = vmatpush1.bf16.msra.mxu0 0
      %4224 = vmatprep.subr.bf16.mxu0 0
      %4225 = vmatpush1.bf16.msra.mxu0 0
      %4226 = vmatprep.mubr.bf16.mxu0 0
      %4227 = vmatmul.mubr.bf16.gmra.mrb[0].mxu0 %v4189
      %v4228 = vpop.f32.mrb[0].mxu0
      %v4229 = vadd.f32 0.0, %v4228
      %v4230 = vpop.f32.mrb[0].mxu0
      %v4231 = vpop.f32.mrb[0].mxu0
      %v4232 = vadd.f32 0.0, %v4231
      %v4233 = vpop.f32.mrb[0].mxu0
      %4234 = vmatprep.mubr.bf16.mxu0 0
      %4235 = vmatmul.mubr.bf16.gmra.mrb[0].mxu0 %v4192
      %v4236 = vpop.f32.mrb[0].mxu0
      %v4237 = vadd.f32 0.0, %v4236
      %v4238 = vpop.f32.mrb[0].mxu0
      %v4239 = vpop.f32.mrb[0].mxu0
      %v4240 = vadd.f32 0.0, %v4239
      %v4241 = vpop.f32.mrb[0].mxu0
      %4242 = vdwg.mxu0
      %v4243 = vadd.f32 %v3976, %v4229
      %v4244 = vadd.f32 %v3979, %v4232
      %v4245 = vadd.f32 %v3984, %v4237
      %v4246 = vadd.f32 %v3987, %v4240
      %4247 = vrot.lane.b32.xlu0 %v3469, 32
      %v4248 = vpop.permute.xlu0 %4247
      %4249 = vrot.lane.b32.xlu0 %v3472, 32
      %v4250 = vpop.permute.xlu0 %4249
      %4251 = vrot.lane.b32.xlu0 %v3470, 32
      %v4252 = vpop.permute.xlu0 %4251
      %4253 = vrot.lane.b32.xlu0 %v3473, 32
      %v4254 = vpop.permute.xlu0 %4253
      %v4256 = vsel %vm1161, %v4248, 0
      %v4259 = vsel %vm1161, %v4250, 0
      %v4262 = vsel %vm1161, %v4252, 0
      %v4265 = vsel %vm1161, %v4254, 0
      %4267 = vmatprep.subr.bf16.mxu0 0
      %4268 = vmatpush1.bf16.xpose.msra.mxu0 %v4262
      %4269 = vmatprep.subr.bf16.mxu0 0
      %4270 = vmatpush1.bf16.xpose.msra.mxu0 %v4265
      %4271 = vmatprep.subr.bf16.mxu0 0
      %4272 = vmatpush1.bf16.xpose.msra.mxu0 0
      %4273 = vmatprep.subr.bf16.mxu0 0
      %4274 = vmatpush1.bf16.xpose.msra.mxu0 0
      %4275 = vmatprep.subr.bf16.mxu0 0
      %4276 = vmatpush1.bf16.xpose.msra.mxu0 0
      %4277 = vmatprep.subr.bf16.mxu0 0
      %4278 = vmatpush1.bf16.xpose.msra.mxu0 0
      %4279 = vmatprep.subr.bf16.mxu0 0
      %4280 = vmatpush1.bf16.xpose.msra.mxu0 0
      %4281 = vmatprep.subr.bf16.mxu0 0
      %4282 = vmatpush1.bf16.xpose.msra.mxu0 0
      %4283 = vmatprep.subr.bf16.mxu0 0
      %4284 = vmatpush1.bf16.xpose.msra.mxu0 0
      %4285 = vmatprep.subr.bf16.mxu0 0
      %4286 = vmatpush1.bf16.xpose.msra.mxu0 0
      %4287 = vmatprep.subr.bf16.mxu0 0
      %4288 = vmatpush1.bf16.xpose.msra.mxu0 0
      %4289 = vmatprep.subr.bf16.mxu0 0
      %4290 = vmatpush1.bf16.xpose.msra.mxu0 0
      %4291 = vmatprep.subr.bf16.mxu0 0
      %4292 = vmatpush1.bf16.xpose.msra.mxu0 0
      %4293 = vmatprep.subr.bf16.mxu0 0
      %4294 = vmatpush1.bf16.xpose.msra.mxu0 0
      %4295 = vmatprep.subr.bf16.mxu0 0
      %4296 = vmatpush1.bf16.xpose.msra.mxu0 0
      %4297 = vmatprep.subr.bf16.mxu0 0
      %4298 = vmatpush1.bf16.xpose.msra.mxu0 0
      %4299 = vmatprep.mubr.bf16.mxu0 0
      %4300 = vmatmul.mubr.bf16.gmra.mrb[0].mxu0 %v4256
      %v4301 = vpop.f32.mrb[0].mxu0
      %v4302 = vadd.f32 0.0, %v4301
      %v4303 = vpop.f32.mrb[0].mxu0
      %v4304 = vpop.f32.mrb[0].mxu0
      %v4305 = vadd.f32 0.0, %v4304
      %v4306 = vpop.f32.mrb[0].mxu0
      %4307 = vmatprep.mubr.bf16.mxu0 0
      %4308 = vmatmul.mubr.bf16.gmra.mrb[0].mxu0 %v4259
      %v4309 = vpop.f32.mrb[0].mxu0
      %v4310 = vadd.f32 0.0, %v4309
      %v4311 = vpop.f32.mrb[0].mxu0
      %v4312 = vpop.f32.mrb[0].mxu0
      %v4313 = vadd.f32 0.0, %v4312
      %v4314 = vpop.f32.mrb[0].mxu0
      %4315 = vdwg.mxu0
      %v4316 = vmul.f32 %v4302, 0.17677669
      %v4317 = vmul.f32 %v4305, 0.17677669
      %v4318 = vmul.f32 %v4310, 0.17677669
      %v4319 = vmul.f32 %v4313, 0.17677669
      %v4320 = vadd.f32 %v4316, %v782
      %v4321 = vadd.f32 %v4317, %v782
      %v4322 = vadd.f32 %v4318, %v782
      %v4323 = vadd.f32 %v4319, %v782
      %v4324 = vsel %vm1161, %v4320, -inf
      %4325 = vmax.xlane.f32.xlu0 %v4324
      %v4326 = vpop.xlane.xlu0 %4325
      %v4327 = vsel %vm1161, %v4321, -inf
      %4328 = vmax.xlane.f32.xlu0 %v4327
      %v4329 = vpop.xlane.xlu0 %4328
      %v4330 = vsel %vm1161, %v4322, -inf
      %4331 = vmax.xlane.f32.xlu0 %v4330
      %v4332 = vpop.xlane.xlu0 %4331
      %v4333 = vsel %vm1161, %v4323, -inf
      %4334 = vmax.xlane.f32.xlu0 %v4333
      %v4335 = vpop.xlane.xlu0 %4334
      %v4336 = vsub.f32 %v4320, %v4326
      %v4337 = vsub.f32 %v4321, %v4329
      %v4338 = vsub.f32 %v4322, %v4332
      %v4339 = vsub.f32 %v4323, %v4335
      %v4340 = vmul.f32 %v4336, 1.442695
      %v4341 = vpow.pop %v4340
      %v4342 = vmul.f32 %v4337, 1.442695
      %v4343 = vpow.pop %v4342
      %v4344 = vmul.f32 %v4338, 1.442695
      %v4345 = vpow.pop %v4344
      %v4346 = vmul.f32 %v4339, 1.442695
      %v4347 = vpow.pop %v4346
      %v4348 = vsel %vm1161, %v4341, 0.0
      %4349 = vadd.xlane.f32.xlu0 %v4348
      %v4350 = vpop.xlane.xlu0 %4349
      %v4351 = vsel %vm1161, %v4343, 0.0
      %4352 = vadd.xlane.f32.xlu0 %v4351
      %v4353 = vpop.xlane.xlu0 %4352
      %v4354 = vsel %vm1161, %v4345, 0.0
      %4355 = vadd.xlane.f32.xlu0 %v4354
      %v4356 = vpop.xlane.xlu0 %4355
      %v4357 = vsel %vm1161, %v4347, 0.0
      %4358 = vadd.xlane.f32.xlu0 %v4357
      %v4359 = vpop.xlane.xlu0 %4358
      %v4360 = vpack.c.bf16 %v4343, %v4341
      %v4361 = vpack.c.bf16 %v4347, %v4345
      %4362 = vrot.lane.b32.xlu0 %v3471, 32
      %v4363 = vpop.permute.xlu0 %4362
      %4364 = vrot.lane.b32.xlu0 %v3474, 32
      %v4365 = vpop.permute.xlu0 %4364
      %v4369 = vsel %vm1161, %v4360, 0
      %v4372 = vsel %vm1161, %v4361, 0
      %4374 = vmatprep.subr.bf16.mxu0 0
      %4375 = vmatpush1.bf16.msra.mxu0 %v4363
      %4376 = vmatprep.subr.bf16.mxu0 0
      %4377 = vmatpush1.bf16.msra.mxu0 %v4365
      %4378 = vmatprep.subr.bf16.mxu0 0
      %4379 = vmatpush1.bf16.msra.mxu0 0
      %4380 = vmatprep.subr.bf16.mxu0 0
      %4381 = vmatpush1.bf16.msra.mxu0 0
      %4382 = vmatprep.subr.bf16.mxu0 0
      %4383 = vmatpush1.bf16.msra.mxu0 0
      %4384 = vmatprep.subr.bf16.mxu0 0
      %4385 = vmatpush1.bf16.msra.mxu0 0
      %4386 = vmatprep.subr.bf16.mxu0 0
      %4387 = vmatpush1.bf16.msra.mxu0 0
      %4388 = vmatprep.subr.bf16.mxu0 0
      %4389 = vmatpush1.bf16.msra.mxu0 0
      %4390 = vmatprep.subr.bf16.mxu0 0
      %4391 = vmatpush1.bf16.msra.mxu0 0
      %4392 = vmatprep.subr.bf16.mxu0 0
      %4393 = vmatpush1.bf16.msra.mxu0 0
      %4394 = vmatprep.subr.bf16.mxu0 0
      %4395 = vmatpush1.bf16.msra.mxu0 0
      %4396 = vmatprep.subr.bf16.mxu0 0
      %4397 = vmatpush1.bf16.msra.mxu0 0
      %4398 = vmatprep.subr.bf16.mxu0 0
      %4399 = vmatpush1.bf16.msra.mxu0 0
      %4400 = vmatprep.subr.bf16.mxu0 0
      %4401 = vmatpush1.bf16.msra.mxu0 0
      %4402 = vmatprep.subr.bf16.mxu0 0
      %4403 = vmatpush1.bf16.msra.mxu0 0
      %4404 = vmatprep.subr.bf16.mxu0 0
      %4405 = vmatpush1.bf16.msra.mxu0 0
      %4406 = vmatprep.mubr.bf16.mxu0 0
      %4407 = vmatmul.mubr.bf16.gmra.mrb[0].mxu0 %v4369
      %v4408 = vpop.f32.mrb[0].mxu0
      %v4409 = vadd.f32 0.0, %v4408
      %v4410 = vpop.f32.mrb[0].mxu0
      %v4411 = vpop.f32.mrb[0].mxu0
      %v4412 = vadd.f32 0.0, %v4411
      %v4413 = vpop.f32.mrb[0].mxu0
      %4414 = vmatprep.mubr.bf16.mxu0 0
      %4415 = vmatmul.mubr.bf16.gmra.mrb[0].mxu0 %v4372
      %v4416 = vpop.f32.mrb[0].mxu0
      %v4417 = vadd.f32 0.0, %v4416
      %v4418 = vpop.f32.mrb[0].mxu0
      %v4419 = vpop.f32.mrb[0].mxu0
      %v4420 = vadd.f32 0.0, %v4419
      %v4421 = vpop.f32.mrb[0].mxu0
      %4422 = vdwg.mxu0
      %v4423 = vrcp.pop %v4350
      %v4424 = vrcp.pop %v4353
      %v4425 = vrcp.pop %v4356
      %v4426 = vrcp.pop %v4359
      %v4427 = vmul.f32 %v4409, %v4423
      %v4428 = vmul.f32 %v4412, %v4424
      %v4429 = vmul.f32 %v4417, %v4425
      %v4430 = vmul.f32 %v4420, %v4426
      %v4431 = vpack.c.bf16 %v4428, %v4427
      %v4432 = vpack.c.bf16 %v4430, %v4429
      %v4437 = vunpack.c.l.b16 %v3488
      %v4438 = vunpack.c.l.b16 %v3489
      %v4439 = vunpack.c.l.b16 %v3490
      %v4440 = vunpack.c.l.b16 %v3491
      %v4441 = vpack.c.b16 %v4438, %v4437
      %v4442 = vpack.c.b16 %v4440, %v4439
      %v4446 = vsel %vm1161, %v4431, 0
      %v4449 = vsel %vm1161, %v4432, 0
      %4451 = vmatprep.subr.bf16.mxu0 0
      %4452 = vmatpush1.bf16.msra.mxu0 %v4441
      %4453 = vmatprep.subr.bf16.mxu0 0
      %4454 = vmatpush1.bf16.msra.mxu0 %v4442
      %4455 = vmatprep.subr.bf16.mxu0 0
      %4456 = vmatpush1.bf16.msra.mxu0 0
      %4457 = vmatprep.subr.bf16.mxu0 0
      %4458 = vmatpush1.bf16.msra.mxu0 0
      %4459 = vmatprep.subr.bf16.mxu0 0
      %4460 = vmatpush1.bf16.msra.mxu0 0
      %4461 = vmatprep.subr.bf16.mxu0 0
      %4462 = vmatpush1.bf16.msra.mxu0 0
      %4463 = vmatprep.subr.bf16.mxu0 0
      %4464 = vmatpush1.bf16.msra.mxu0 0
      %4465 = vmatprep.subr.bf16.mxu0 0
      %4466 = vmatpush1.bf16.msra.mxu0 0
      %4467 = vmatprep.subr.bf16.mxu0 0
      %4468 = vmatpush1.bf16.msra.mxu0 0
      %4469 = vmatprep.subr.bf16.mxu0 0
      %4470 = vmatpush1.bf16.msra.mxu0 0
      %4471 = vmatprep.subr.bf16.mxu0 0
      %4472 = vmatpush1.bf16.msra.mxu0 0
      %4473 = vmatprep.subr.bf16.mxu0 0
      %4474 = vmatpush1.bf16.msra.mxu0 0
      %4475 = vmatprep.subr.bf16.mxu0 0
      %4476 = vmatpush1.bf16.msra.mxu0 0
      %4477 = vmatprep.subr.bf16.mxu0 0
      %4478 = vmatpush1.bf16.msra.mxu0 0
      %4479 = vmatprep.subr.bf16.mxu0 0
      %4480 = vmatpush1.bf16.msra.mxu0 0
      %4481 = vmatprep.subr.bf16.mxu0 0
      %4482 = vmatpush1.bf16.msra.mxu0 0
      %4483 = vmatprep.mubr.bf16.mxu0 0
      %4484 = vmatmul.mubr.bf16.gmra.mrb[0].mxu0 %v4446
      %v4485 = vpop.f32.mrb[0].mxu0
      %v4486 = vadd.f32 0.0, %v4485
      %v4487 = vpop.f32.mrb[0].mxu0
      %v4488 = vpop.f32.mrb[0].mxu0
      %v4489 = vadd.f32 0.0, %v4488
      %v4490 = vpop.f32.mrb[0].mxu0
      %4491 = vmatprep.mubr.bf16.mxu0 0
      %4492 = vmatmul.mubr.bf16.gmra.mrb[0].mxu0 %v4449
      %v4493 = vpop.f32.mrb[0].mxu0
      %v4494 = vadd.f32 0.0, %v4493
      %v4495 = vpop.f32.mrb[0].mxu0
      %v4496 = vpop.f32.mrb[0].mxu0
      %v4497 = vadd.f32 0.0, %v4496
      %v4498 = vpop.f32.mrb[0].mxu0
      %4499 = vdwg.mxu0
      %v4500 = vadd.f32 %v4243, %v4486
      %v4501 = vadd.f32 %v4244, %v4489
      %v4502 = vadd.f32 %v4245, %v4494
      %v4503 = vadd.f32 %v4246, %v4497
      %v4504 = vadd.f32 %v3102, %v4500
      %v4505 = vadd.f32 %v3103, %v4501
      %v4506 = vadd.f32 %v3104, %v4502
      %v4507 = vadd.f32 %v3105, %v4503
      %s4508 = scalar_lea.vmem %s10, 1
      %v4509 = vld [vmem:[%s4508] sm:$0x1]
      %v4511 = vlaneseq
      %v4512 = vshrl.u32 %v4511, 7
      %v4513 = vsub.s32 0, %v4512
      %v4514 = vrot.slane %v4509, %v4513
      %v4516 = vadd.f32 %v4504, %v4514
      %v4517 = vadd.f32 %v4505, %v4514
      %v4518 = vadd.f32 %v4506, %v4514
      %v4519 = vadd.f32 %v4507, %v4514
      %s4520 = scalar_lea.vmem %s11, 1
      %v4521 = vld [vmem:[%s4520] sm:$0x1]
      %s4522 = scalar_lea.vmem %s12, 1
      %v4523 = vld [vmem:[%s4522] sm:$0x1]
      %4524 = vadd.xlane.f32.xlu0 %v4516
      %v4525 = vpop.xlane.xlu0 %4524
      %4526 = vadd.xlane.f32.xlu0 %v4517
      %v4527 = vpop.xlane.xlu0 %4526
      %4528 = vadd.xlane.f32.xlu0 %v4518
      %v4529 = vpop.xlane.xlu0 %4528
      %4530 = vadd.xlane.f32.xlu0 %v4519
      %v4531 = vpop.xlane.xlu0 %4530
      %v4532 = vmul.f32 %v4525, %v793
      %v4533 = vmul.f32 %v4527, %v793
      %v4534 = vmul.f32 %v4529, %v793
      %v4535 = vmul.f32 %v4531, %v793
      %v4536 = vmul.f32 %v4516, %v4516
      %v4537 = vmul.f32 %v4517, %v4517
      %v4538 = vmul.f32 %v4518, %v4518
      %v4539 = vmul.f32 %v4519, %v4519
      %4540 = vadd.xlane.f32.xlu0 %v4536
      %v4541 = vpop.xlane.xlu0 %4540
      %4542 = vadd.xlane.f32.xlu0 %v4537
      %v4543 = vpop.xlane.xlu0 %4542
      %4544 = vadd.xlane.f32.xlu0 %v4538
      %v4545 = vpop.xlane.xlu0 %4544
      %4546 = vadd.xlane.f32.xlu0 %v4539
      %v4547 = vpop.xlane.xlu0 %4546
      %v4548 = vmul.f32 %v4541, %v793
      %v4549 = vmul.f32 %v4543, %v793
      %v4550 = vmul.f32 %v4545, %v793
      %v4551 = vmul.f32 %v4547, %v793
      %v4552 = vmul.f32 %v4532, %v4532
      %v4553 = vmul.f32 %v4533, %v4533
      %v4554 = vmul.f32 %v4534, %v4534
      %v4555 = vmul.f32 %v4535, %v4535
      %v4556 = vsub.f32 %v4548, %v4552
      %v4557 = vsub.f32 %v4549, %v4553
      %v4558 = vsub.f32 %v4550, %v4554
      %v4559 = vsub.f32 %v4551, %v4555
      %v4560 = vmax.f32 %v4556, 0.0
      %v4561 = vmax.f32 %v4557, 0.0
      %v4562 = vmax.f32 %v4558, 0.0
      %v4563 = vmax.f32 %v4559, 0.0
      %v4564 = vsub.f32 %v4516, %v4532
      %v4565 = vsub.f32 %v4517, %v4533
      %v4566 = vsub.f32 %v4518, %v4534
      %v4567 = vsub.f32 %v4519, %v4535
      %v4568 = vadd.f32 %v4560, 1e-06
      %v4569 = vadd.f32 %v4561, 1e-06
      %v4570 = vadd.f32 %v4562, 1e-06
      %v4571 = vadd.f32 %v4563, 1e-06
      %v4572 = vrsqrt.pop %v4568
      %v4573 = vrsqrt.pop %v4569
      %v4574 = vrsqrt.pop %v4570
      %v4575 = vrsqrt.pop %v4571
      %v4576 = vmul.f32 %v4564, %v4572
      %v4577 = vmul.f32 %v4565, %v4573
      %v4578 = vmul.f32 %v4566, %v4574
      %v4579 = vmul.f32 %v4567, %v4575
      %v4581 = vlaneseq
      %v4582 = vshrl.u32 %v4581, 7
      %v4583 = vsub.s32 0, %v4582
      %v4584 = vrot.slane %v4521, %v4583
      %v4586 = vmul.f32 %v4576, %v4584
      %v4587 = vmul.f32 %v4577, %v4584
      %v4588 = vmul.f32 %v4578, %v4584
      %v4589 = vmul.f32 %v4579, %v4584
      %v4591 = vlaneseq
      %v4592 = vshrl.u32 %v4591, 7
      %v4593 = vsub.s32 0, %v4592
      %v4594 = vrot.slane %v4523, %v4593
      %v4596 = vadd.f32 %v4586, %v4594
      %v4597 = vadd.f32 %v4587, %v4594
      %v4598 = vadd.f32 %v4588, %v4594
      %v4599 = vadd.f32 %v4589, %v4594
      %v4600 = vpack.c.bf16 %v4597, %v4596
      %v4601 = vpack.c.bf16 %v4599, %v4598
      %s4602 = scalar_lea.vmem %s13, 256
      %v4603 = vld [vmem:[%s4602] sm:$0xff]
      %v4604 = vld [vmem:[%s4602 + $0x8] sm:$0xff]
      %v4605 = vld [vmem:[%s4602 + $0x10] sm:$0xff]
      %v4606 = vld [vmem:[%s4602 + $0x18] sm:$0xff]
      %v4607 = vld [vmem:[%s4602 + $0x20] sm:$0xff]
      %v4608 = vld [vmem:[%s4602 + $0x28] sm:$0xff]
      %v4609 = vld [vmem:[%s4602 + $0x30] sm:$0xff]
      %v4610 = vld [vmem:[%s4602 + $0x38] sm:$0xff]
      %v4611 = vld [vmem:[%s4602 + $0x40] sm:$0xff]
      %v4612 = vld [vmem:[%s4602 + $0x48] sm:$0xff]
      %v4613 = vld [vmem:[%s4602 + $0x50] sm:$0xff]
      %v4614 = vld [vmem:[%s4602 + $0x58] sm:$0xff]
      %v4615 = vld [vmem:[%s4602 + $0x60] sm:$0xff]
      %v4616 = vld [vmem:[%s4602 + $0x68] sm:$0xff]
      %v4617 = vld [vmem:[%s4602 + $0x70] sm:$0xff]
      %v4618 = vld [vmem:[%s4602 + $0x78] sm:$0xff]
      %v4619 = vld [vmem:[%s4602 + $0x80] sm:$0xff]
      %v4620 = vld [vmem:[%s4602 + $0x88] sm:$0xff]
      %v4621 = vld [vmem:[%s4602 + $0x90] sm:$0xff]
      %v4622 = vld [vmem:[%s4602 + $0x98] sm:$0xff]
      %v4623 = vld [vmem:[%s4602 + $0xa0] sm:$0xff]
      %v4624 = vld [vmem:[%s4602 + $0xa8] sm:$0xff]
      %v4625 = vld [vmem:[%s4602 + $0xb0] sm:$0xff]
      %v4626 = vld [vmem:[%s4602 + $0xb8] sm:$0xff]
      %v4627 = vld [vmem:[%s4602 + $0xc0] sm:$0xff]
      %v4628 = vld [vmem:[%s4602 + $0xc8] sm:$0xff]
      %v4629 = vld [vmem:[%s4602 + $0xd0] sm:$0xff]
      %v4630 = vld [vmem:[%s4602 + $0xd8] sm:$0xff]
      %v4631 = vld [vmem:[%s4602 + $0xe0] sm:$0xff]
      %v4632 = vld [vmem:[%s4602 + $0xe8] sm:$0xff]
      %v4633 = vld [vmem:[%s4602 + $0xf0] sm:$0xff]
      %v4634 = vld [vmem:[%s4602 + $0xf8] sm:$0xff]
      %s4635 = scalar_lea.vmem %s14, 4
      %v4636 = vld [vmem:[%s4635] sm:$0xf]
      %v4638 = vlaneseq
      %v4639 = vshrl.u32 %v4638, 7
      %v4640 = vsub.s32 0, %v4639
      %v4641 = vrot.slane %v4636, %v4640
      %v4642 = vlaneseq
      %v4643 = vshrl.u32 %v4642, 7
      %v4644 = vsub.s32 1, %v4643
      %v4645 = vrot.slane %v4636, %v4644
      %v4646 = vlaneseq
      %v4647 = vshrl.u32 %v4646, 7
      %v4648 = vsub.s32 2, %v4647
      %v4649 = vrot.slane %v4636, %v4648
      %v4650 = vlaneseq
      %v4651 = vshrl.u32 %v4650, 7
      %v4652 = vsub.s32 3, %v4651
      %v4653 = vrot.slane %v4636, %v4652
      %v4690 = vunpack.c.l.b16 %v4603
      %v4691 = vunpack.c.h.b16 %v4603
      %v4692 = vunpack.c.l.b16 %v4604
      %v4693 = vunpack.c.h.b16 %v4604
      %v4694 = vunpack.c.l.b16 %v4605
      %v4695 = vunpack.c.h.b16 %v4605
      %v4696 = vunpack.c.l.b16 %v4606
      %v4697 = vunpack.c.h.b16 %v4606
      %v4698 = vunpack.c.l.b16 %v4607
      %v4699 = vunpack.c.h.b16 %v4607
      %v4700 = vunpack.c.l.b16 %v4608
      %v4701 = vunpack.c.h.b16 %v4608
      %v4702 = vunpack.c.l.b16 %v4609
      %v4703 = vunpack.c.h.b16 %v4609
      %v4704 = vunpack.c.l.b16 %v4610
      %v4705 = vunpack.c.h.b16 %v4610
      %v4706 = vunpack.c.l.b16 %v4611
      %v4707 = vunpack.c.h.b16 %v4611
      %v4708 = vunpack.c.l.b16 %v4612
      %v4709 = vunpack.c.h.b16 %v4612
      %v4710 = vunpack.c.l.b16 %v4613
      %v4711 = vunpack.c.h.b16 %v4613
      %v4712 = vunpack.c.l.b16 %v4614
      %v4713 = vunpack.c.h.b16 %v4614
      %v4714 = vunpack.c.l.b16 %v4615
      %v4715 = vunpack.c.h.b16 %v4615
      %v4716 = vunpack.c.l.b16 %v4616
      %v4717 = vunpack.c.h.b16 %v4616
      %v4718 = vunpack.c.l.b16 %v4617
      %v4719 = vunpack.c.h.b16 %v4617
      %v4720 = vunpack.c.l.b16 %v4618
      %v4721 = vunpack.c.h.b16 %v4618
      %v4722 = vunpack.c.l.b16 %v4619
      %v4723 = vunpack.c.h.b16 %v4619
      %v4724 = vunpack.c.l.b16 %v4620
      %v4725 = vunpack.c.h.b16 %v4620
      %v4726 = vunpack.c.l.b16 %v4621
      %v4727 = vunpack.c.h.b16 %v4621
      %v4728 = vunpack.c.l.b16 %v4622
      %v4729 = vunpack.c.h.b16 %v4622
      %v4730 = vunpack.c.l.b16 %v4623
      %v4731 = vunpack.c.h.b16 %v4623
      %v4732 = vunpack.c.l.b16 %v4624
      %v4733 = vunpack.c.h.b16 %v4624
      %v4734 = vunpack.c.l.b16 %v4625
      %v4735 = vunpack.c.h.b16 %v4625
      %v4736 = vunpack.c.l.b16 %v4626
      %v4737 = vunpack.c.h.b16 %v4626
      %v4738 = vunpack.c.l.b16 %v4627
      %v4739 = vunpack.c.h.b16 %v4627
      %v4740 = vunpack.c.l.b16 %v4628
      %v4741 = vunpack.c.h.b16 %v4628
      %v4742 = vunpack.c.l.b16 %v4629
      %v4743 = vunpack.c.h.b16 %v4629
      %v4744 = vunpack.c.l.b16 %v4630
      %v4745 = vunpack.c.h.b16 %v4630
      %v4746 = vunpack.c.l.b16 %v4631
      %v4747 = vunpack.c.h.b16 %v4631
      %v4748 = vunpack.c.l.b16 %v4632
      %v4749 = vunpack.c.h.b16 %v4632
      %v4750 = vunpack.c.l.b16 %v4633
      %v4751 = vunpack.c.h.b16 %v4633
      %v4752 = vunpack.c.l.b16 %v4634
      %v4753 = vunpack.c.h.b16 %v4634
      %v4754 = vpack.c.b16 %v4694, %v4690
      %v4755 = vpack.c.b16 %v4695, %v4691
      %v4756 = vpack.c.b16 %v4696, %v4692
      %v4757 = vpack.c.b16 %v4697, %v4693
      %v4758 = vpack.c.b16 %v4702, %v4698
      %v4759 = vpack.c.b16 %v4703, %v4699
      %v4760 = vpack.c.b16 %v4704, %v4700
      %v4761 = vpack.c.b16 %v4705, %v4701
      %v4762 = vpack.c.b16 %v4710, %v4706
      %v4763 = vpack.c.b16 %v4711, %v4707
      %v4764 = vpack.c.b16 %v4712, %v4708
      %v4765 = vpack.c.b16 %v4713, %v4709
      %v4766 = vpack.c.b16 %v4718, %v4714
      %v4767 = vpack.c.b16 %v4719, %v4715
      %v4768 = vpack.c.b16 %v4720, %v4716
      %v4769 = vpack.c.b16 %v4721, %v4717
      %v4770 = vpack.c.b16 %v4726, %v4722
      %v4771 = vpack.c.b16 %v4727, %v4723
      %v4772 = vpack.c.b16 %v4728, %v4724
      %v4773 = vpack.c.b16 %v4729, %v4725
      %v4774 = vpack.c.b16 %v4734, %v4730
      %v4775 = vpack.c.b16 %v4735, %v4731
      %v4776 = vpack.c.b16 %v4736, %v4732
      %v4777 = vpack.c.b16 %v4737, %v4733
      %v4778 = vpack.c.b16 %v4742, %v4738
      %v4779 = vpack.c.b16 %v4743, %v4739
      %v4780 = vpack.c.b16 %v4744, %v4740
      %v4781 = vpack.c.b16 %v4745, %v4741
      %v4782 = vpack.c.b16 %v4750, %v4746
      %v4783 = vpack.c.b16 %v4751, %v4747
      %v4784 = vpack.c.b16 %v4752, %v4748
      %v4785 = vpack.c.b16 %v4753, %v4749
      %4818 = vmatprep.subr.bf16.mxu0 %v4755
      %4819 = vmatpush1.bf16.msra.mxu0 %v4754
      %4820 = vmatprep.subr.bf16.mxu0 %v4759
      %4821 = vmatpush1.bf16.msra.mxu0 %v4758
      %4822 = vmatprep.subr.bf16.mxu0 %v4763
      %4823 = vmatpush1.bf16.msra.mxu0 %v4762
      %4824 = vmatprep.subr.bf16.mxu0 %v4767
      %4825 = vmatpush1.bf16.msra.mxu0 %v4766
      %4826 = vmatprep.subr.bf16.mxu0 %v4771
      %4827 = vmatpush1.bf16.msra.mxu0 %v4770
      %4828 = vmatprep.subr.bf16.mxu0 %v4775
      %4829 = vmatpush1.bf16.msra.mxu0 %v4774
      %4830 = vmatprep.subr.bf16.mxu0 %v4779
      %4831 = vmatpush1.bf16.msra.mxu0 %v4778
      %4832 = vmatprep.subr.bf16.mxu0 %v4783
      %4833 = vmatpush1.bf16.msra.mxu0 %v4782
      %4834 = vmatprep.subr.bf16.mxu0 0
      %4835 = vmatpush1.bf16.msra.mxu0 0
      %4836 = vmatprep.subr.bf16.mxu0 0
      %4837 = vmatpush1.bf16.msra.mxu0 0
      %4838 = vmatprep.subr.bf16.mxu0 0
      %4839 = vmatpush1.bf16.msra.mxu0 0
      %4840 = vmatprep.subr.bf16.mxu0 0
      %4841 = vmatpush1.bf16.msra.mxu0 0
      %4842 = vmatprep.subr.bf16.mxu0 0
      %4843 = vmatpush1.bf16.msra.mxu0 0
      %4844 = vmatprep.subr.bf16.mxu0 0
      %4845 = vmatpush1.bf16.msra.mxu0 0
      %4846 = vmatprep.subr.bf16.mxu0 0
      %4847 = vmatpush1.bf16.msra.mxu0 0
      %4848 = vmatprep.subr.bf16.mxu0 0
      %4849 = vmatpush1.bf16.msra.mxu0 0
      %4850 = vmatprep.mubr.bf16.mxu0 0
      %4851 = vmatmul.mubr.bf16.gmra.mrb[0].mxu0 %v4600
      %v4852 = vpop.f32.mrb[0].mxu0
      %v4853 = vadd.f32 %v4641, %v4852
      %v4854 = vpop.f32.mrb[0].mxu0
      %v4855 = vadd.f32 %v4645, %v4854
      %v4856 = vpop.f32.mrb[0].mxu0
      %v4857 = vadd.f32 %v4641, %v4856
      %v4858 = vpop.f32.mrb[0].mxu0
      %v4859 = vadd.f32 %v4645, %v4858
      %4860 = vmatprep.mubr.bf16.mxu0 0
      %4861 = vmatmul.mubr.bf16.gmra.mrb[0].mxu0 %v4601
      %v4862 = vpop.f32.mrb[0].mxu0
      %v4863 = vadd.f32 %v4641, %v4862
      %v4864 = vpop.f32.mrb[0].mxu0
      %v4865 = vadd.f32 %v4645, %v4864
      %v4866 = vpop.f32.mrb[0].mxu0
      %v4867 = vadd.f32 %v4641, %v4866
      %v4868 = vpop.f32.mrb[0].mxu0
      %v4869 = vadd.f32 %v4645, %v4868
      %4870 = vdwg.mxu0
      %4871 = vmatprep.subr.bf16.mxu0 %v4757
      %4872 = vmatpush1.bf16.msra.mxu0 %v4756
      %4873 = vmatprep.subr.bf16.mxu0 %v4761
      %4874 = vmatpush1.bf16.msra.mxu0 %v4760
      %4875 = vmatprep.subr.bf16.mxu0 %v4765
      %4876 = vmatpush1.bf16.msra.mxu0 %v4764
      %4877 = vmatprep.subr.bf16.mxu0 %v4769
      %4878 = vmatpush1.bf16.msra.mxu0 %v4768
      %4879 = vmatprep.subr.bf16.mxu0 %v4773
      %4880 = vmatpush1.bf16.msra.mxu0 %v4772
      %4881 = vmatprep.subr.bf16.mxu0 %v4777
      %4882 = vmatpush1.bf16.msra.mxu0 %v4776
      %4883 = vmatprep.subr.bf16.mxu0 %v4781
      %4884 = vmatpush1.bf16.msra.mxu0 %v4780
      %4885 = vmatprep.subr.bf16.mxu0 %v4785
      %4886 = vmatpush1.bf16.msra.mxu0 %v4784
      %4887 = vmatprep.subr.bf16.mxu0 0
      %4888 = vmatpush1.bf16.msra.mxu0 0
      %4889 = vmatprep.subr.bf16.mxu0 0
      %4890 = vmatpush1.bf16.msra.mxu0 0
      %4891 = vmatprep.subr.bf16.mxu0 0
      %4892 = vmatpush1.bf16.msra.mxu0 0
      %4893 = vmatprep.subr.bf16.mxu0 0
      %4894 = vmatpush1.bf16.msra.mxu0 0
      %4895 = vmatprep.subr.bf16.mxu0 0
      %4896 = vmatpush1.bf16.msra.mxu0 0
      %4897 = vmatprep.subr.bf16.mxu0 0
      %4898 = vmatpush1.bf16.msra.mxu0 0
      %4899 = vmatprep.subr.bf16.mxu0 0
      %4900 = vmatpush1.bf16.msra.mxu0 0
      %4901 = vmatprep.subr.bf16.mxu0 0
      %4902 = vmatpush1.bf16.msra.mxu0 0
      %4903 = vmatprep.mubr.bf16.mxu0 0
      %4904 = vmatmul.mubr.bf16.gmra.mrb[0].mxu0 %v4600
      %v4905 = vpop.f32.mrb[0].mxu0
      %v4906 = vadd.f32 %v4649, %v4905
      %v4907 = vpop.f32.mrb[0].mxu0
      %v4908 = vadd.f32 %v4653, %v4907
      %v4909 = vpop.f32.mrb[0].mxu0
      %v4910 = vadd.f32 %v4649, %v4909
      %v4911 = vpop.f32.mrb[0].mxu0
      %v4912 = vadd.f32 %v4653, %v4911
      %4913 = vmatprep.mubr.bf16.mxu0 0
      %4914 = vmatmul.mubr.bf16.gmra.mrb[0].mxu0 %v4601
      %v4915 = vpop.f32.mrb[0].mxu0
      %v4916 = vadd.f32 %v4649, %v4915
      %v4917 = vpop.f32.mrb[0].mxu0
      %v4918 = vadd.f32 %v4653, %v4917
      %v4919 = vpop.f32.mrb[0].mxu0
      %v4920 = vadd.f32 %v4649, %v4919
      %v4921 = vpop.f32.mrb[0].mxu0
      %v4922 = vadd.f32 %v4653, %v4921
      %4923 = vdwg.mxu0
      %v4924 = vmul.f32 %v4853, %v4853
      %v4925 = vmul.f32 %v4855, %v4855
      %v4926 = vmul.f32 %v4906, %v4906
      %v4927 = vmul.f32 %v4908, %v4908
      %v4928 = vmul.f32 %v4857, %v4857
      %v4929 = vmul.f32 %v4859, %v4859
      %v4930 = vmul.f32 %v4910, %v4910
      %v4931 = vmul.f32 %v4912, %v4912
      %v4932 = vmul.f32 %v4863, %v4863
      %v4933 = vmul.f32 %v4865, %v4865
      %v4934 = vmul.f32 %v4916, %v4916
      %v4935 = vmul.f32 %v4918, %v4918
      %v4936 = vmul.f32 %v4867, %v4867
      %v4937 = vmul.f32 %v4869, %v4869
      %v4938 = vmul.f32 %v4920, %v4920
      %v4939 = vmul.f32 %v4922, %v4922
      %v4940 = vmul.f32 %v4853, %v4924
      %v4941 = vmul.f32 %v4855, %v4925
      %v4942 = vmul.f32 %v4906, %v4926
      %v4943 = vmul.f32 %v4908, %v4927
      %v4944 = vmul.f32 %v4857, %v4928
      %v4945 = vmul.f32 %v4859, %v4929
      %v4946 = vmul.f32 %v4910, %v4930
      %v4947 = vmul.f32 %v4912, %v4931
      %v4948 = vmul.f32 %v4863, %v4932
      %v4949 = vmul.f32 %v4865, %v4933
      %v4950 = vmul.f32 %v4916, %v4934
      %v4951 = vmul.f32 %v4918, %v4935
      %v4952 = vmul.f32 %v4867, %v4936
      %v4953 = vmul.f32 %v4869, %v4937
      %v4954 = vmul.f32 %v4920, %v4938
      %v4955 = vmul.f32 %v4922, %v4939
      %v4956 = vmul.f32 %v4940, 0.044715
      %v4957 = vmul.f32 %v4941, 0.044715
      %v4958 = vmul.f32 %v4942, 0.044715
      %v4959 = vmul.f32 %v4943, 0.044715
      %v4960 = vmul.f32 %v4944, 0.044715
      %v4961 = vmul.f32 %v4945, 0.044715
      %v4962 = vmul.f32 %v4946, 0.044715
      %v4963 = vmul.f32 %v4947, 0.044715
      %v4964 = vmul.f32 %v4948, 0.044715
      %v4965 = vmul.f32 %v4949, 0.044715
      %v4966 = vmul.f32 %v4950, 0.044715
      %v4967 = vmul.f32 %v4951, 0.044715
      %v4968 = vmul.f32 %v4952, 0.044715
      %v4969 = vmul.f32 %v4953, 0.044715
      %v4970 = vmul.f32 %v4954, 0.044715
      %v4971 = vmul.f32 %v4955, 0.044715
      %v4972 = vadd.f32 %v4853, %v4956
      %v4973 = vadd.f32 %v4855, %v4957
      %v4974 = vadd.f32 %v4906, %v4958
      %v4975 = vadd.f32 %v4908, %v4959
      %v4976 = vadd.f32 %v4857, %v4960
      %v4977 = vadd.f32 %v4859, %v4961
      %v4978 = vadd.f32 %v4910, %v4962
      %v4979 = vadd.f32 %v4912, %v4963
      %v4980 = vadd.f32 %v4863, %v4964
      %v4981 = vadd.f32 %v4865, %v4965
      %v4982 = vadd.f32 %v4916, %v4966
      %v4983 = vadd.f32 %v4918, %v4967
      %v4984 = vadd.f32 %v4867, %v4968
      %v4985 = vadd.f32 %v4869, %v4969
      %v4986 = vadd.f32 %v4920, %v4970
      %v4987 = vadd.f32 %v4922, %v4971
      %v4988 = vmul.f32 %v4972, 0.7978846
      %v4989 = vmul.f32 %v4973, 0.7978846
      %v4990 = vmul.f32 %v4974, 0.7978846
      %v4991 = vmul.f32 %v4975, 0.7978846
      %v4992 = vmul.f32 %v4976, 0.7978846
      %v4993 = vmul.f32 %v4977, 0.7978846
      %v4994 = vmul.f32 %v4978, 0.7978846
      %v4995 = vmul.f32 %v4979, 0.7978846
      %v4996 = vmul.f32 %v4980, 0.7978846
      %v4997 = vmul.f32 %v4981, 0.7978846
      %v4998 = vmul.f32 %v4982, 0.7978846
      %v4999 = vmul.f32 %v4983, 0.7978846
      %v5000 = vmul.f32 %v4984, 0.7978846
      %v5001 = vmul.f32 %v4985, 0.7978846
      %v5002 = vmul.f32 %v4986, 0.7978846
      %v5003 = vmul.f32 %v4987, 0.7978846
      %v5004 = vtanh.pop %v4988
      %v5005 = vtanh.pop %v4989
      %v5006 = vtanh.pop %v4990
      %v5007 = vtanh.pop %v4991
      %v5008 = vtanh.pop %v4992
      %v5009 = vtanh.pop %v4993
      %v5010 = vtanh.pop %v4994
      %v5011 = vtanh.pop %v4995
      %v5012 = vtanh.pop %v4996
      %v5013 = vtanh.pop %v4997
      %v5014 = vtanh.pop %v4998
      %v5015 = vtanh.pop %v4999
      %v5016 = vtanh.pop %v5000
      %v5017 = vtanh.pop %v5001
      %v5018 = vtanh.pop %v5002
      %v5019 = vtanh.pop %v5003
      %v5020 = vadd.f32 %v5004, 1.0
      %v5021 = vadd.f32 %v5005, 1.0
      %v5022 = vadd.f32 %v5006, 1.0
      %v5023 = vadd.f32 %v5007, 1.0
      %v5024 = vadd.f32 %v5008, 1.0
      %v5025 = vadd.f32 %v5009, 1.0
      %v5026 = vadd.f32 %v5010, 1.0
      %v5027 = vadd.f32 %v5011, 1.0
      %v5028 = vadd.f32 %v5012, 1.0
      %v5029 = vadd.f32 %v5013, 1.0
      %v5030 = vadd.f32 %v5014, 1.0
      %v5031 = vadd.f32 %v5015, 1.0
      %v5032 = vadd.f32 %v5016, 1.0
      %v5033 = vadd.f32 %v5017, 1.0
      %v5034 = vadd.f32 %v5018, 1.0
      %v5035 = vadd.f32 %v5019, 1.0
      %v5036 = vmul.f32 %v5020, 0.5
      %v5037 = vmul.f32 %v5021, 0.5
      %v5038 = vmul.f32 %v5022, 0.5
      %v5039 = vmul.f32 %v5023, 0.5
      %v5040 = vmul.f32 %v5024, 0.5
      %v5041 = vmul.f32 %v5025, 0.5
      %v5042 = vmul.f32 %v5026, 0.5
      %v5043 = vmul.f32 %v5027, 0.5
      %v5044 = vmul.f32 %v5028, 0.5
      %v5045 = vmul.f32 %v5029, 0.5
      %v5046 = vmul.f32 %v5030, 0.5
      %v5047 = vmul.f32 %v5031, 0.5
      %v5048 = vmul.f32 %v5032, 0.5
      %v5049 = vmul.f32 %v5033, 0.5
      %v5050 = vmul.f32 %v5034, 0.5
      %v5051 = vmul.f32 %v5035, 0.5
      %v5052 = vmul.f32 %v4853, %v5036
      %v5053 = vmul.f32 %v4855, %v5037
      %v5054 = vmul.f32 %v4906, %v5038
      %v5055 = vmul.f32 %v4908, %v5039
      %v5056 = vmul.f32 %v4857, %v5040
      %v5057 = vmul.f32 %v4859, %v5041
      %v5058 = vmul.f32 %v4910, %v5042
      %v5059 = vmul.f32 %v4912, %v5043
      %v5060 = vmul.f32 %v4863, %v5044
      %v5061 = vmul.f32 %v4865, %v5045
      %v5062 = vmul.f32 %v4916, %v5046
      %v5063 = vmul.f32 %v4918, %v5047
      %v5064 = vmul.f32 %v4867, %v5048
      %v5065 = vmul.f32 %v4869, %v5049
      %v5066 = vmul.f32 %v4920, %v5050
      %v5067 = vmul.f32 %v4922, %v5051
      %v5068 = vpack.c.bf16 %v5056, %v5052
      %v5069 = vpack.c.bf16 %v5057, %v5053
      %v5070 = vpack.c.bf16 %v5058, %v5054
      %v5071 = vpack.c.bf16 %v5059, %v5055
      %v5072 = vpack.c.bf16 %v5064, %v5060
      %v5073 = vpack.c.bf16 %v5065, %v5061
      %v5074 = vpack.c.bf16 %v5066, %v5062
      %v5075 = vpack.c.bf16 %v5067, %v5063
      %s5076 = scalar_lea.vmem %s15, 256
      %v5077 = vld [vmem:[%s5076] sm:$0xf]
      %v5078 = vld [vmem:[%s5076 + $0x4] sm:$0xf]
      %v5079 = vld [vmem:[%s5076 + $0x8] sm:$0xf]
      %v5080 = vld [vmem:[%s5076 + $0xc] sm:$0xf]
      %v5081 = vld [vmem:[%s5076 + $0x10] sm:$0xf]
      %v5082 = vld [vmem:[%s5076 + $0x14] sm:$0xf]
      %v5083 = vld [vmem:[%s5076 + $0x18] sm:$0xf]
      %v5084 = vld [vmem:[%s5076 + $0x1c] sm:$0xf]
      %v5085 = vld [vmem:[%s5076 + $0x20] sm:$0xf]
      %v5086 = vld [vmem:[%s5076 + $0x24] sm:$0xf]
      %v5087 = vld [vmem:[%s5076 + $0x28] sm:$0xf]
      %v5088 = vld [vmem:[%s5076 + $0x2c] sm:$0xf]
      %v5089 = vld [vmem:[%s5076 + $0x30] sm:$0xf]
      %v5090 = vld [vmem:[%s5076 + $0x34] sm:$0xf]
      %v5091 = vld [vmem:[%s5076 + $0x38] sm:$0xf]
      %v5092 = vld [vmem:[%s5076 + $0x3c] sm:$0xf]
      %v5093 = vld [vmem:[%s5076 + $0x40] sm:$0xf]
      %v5094 = vld [vmem:[%s5076 + $0x44] sm:$0xf]
      %v5095 = vld [vmem:[%s5076 + $0x48] sm:$0xf]
      %v5096 = vld [vmem:[%s5076 + $0x4c] sm:$0xf]
      %v5097 = vld [vmem:[%s5076 + $0x50] sm:$0xf]
      %v5098 = vld [vmem:[%s5076 + $0x54] sm:$0xf]
      %v5099 = vld [vmem:[%s5076 + $0x58] sm:$0xf]
      %v5100 = vld [vmem:[%s5076 + $0x5c] sm:$0xf]
      %v5101 = vld [vmem:[%s5076 + $0x60] sm:$0xf]
      %v5102 = vld [vmem:[%s5076 + $0x64] sm:$0xf]
      %v5103 = vld [vmem:[%s5076 + $0x68] sm:$0xf]
      %v5104 = vld [vmem:[%s5076 + $0x6c] sm:$0xf]
      %v5105 = vld [vmem:[%s5076 + $0x70] sm:$0xf]
      %v5106 = vld [vmem:[%s5076 + $0x74] sm:$0xf]
      %v5107 = vld [vmem:[%s5076 + $0x78] sm:$0xf]
      %v5108 = vld [vmem:[%s5076 + $0x7c] sm:$0xf]
      %v5109 = vld [vmem:[%s5076 + $0x80] sm:$0xf]
      %v5110 = vld [vmem:[%s5076 + $0x84] sm:$0xf]
      %v5111 = vld [vmem:[%s5076 + $0x88] sm:$0xf]
      %v5112 = vld [vmem:[%s5076 + $0x8c] sm:$0xf]
      %v5113 = vld [vmem:[%s5076 + $0x90] sm:$0xf]
      %v5114 = vld [vmem:[%s5076 + $0x94] sm:$0xf]
      %v5115 = vld [vmem:[%s5076 + $0x98] sm:$0xf]
      %v5116 = vld [vmem:[%s5076 + $0x9c] sm:$0xf]
      %v5117 = vld [vmem:[%s5076 + $0xa0] sm:$0xf]
      %v5118 = vld [vmem:[%s5076 + $0xa4] sm:$0xf]
      %v5119 = vld [vmem:[%s5076 + $0xa8] sm:$0xf]
      %v5120 = vld [vmem:[%s5076 + $0xac] sm:$0xf]
      %v5121 = vld [vmem:[%s5076 + $0xb0] sm:$0xf]
      %v5122 = vld [vmem:[%s5076 + $0xb4] sm:$0xf]
      %v5123 = vld [vmem:[%s5076 + $0xb8] sm:$0xf]
      %v5124 = vld [vmem:[%s5076 + $0xbc] sm:$0xf]
      %v5125 = vld [vmem:[%s5076 + $0xc0] sm:$0xf]
      %v5126 = vld [vmem:[%s5076 + $0xc4] sm:$0xf]
      %v5127 = vld [vmem:[%s5076 + $0xc8] sm:$0xf]
      %v5128 = vld [vmem:[%s5076 + $0xcc] sm:$0xf]
      %v5129 = vld [vmem:[%s5076 + $0xd0] sm:$0xf]
      %v5130 = vld [vmem:[%s5076 + $0xd4] sm:$0xf]
      %v5131 = vld [vmem:[%s5076 + $0xd8] sm:$0xf]
      %v5132 = vld [vmem:[%s5076 + $0xdc] sm:$0xf]
      %v5133 = vld [vmem:[%s5076 + $0xe0] sm:$0xf]
      %v5134 = vld [vmem:[%s5076 + $0xe4] sm:$0xf]
      %v5135 = vld [vmem:[%s5076 + $0xe8] sm:$0xf]
      %v5136 = vld [vmem:[%s5076 + $0xec] sm:$0xf]
      %v5137 = vld [vmem:[%s5076 + $0xf0] sm:$0xf]
      %v5138 = vld [vmem:[%s5076 + $0xf4] sm:$0xf]
      %v5139 = vld [vmem:[%s5076 + $0xf8] sm:$0xf]
      %v5140 = vld [vmem:[%s5076 + $0xfc] sm:$0xf]
      %s5141 = scalar_lea.vmem %s16, 1
      %v5142 = vld [vmem:[%s5141] sm:$0x1]
      %v5144 = vlaneseq
      %v5145 = vshrl.u32 %v5144, 7
      %v5146 = vsub.s32 0, %v5145
      %v5147 = vrot.slane %v5142, %v5146
      %v5213 = vunpack.c.l.b16 %v5077
      %v5214 = vunpack.c.l.b16 %v5078
      %v5215 = vunpack.c.l.b16 %v5079
      %v5216 = vunpack.c.l.b16 %v5080
      %v5217 = vunpack.c.l.b16 %v5081
      %v5218 = vunpack.c.l.b16 %v5082
      %v5219 = vunpack.c.l.b16 %v5083
      %v5220 = vunpack.c.l.b16 %v5084
      %v5221 = vunpack.c.l.b16 %v5085
      %v5222 = vunpack.c.l.b16 %v5086
      %v5223 = vunpack.c.l.b16 %v5087
      %v5224 = vunpack.c.l.b16 %v5088
      %v5225 = vunpack.c.l.b16 %v5089
      %v5226 = vunpack.c.l.b16 %v5090
      %v5227 = vunpack.c.l.b16 %v5091
      %v5228 = vunpack.c.l.b16 %v5092
      %v5229 = vunpack.c.l.b16 %v5093
      %v5230 = vunpack.c.l.b16 %v5094
      %v5231 = vunpack.c.l.b16 %v5095
      %v5232 = vunpack.c.l.b16 %v5096
      %v5233 = vunpack.c.l.b16 %v5097
      %v5234 = vunpack.c.l.b16 %v5098
      %v5235 = vunpack.c.l.b16 %v5099
      %v5236 = vunpack.c.l.b16 %v5100
      %v5237 = vunpack.c.l.b16 %v5101
      %v5238 = vunpack.c.l.b16 %v5102
      %v5239 = vunpack.c.l.b16 %v5103
      %v5240 = vunpack.c.l.b16 %v5104
      %v5241 = vunpack.c.l.b16 %v5105
      %v5242 = vunpack.c.l.b16 %v5106
      %v5243 = vunpack.c.l.b16 %v5107
      %v5244 = vunpack.c.l.b16 %v5108
      %v5245 = vunpack.c.l.b16 %v5109
      %v5246 = vunpack.c.l.b16 %v5110
      %v5247 = vunpack.c.l.b16 %v5111
      %v5248 = vunpack.c.l.b16 %v5112
      %v5249 = vunpack.c.l.b16 %v5113
      %v5250 = vunpack.c.l.b16 %v5114
      %v5251 = vunpack.c.l.b16 %v5115
      %v5252 = vunpack.c.l.b16 %v5116
      %v5253 = vunpack.c.l.b16 %v5117
      %v5254 = vunpack.c.l.b16 %v5118
      %v5255 = vunpack.c.l.b16 %v5119
      %v5256 = vunpack.c.l.b16 %v5120
      %v5257 = vunpack.c.l.b16 %v5121
      %v5258 = vunpack.c.l.b16 %v5122
      %v5259 = vunpack.c.l.b16 %v5123
      %v5260 = vunpack.c.l.b16 %v5124
      %v5261 = vunpack.c.l.b16 %v5125
      %v5262 = vunpack.c.l.b16 %v5126
      %v5263 = vunpack.c.l.b16 %v5127
      %v5264 = vunpack.c.l.b16 %v5128
      %v5265 = vunpack.c.l.b16 %v5129
      %v5266 = vunpack.c.l.b16 %v5130
      %v5267 = vunpack.c.l.b16 %v5131
      %v5268 = vunpack.c.l.b16 %v5132
      %v5269 = vunpack.c.l.b16 %v5133
      %v5270 = vunpack.c.l.b16 %v5134
      %v5271 = vunpack.c.l.b16 %v5135
      %v5272 = vunpack.c.l.b16 %v5136
      %v5273 = vunpack.c.l.b16 %v5137
      %v5274 = vunpack.c.l.b16 %v5138
      %v5275 = vunpack.c.l.b16 %v5139
      %v5276 = vunpack.c.l.b16 %v5140
      %v5277 = vpack.c.b16 %v5214, %v5213
      %v5278 = vpack.c.b16 %v5216, %v5215
      %v5279 = vpack.c.b16 %v5218, %v5217
      %v5280 = vpack.c.b16 %v5220, %v5219
      %v5281 = vpack.c.b16 %v5222, %v5221
      %v5282 = vpack.c.b16 %v5224, %v5223
      %v5283 = vpack.c.b16 %v5226, %v5225
      %v5284 = vpack.c.b16 %v5228, %v5227
      %v5285 = vpack.c.b16 %v5230, %v5229
      %v5286 = vpack.c.b16 %v5232, %v5231
      %v5287 = vpack.c.b16 %v5234, %v5233
      %v5288 = vpack.c.b16 %v5236, %v5235
      %v5289 = vpack.c.b16 %v5238, %v5237
      %v5290 = vpack.c.b16 %v5240, %v5239
      %v5291 = vpack.c.b16 %v5242, %v5241
      %v5292 = vpack.c.b16 %v5244, %v5243
      %v5293 = vpack.c.b16 %v5246, %v5245
      %v5294 = vpack.c.b16 %v5248, %v5247
      %v5295 = vpack.c.b16 %v5250, %v5249
      %v5296 = vpack.c.b16 %v5252, %v5251
      %v5297 = vpack.c.b16 %v5254, %v5253
      %v5298 = vpack.c.b16 %v5256, %v5255
      %v5299 = vpack.c.b16 %v5258, %v5257
      %v5300 = vpack.c.b16 %v5260, %v5259
      %v5301 = vpack.c.b16 %v5262, %v5261
      %v5302 = vpack.c.b16 %v5264, %v5263
      %v5303 = vpack.c.b16 %v5266, %v5265
      %v5304 = vpack.c.b16 %v5268, %v5267
      %v5305 = vpack.c.b16 %v5270, %v5269
      %v5306 = vpack.c.b16 %v5272, %v5271
      %v5307 = vpack.c.b16 %v5274, %v5273
      %v5308 = vpack.c.b16 %v5276, %v5275
      %5341 = vmatprep.subr.bf16.mxu0 0
      %5342 = vmatpush1.bf16.msra.mxu0 %v5277
      %5343 = vmatprep.subr.bf16.mxu0 0
      %5344 = vmatpush1.bf16.msra.mxu0 %v5278
      %5345 = vmatprep.subr.bf16.mxu0 0
      %5346 = vmatpush1.bf16.msra.mxu0 %v5279
      %5347 = vmatprep.subr.bf16.mxu0 0
      %5348 = vmatpush1.bf16.msra.mxu0 %v5280
      %5349 = vmatprep.subr.bf16.mxu0 0
      %5350 = vmatpush1.bf16.msra.mxu0 %v5281
      %5351 = vmatprep.subr.bf16.mxu0 0
      %5352 = vmatpush1.bf16.msra.mxu0 %v5282
      %5353 = vmatprep.subr.bf16.mxu0 0
      %5354 = vmatpush1.bf16.msra.mxu0 %v5283
      %5355 = vmatprep.subr.bf16.mxu0 0
      %5356 = vmatpush1.bf16.msra.mxu0 %v5284
      %5357 = vmatprep.subr.bf16.mxu0 0
      %5358 = vmatpush1.bf16.msra.mxu0 %v5285
      %5359 = vmatprep.subr.bf16.mxu0 0
      %5360 = vmatpush1.bf16.msra.mxu0 %v5286
      %5361 = vmatprep.subr.bf16.mxu0 0
      %5362 = vmatpush1.bf16.msra.mxu0 %v5287
      %5363 = vmatprep.subr.bf16.mxu0 0
      %5364 = vmatpush1.bf16.msra.mxu0 %v5288
      %5365 = vmatprep.subr.bf16.mxu0 0
      %5366 = vmatpush1.bf16.msra.mxu0 %v5289
      %5367 = vmatprep.subr.bf16.mxu0 0
      %5368 = vmatpush1.bf16.msra.mxu0 %v5290
      %5369 = vmatprep.subr.bf16.mxu0 0
      %5370 = vmatpush1.bf16.msra.mxu0 %v5291
      %5371 = vmatprep.subr.bf16.mxu0 0
      %5372 = vmatpush1.bf16.msra.mxu0 %v5292
      %5373 = vmatprep.mubr.bf16.mxu0 %v5069
      %5374 = vmatmul.mubr.bf16.gmra.mrb[0].mxu0 %v5068
      %v5375 = vpop.f32.mrb[0].mxu0
      %v5376 = vadd.f32 %v5147, %v5375
      %v5377 = vpop.f32.mrb[0].mxu0
      %v5378 = vpop.f32.mrb[0].mxu0
      %v5379 = vadd.f32 %v5147, %v5378
      %v5380 = vpop.f32.mrb[0].mxu0
      %5381 = vmatprep.mubr.bf16.mxu0 %v5073
      %5382 = vmatmul.mubr.bf16.gmra.mrb[0].mxu0 %v5072
      %v5383 = vpop.f32.mrb[0].mxu0
      %v5384 = vadd.f32 %v5147, %v5383
      %v5385 = vpop.f32.mrb[0].mxu0
      %v5386 = vpop.f32.mrb[0].mxu0
      %v5387 = vadd.f32 %v5147, %v5386
      %v5388 = vpop.f32.mrb[0].mxu0
      %5389 = vdwg.mxu0
      %5390 = vmatprep.subr.bf16.mxu0 0
      %5391 = vmatpush1.bf16.msra.mxu0 %v5293
      %5392 = vmatprep.subr.bf16.mxu0 0
      %5393 = vmatpush1.bf16.msra.mxu0 %v5294
      %5394 = vmatprep.subr.bf16.mxu0 0
      %5395 = vmatpush1.bf16.msra.mxu0 %v5295
      %5396 = vmatprep.subr.bf16.mxu0 0
      %5397 = vmatpush1.bf16.msra.mxu0 %v5296
      %5398 = vmatprep.subr.bf16.mxu0 0
      %5399 = vmatpush1.bf16.msra.mxu0 %v5297
      %5400 = vmatprep.subr.bf16.mxu0 0
      %5401 = vmatpush1.bf16.msra.mxu0 %v5298
      %5402 = vmatprep.subr.bf16.mxu0 0
      %5403 = vmatpush1.bf16.msra.mxu0 %v5299
      %5404 = vmatprep.subr.bf16.mxu0 0
      %5405 = vmatpush1.bf16.msra.mxu0 %v5300
      %5406 = vmatprep.subr.bf16.mxu0 0
      %5407 = vmatpush1.bf16.msra.mxu0 %v5301
      %5408 = vmatprep.subr.bf16.mxu0 0
      %5409 = vmatpush1.bf16.msra.mxu0 %v5302
      %5410 = vmatprep.subr.bf16.mxu0 0
      %5411 = vmatpush1.bf16.msra.mxu0 %v5303
      %5412 = vmatprep.subr.bf16.mxu0 0
      %5413 = vmatpush1.bf16.msra.mxu0 %v5304
      %5414 = vmatprep.subr.bf16.mxu0 0
      %5415 = vmatpush1.bf16.msra.mxu0 %v5305
      %5416 = vmatprep.subr.bf16.mxu0 0
      %5417 = vmatpush1.bf16.msra.mxu0 %v5306
      %5418 = vmatprep.subr.bf16.mxu0 0
      %5419 = vmatpush1.bf16.msra.mxu0 %v5307
      %5420 = vmatprep.subr.bf16.mxu0 0
      %5421 = vmatpush1.bf16.msra.mxu0 %v5308
      %5422 = vmatprep.mubr.bf16.mxu0 %v5071
      %5423 = vmatmul.mubr.bf16.gmra.mrb[0].mxu0 %v5070
      %v5424 = vpop.f32.mrb[0].mxu0
      %v5425 = vadd.f32 %v5376, %v5424
      %v5426 = vpop.f32.mrb[0].mxu0
      %v5427 = vpop.f32.mrb[0].mxu0
      %v5428 = vadd.f32 %v5379, %v5427
      %v5429 = vpop.f32.mrb[0].mxu0
      %5430 = vmatprep.mubr.bf16.mxu0 %v5075
      %5431 = vmatmul.mubr.bf16.gmra.mrb[0].mxu0 %v5074
      %v5432 = vpop.f32.mrb[0].mxu0
      %v5433 = vadd.f32 %v5384, %v5432
      %v5434 = vpop.f32.mrb[0].mxu0
      %v5435 = vpop.f32.mrb[0].mxu0
      %v5436 = vadd.f32 %v5387, %v5435
      %v5437 = vpop.f32.mrb[0].mxu0
      %5438 = vdwg.mxu0
      %v5439 = vadd.f32 %v4516, %v5425
      %v5440 = vadd.f32 %v4517, %v5428
      %v5441 = vadd.f32 %v4518, %v5433
      %v5442 = vadd.f32 %v4519, %v5436
      %v5443 = vld [vmem:[%s17] sm:$0x1]
      %v5444 = vld [vmem:[%s18] sm:$0x1]
      %5445 = vadd.xlane.f32.xlu0 %v5439
      %v5446 = vpop.xlane.xlu0 %5445
      %5447 = vadd.xlane.f32.xlu0 %v5440
      %v5448 = vpop.xlane.xlu0 %5447
      %5449 = vadd.xlane.f32.xlu0 %v5441
      %v5450 = vpop.xlane.xlu0 %5449
      %5451 = vadd.xlane.f32.xlu0 %v5442
      %v5452 = vpop.xlane.xlu0 %5451
      %v5453 = vmul.f32 %v5446, %v793
      %v5454 = vmul.f32 %v5448, %v793
      %v5455 = vmul.f32 %v5450, %v793
      %v5456 = vmul.f32 %v5452, %v793
      %v5457 = vmul.f32 %v5439, %v5439
      %v5458 = vmul.f32 %v5440, %v5440
      %v5459 = vmul.f32 %v5441, %v5441
      %v5460 = vmul.f32 %v5442, %v5442
      %5461 = vadd.xlane.f32.xlu0 %v5457
      %v5462 = vpop.xlane.xlu0 %5461
      %5463 = vadd.xlane.f32.xlu0 %v5458
      %v5464 = vpop.xlane.xlu0 %5463
      %5465 = vadd.xlane.f32.xlu0 %v5459
      %v5466 = vpop.xlane.xlu0 %5465
      %5467 = vadd.xlane.f32.xlu0 %v5460
      %v5468 = vpop.xlane.xlu0 %5467
      %v5469 = vmul.f32 %v5462, %v793
      %v5470 = vmul.f32 %v5464, %v793
      %v5471 = vmul.f32 %v5466, %v793
      %v5472 = vmul.f32 %v5468, %v793
      %v5473 = vmul.f32 %v5453, %v5453
      %v5474 = vmul.f32 %v5454, %v5454
      %v5475 = vmul.f32 %v5455, %v5455
      %v5476 = vmul.f32 %v5456, %v5456
      %v5477 = vsub.f32 %v5469, %v5473
      %v5478 = vsub.f32 %v5470, %v5474
      %v5479 = vsub.f32 %v5471, %v5475
      %v5480 = vsub.f32 %v5472, %v5476
      %v5481 = vmax.f32 %v5477, 0.0
      %v5482 = vmax.f32 %v5478, 0.0
      %v5483 = vmax.f32 %v5479, 0.0
      %v5484 = vmax.f32 %v5480, 0.0
      %v5485 = vsub.f32 %v5439, %v5453
      %v5486 = vsub.f32 %v5440, %v5454
      %v5487 = vsub.f32 %v5441, %v5455
      %v5488 = vsub.f32 %v5442, %v5456
      %v5489 = vadd.f32 %v5481, 1e-06
      %v5490 = vadd.f32 %v5482, 1e-06
      %v5491 = vadd.f32 %v5483, 1e-06
      %v5492 = vadd.f32 %v5484, 1e-06
      %v5493 = vrsqrt.pop %v5489
      %v5494 = vrsqrt.pop %v5490
      %v5495 = vrsqrt.pop %v5491
      %v5496 = vrsqrt.pop %v5492
      %v5497 = vmul.f32 %v5485, %v5493
      %v5498 = vmul.f32 %v5486, %v5494
      %v5499 = vmul.f32 %v5487, %v5495
      %v5500 = vmul.f32 %v5488, %v5496
      %v5502 = vlaneseq
      %v5503 = vshrl.u32 %v5502, 7
      %v5504 = vsub.s32 0, %v5503
      %v5505 = vrot.slane %v5443, %v5504
      %v5507 = vmul.f32 %v5497, %v5505
      %v5508 = vmul.f32 %v5498, %v5505
      %v5509 = vmul.f32 %v5499, %v5505
      %v5510 = vmul.f32 %v5500, %v5505
      %v5512 = vlaneseq
      %v5513 = vshrl.u32 %v5512, 7
      %v5514 = vsub.s32 0, %v5513
      %v5515 = vrot.slane %v5444, %v5514
      %v5517 = vadd.f32 %v5507, %v5515
      %v5518 = vadd.f32 %v5508, %v5515
      %v5519 = vadd.f32 %v5509, %v5515
      %v5520 = vadd.f32 %v5510, %v5515
      %5521 = vst [vmem:[%s602] sm:$0xff] %v5517
      %5522 = vst [vmem:[%s602 + $0x8] sm:$0xff] %v5518
      %5523 = vst [vmem:[%s602 + $0x10] sm:$0xff] %v5519
      %5524 = vst [vmem:[%s602 + $0x18] sm:$0xff] %v5520
      %p5525 = scmp.lt.s32.totalorder %s30, 1
      %s5526 = scalar_select %p5525, %s30, 1
      %s5527 = smul.addr %s5526, 4
      %s5528 = smul.addr %s5527, 8
      %s5529 = scalar_lea.vmem %s19, %s5528
      // Predicated region
      $region97: #{sat_img_encoder_forward.1} parent=95 // pred_check
        %p5530 = pneg %p452
      $region98: #{sat_img_encoder_forward.1} parent=95 // pred_check_branch
        %5532 = sbr.rel (%p5530) target = $region100
      $region99: #{sat_img_encoder_forward.1} parent=95 // pred_region
        _
      $region100: #{sat_img_encoder_forward.1} parent=95 // pred_fallthru
        _
    $region96: #{sat_img_encoder_forward.1} parent=5 // pred_fallthru
      _
    %p5533 = scmp.le.s32.totalorder 2, %s25
    // Predicated region
    $region101: #{sat_img_encoder_forward.1} parent=5 // pred_check
      %p5534 = pneg %p5533
    $region102: #{sat_img_encoder_forward.1} parent=5 // pred_check_branch
      %5536 = sbr.rel (%p5534) target = $region104
    $region103: #{sat_img_encoder_forward.1} parent=5 // pred_region
      %s5537 = ssub.s32 %s25, 2
      // Predicated region
      $region105: #{sat_img_encoder_forward.1} parent=103 // pred_check
        %p5538 = pneg %p458
      $region106: #{sat_img_encoder_forward.1} parent=103 // pred_check_branch
        %5540 = sbr.rel (%p5538) target = $region108
      $region107: #{sat_img_encoder_forward.1} parent=103 // pred_region
        %p5541 = scmp.lt.s32.totalorder %s31, 1
        %s5542 = scalar_select %p5541, %s31, 1
        %s5543 = smul.addr %s5542, 4
        %s5544 = smul.addr %s5543, 8
        %s5545 = scalar_lea.vmem %s19, %s5544
      $region108: #{sat_img_encoder_forward.1} parent=103 // pred_fallthru
        _
    $region104: #{sat_img_encoder_forward.1} parent=5 // pred_fallthru
      _
  $region6: #{sat_img_encoder_forward.1} parent=0 // loop_footer
    %s29 = sadd.s32 1, %s25
  $region7: #{sat_img_encoder_forward.1} parent=0 // loop_footer_branch
    %24 = sbr.rel target = $region3
  $region8: #{sat_img_encoder_forward.1} parent=0 // loop_exit
    _

</llo_original>
